<compile_context>
chip_gen: v7x
topology: tpu7x:2x2x1
jax: 0.10.0
libtpu: 0.0.40
codegen_flags: <defaults>
</compile_context>

<pallas_src>
import numpy as np
import jax
import jax.numpy as jnp
from jax import lax
from jax.experimental import pallas as pl
from jax.experimental.pallas import tpu as pltpu

DIM_IN = 4              # Dimensions_input
DIM_OUT = 1             # Dimensions_output
NUM_FILTERS = 6         # num_filters
KERNEL_SIZE = 12        # kernel_size
CPAD = 8                # channel padding to the sublane width
KC = CPAD * KERNEL_SIZE         # 96 tap rows
SLOT = KC + CPAD                # 104 = tap rows + one 8-row bias block (row KC = ones)
REST_DILATIONS = (1, 2, 2, 4, 4)  # block-0 second conv, then blocks 1 and 2


# ----------------------------- Pallas kernel --------------------------------
def _make_kernel(Tp, L):
    K = KERNEL_SIZE

    def kernel(x_ref, w0_ref, wr_ref, wlin_ref, o_ref, taps_ref):
        # Per-sample (local) time index along the folded batch*time lane axis.
        # Computed once and reused by every conv (JAX does not CSE iota).
        t_local = lax.broadcasted_iota(jnp.int32, (CPAD, L), 1) % Tp

        # 8-row bias block at the bottom of the taps scratch: row KC is the
        # constant-ones row (so each slot's bias column adds its bias), the
        # remaining 7 rows stay zero.  Written every grid step (NOT under
        # pl.when(program_id==0)) because the grid axis is "parallel".
        pad_row = lax.broadcasted_iota(jnp.int32, (CPAD, L), 0)
        taps_ref[KC:SLOT, :] = (pad_row == 0).astype(jnp.float32)

        def stage_taps(inp, dil):
            """Stage the 12 causally shifted taps of `inp` into taps_ref."""
            for k in range(K):
                s = (K - 1 - k) * dil                  # causal right shift
                if s == 0:
                    tap = inp
                else:
                    rolled = pltpu.roll(inp, shift=s, axis=1)
                    # Mask with the *local* time index so rolls never leak
                    # across the samples folded into this lane block.
                    tap = jnp.where(t_local >= s, rolled, 0.0)
                taps_ref[k * CPAD:(k + 1) * CPAD, :] = tap

        def causal_conv(inp, idx):
            """Causal dilated conv (+bias) as one (8,SLOT)x(SLOT,L) matmul."""
            stage_taps(inp, REST_DILATIONS[idx])
            return jnp.dot(wr_ref[idx], taps_ref[...],
                           preferred_element_type=jnp.float32)

        x = x_ref[...]                                 # (8, L), pre-padded

        # --- TemporalBlock 0: 4 -> 6, dilation 1, 1x1-conv residual ---------
        # conv0 and its 1x1 downsample read the same staged taps, so they are
        # fused into one (16, SLOT) x (SLOT, L) dot; rows 0:8 = conv0 (+bias),
        # rows 8:16 = residual downsample (+bias).
        stage_taps(x, 1)
        fused = jnp.dot(w0_ref[...], taps_ref[...],
                        preferred_element_type=jnp.float32)        # (16, L)
        h = jnp.tanh(fused[0:CPAD, :])
        res = fused[CPAD:2 * CPAD, :]
        h = jnp.tanh(causal_conv(h, 0))
        y = jnp.tanh(h + res)

        # --- TemporalBlock 1: 6 -> 6, dilation 2, identity residual ---------
        h = jnp.tanh(causal_conv(y, 1))
        h = jnp.tanh(causal_conv(h, 2))
        y = jnp.tanh(h + y)

        # --- TemporalBlock 2: 6 -> 6, dilation 4, identity residual ---------
        h = jnp.tanh(causal_conv(y, 3))
        h = jnp.tanh(causal_conv(h, 4))
        y = jnp.tanh(h + y)

        # --- nn.Linear(num_filters, 1): store only the single valid row -----
        wlin = wlin_ref[...]
        out = jnp.dot(wlin[:, 0:CPAD], y, preferred_element_type=jnp.float32)
        o_ref[...] = out[0:1, :] + wlin[0:1, CPAD:CPAD + 1]

    return kernel


# ------------------------- parameter packing (glue) --------------------------
def _pack_conv_slot(w, b):
    """(Cout, Cin, K) conv weight + bias -> one (CPAD, SLOT) kernel slot.

    Column k*CPAD + ci holds w[co, ci, k] (matching the tap staging order);
    column KC holds the bias (multiplied by the constant-ones tap row).
    """
    cout, cin, k = w.shape
    wp = jnp.zeros((CPAD, CPAD, k), jnp.float32).at[:cout, :cin, :].set(w)
    cols = jnp.transpose(wp, (0, 2, 1)).reshape(CPAD, CPAD * k)     # (8, 96)
    slot = jnp.zeros((CPAD, SLOT), jnp.float32)
    slot = slot.at[:, :KC].set(cols)
    slot = slot.at[:cout, KC].set(b)
    return slot


def _pack_block0_fused(w0a, b0a, wd0, bd0):
    """Fused block-0 LHS: rows 0:8 conv0, rows 8:16 the 1x1 downsample."""
    top = _pack_conv_slot(w0a, b0a)                  # (8, SLOT)
    base = (KERNEL_SIZE - 1) * CPAD                  # the s == 0 tap block
    bot = jnp.zeros((CPAD, SLOT), jnp.float32)
    bot = bot.at[:wd0.shape[0], base:base + wd0.shape[1]].set(wd0)
    bot = bot.at[:bd0.shape[0], KC].set(bd0)
    return jnp.concatenate([top, bot], axis=0)       # (16, SLOT)


def _pack_linear(wl, bl):
    """Final Linear(num_filters, 1) -> (CPAD, 2*CPAD): [weights | bias col]."""
    out = jnp.zeros((CPAD, 2 * CPAD), jnp.float32)
    out = out.at[:wl.shape[0], :wl.shape[1]].set(wl)
    out = out.at[:bl.shape[0], CPAD].set(bl)
    return out


def _pack_params(p):
    w0 = _pack_block0_fused(p["w0a"], p["b0a"], p["wd0"], p["bd0"])  # (16, 104)
    wr = jnp.stack([
        _pack_conv_slot(p["w0b"], p["b0b"]),
        _pack_conv_slot(p["w1a"], p["b1a"]),
        _pack_conv_slot(p["w1b"], p["b1b"]),
        _pack_conv_slot(p["w2a"], p["b2a"]),
        _pack_conv_slot(p["w2b"], p["b2b"]),
    ], axis=0)                                                       # (5, 8, 104)
    wlin = _pack_linear(p["wl"], p["bl"])                            # (8, 16)
    return w0, wr, wlin


# ------------------------------- wrapper -------------------------------------
def seq2seq_forward(x, params, block_batch=None, target_lanes=4096):
    """x: (B, T, DIM_IN) float32 -> (B, T, DIM_OUT), matching PyTorch forward."""
    B, T, din = x.shape
    assert din == DIM_IN

    # Pad time to a multiple of 128 so every lane block is lane-dense and we
    # never fall back to a single giant (possibly VMEM-busting) block.
    Tp = ((T + 127) // 128) * 128

    if block_batch is None:
        block_batch = max(1, min(B, target_lanes // Tp))
        # Keep >= 2 grid steps when possible so v7x's second TensorCore gets
        # work ("parallel" grid axis); a no-op on single-core v5e/v6e.
        if B // block_batch < 2 and B >= 2:
            block_batch = max(1, B // 2)
    while B % block_batch != 0:
        block_batch -= 1
    L = block_batch * Tp                    # multiple of 128 by construction
    nblk = B // block_batch

    # (B, T, 4) -> zero-pad time and channels -> channels-first with batch
    # folded into the lane axis.  Channel pre-padding to 8 sublanes gives the
    # input DMA a clean (8, L) tile and removes the in-kernel pad/copy.
    xp = jnp.zeros((B, Tp, CPAD), jnp.float32)
    xp = xp.at[:, :T, :DIM_IN].set(x.astype(jnp.float32))
    x_cl = jnp.transpose(xp, (2, 0, 1)).reshape(CPAD, B * Tp)

    w0, wr, wlin = _pack_params(params)

    grid_spec = pltpu.PrefetchScalarGridSpec(
        num_scalar_prefetch=0,
        grid=(nblk,),
        in_specs=[
            pl.BlockSpec((CPAD, L), lambda i: (0, i)),      # padded input
            pl.BlockSpec(w0.shape, lambda i: (0, 0)),       # fused block-0 LHS
            pl.BlockSpec(wr.shape, lambda i: (0, 0, 0)),    # remaining convs
            pl.BlockSpec(wlin.shape, lambda i: (0, 0)),     # packed linear
        ],
        out_specs=pl.BlockSpec((1, L), lambda i: (0, i)),   # only valid row
        scratch_shapes=[
            pltpu.VMEM((SLOT, L), jnp.float32),             # staged taps
        ],
    )

    # Scoped-VMEM safeguard for very long sequences (one sample cannot be
    # split across lane blocks, so L >= Tp is forced).
    est_vmem = 4 * (SLOT * L + 2 * CPAD * L + 2 * L) + (1 << 20)
    if est_vmem > (30 << 20):
        compiler_params = pltpu.CompilerParams(
            dimension_semantics=("parallel",),
            vmem_limit_bytes=min(est_vmem + (8 << 20), 100 << 20))
    else:
        compiler_params = pltpu.CompilerParams(
            dimension_semantics=("parallel",))

    out = pl.pallas_call(
        _make_kernel(Tp, L),
        out_shape=jax.ShapeDtypeStruct((1, B * Tp), jnp.float32),
        grid_spec=grid_spec,
        compiler_params=compiler_params,
    )(x_cl, w0, wr, wlin)

    return out.reshape(B, Tp, DIM_OUT)[:, :T, :]


# -------------------------- deterministic init -------------------------------
def init_params(key):
    ks = jax.random.split(key, 16)

    def u(k, shape, fan_in):
        bound = 1.0 / np.sqrt(fan_in)
        return jax.random.uniform(k, shape, jnp.float32, -bound, bound)

    F, K, D = NUM_FILTERS, KERNEL_SIZE, DIM_IN
    p = {
        # TemporalBlock 0
        "w0a": u(ks[0], (F, D, K), D * K), "b0a": u(ks[1], (F,), D * K),
        "w0b": u(ks[2], (F, F, K), F * K), "b0b": u(ks[3], (F,), F * K),
        "wd0": u(ks[4], (F, D), D),        "bd0": u(ks[5], (F,), D),
        # TemporalBlock 1
        "w1a": u(ks[6], (F, F, K), F * K), "b1a": u(ks[7], (F,), F * K),
        "w1b": u(ks[8], (F, F, K), F * K), "b1b": u(ks[9], (F,), F * K),
        # TemporalBlock 2
        "w2a": u(ks[10], (F, F, K), F * K), "b2a": u(ks[11], (F,), F * K),
        "w2b": u(ks[12], (F, F, K), F * K), "b2b": u(ks[13], (F,), F * K),
        # Linear(num_filters, 1); init_weights() zeroes the bias.
        "wl": u(ks[14], (DIM_OUT, F), F), "bl": jnp.zeros((DIM_OUT,), jnp.float32),
    }
    return p


# --------------------------- pure-JAX reference -------------------------------
def ref_forward(x, p):
    B, T, _ = x.shape
    hi = jnp.transpose(x, (0, 2, 1))                                    # (B, C, T)
    prec = jax.lax.Precision.HIGHEST

    def cconv(h, w, b, dil):
        K = w.shape[2]
        P = (K - 1) * dil
        hp = jnp.pad(h, ((0, 0), (0, 0), (P, 0)))
        out = jnp.zeros((h.shape[0], w.shape[0], T), jnp.float32)
        for k in range(K):
            out = out + jnp.einsum("oc,bct->bot", w[:, :, k],
                                   hp[:, :, k * dil:k * dil + T], precision=prec)
        return out + b[None, :, None]

    a = jnp.tanh(cconv(hi, p["w0a"], p["b0a"], 1))
    a = jnp.tanh(cconv(a, p["w0b"], p["b0b"], 1))
    res = jnp.einsum("oc,bct->bot", p["wd0"], hi, precision=prec) + p["bd0"][None, :, None]
    y0 = jnp.tanh(a + res)

    a = jnp.tanh(cconv(y0, p["w1a"], p["b1a"], 2))
    a = jnp.tanh(cconv(a, p["w1b"], p["b1b"], 2))
    y1 = jnp.tanh(a + y0)

    a = jnp.tanh(cconv(y1, p["w2a"], p["b2a"], 4))
    a = jnp.tanh(cconv(a, p["w2b"], p["b2b"], 4))
    y2 = jnp.tanh(a + y1)

    return jnp.einsum("bct,oc->bto", y2, p["wl"], precision=prec) + p["bl"][None, None, :]


# ---------------------------------- main --------------------------------------
if __name__ == "__main__":
    B, T = 4, 128  # small batch, lane-friendly sequence length
    key = jax.random.PRNGKey(0)
    kx, kp = jax.random.split(key)
    x = jax.random.normal(kx, (B, T, DIM_IN), jnp.float32)
    params = init_params(kp)

    out = jax.block_until_ready(seq2seq_forward(x, params))
    ref = ref_forward(x, params)

    np.testing.assert_allclose(np.asarray(out), np.asarray(ref),
                               rtol=2e-3, atol=2e-3)
    assert out.shape == (B, T, DIM_OUT)
    print("KERNEL_OK")
</pallas_src>

<mosaic_0001>
module attributes {stable_mosaic.version = 11 : i64} {
  func.func @kernel(%arg0: i32, %arg1: memref<8x256xf32, #tpu.memory_space<vmem>>, %arg2: memref<16x104xf32, #tpu.memory_space<vmem>>, %arg3: memref<5x8x104xf32, #tpu.memory_space<vmem>>, %arg4: memref<8x16xf32, #tpu.memory_space<vmem>>, %arg5: memref<1x256xf32, #tpu.memory_space<vmem>>, %arg6: memref<104x256xf32, #tpu.memory_space<vmem>>) attributes {dimension_semantics = [#tpu.dimension_semantics<parallel>], iteration_bounds = array<i64: 2>, scalar_prefetch = 0 : i64, scratch_operands = 1 : i64, tpu.core_type = #tpu.core_type<tc>, window_params = [{transform_indices = @transform_0, window_bounds = array<i64: 8, 256>}, {pipeline_mode = #tpu.pipeline_mode<synchronous>, transform_indices = @transform_1, window_bounds = array<i64: 16, 104>}, {pipeline_mode = #tpu.pipeline_mode<synchronous>, transform_indices = @transform_2, window_bounds = array<i64: 5, 8, 104>}, {pipeline_mode = #tpu.pipeline_mode<synchronous>, transform_indices = @transform_3, window_bounds = array<i64: 8, 16>}, {transform_indices = @transform_4, window_bounds = array<i64: 1, 256>}]} {
    %0 = tpu.iota {dimensions = array<i32: 1>} : vector<8x256xi32>
    %c128_i32 = arith.constant 128 : i32
    %c0_i32 = arith.constant 0 : i32
    %1 = arith.cmpi eq, %c128_i32, %c0_i32 : i32
    %c1_i32 = arith.constant 1 : i32
    %2 = arith.select %1, %c1_i32, %c128_i32 : i32
    %3 = vector.broadcast %2 : i32 to vector<8x256xi32>
    %4 = arith.remsi %0, %3 : vector<8x256xi32>
    %c0_i32_0 = arith.constant 0 : i32
    %5 = vector.broadcast %c0_i32_0 : i32 to vector<8x256xi32>
    %6 = arith.cmpi ne, %4, %5 : vector<8x256xi32>
    %c0_i32_1 = arith.constant 0 : i32
    %7 = vector.broadcast %c0_i32_1 : i32 to vector<8x256xi32>
    %8 = arith.cmpi slt, %4, %7 : vector<8x256xi32>
    %c0_i32_2 = arith.constant 0 : i32
    %9 = arith.cmpi slt, %2, %c0_i32_2 : i32
    %10 = vector.broadcast %9 : i1 to vector<8x256xi1>
    %11 = vector.broadcast %10 : vector<8x256xi1> to vector<8x256xi1>
    %12 = arith.xori %8, %11 : vector<8x256xi1>
    %13 = arith.andi %12, %6 : vector<8x256xi1>
    %14 = vector.broadcast %2 : i32 to vector<8x256xi32>
    %15 = arith.addi %4, %14 : vector<8x256xi32>
    %16 = arith.select %13, %15, %4 : vector<8x256xi1>, vector<8x256xi32>
    %17 = tpu.iota {dimensions = array<i32: 0>} : vector<8x256xi32>
    %c0_i32_3 = arith.constant 0 : i32
    %18 = vector.broadcast %c0_i32_3 : i32 to vector<8x256xi32>
    %19 = arith.cmpi eq, %17, %18 : vector<8x256xi32>
    %20 = arith.extui %19 : vector<8x256xi1> to vector<8x256xi32>
    %21 = arith.sitofp %20 : vector<8x256xi32> to vector<8x256xf32>
    %c96 = arith.constant 96 : index
    %c0 = arith.constant 0 : index
    %22 = vector.load %arg6[%c96, %c0] : memref<104x256xf32, #tpu.memory_space<vmem>>, vector<8x256xf32>
    tpu.vector_store %arg6[%c96, %c0], %21 {strides = array<i32>} : memref<104x256xf32, #tpu.memory_space<vmem>>, vector<8x256xf32>,
    %c0_4 = arith.constant 0 : index
    %c0_5 = arith.constant 0 : index
    %23 = vector.load %arg1[%c0_4, %c0_5] : memref<8x256xf32, #tpu.memory_space<vmem>>, vector<8x256xf32>
    %c11_i32 = arith.constant 11 : i32
    %24 = tpu.dynamic_rotate %23 by %c11_i32 dim 1 : vector<8x256xf32>, i32 -> vector<8x256xf32>
    %c11_i32_6 = arith.constant 11 : i32
    %25 = vector.broadcast %c11_i32_6 : i32 to vector<8x256xi32>
    %26 = arith.cmpi sge, %16, %25 : vector<8x256xi32>
    %cst = arith.constant 0.000000e+00 : f32
    %27 = vector.broadcast %cst : f32 to vector<8x256xf32>
    %28 = arith.select %26, %24, %27 : vector<8x256xi1>, vector<8x256xf32>
    %c0_7 = arith.constant 0 : index
    %c0_8 = arith.constant 0 : index
    %29 = vector.load %arg6[%c0_7, %c0_8] : memref<104x256xf32, #tpu.memory_space<vmem>>, vector<8x256xf32>
    tpu.vector_store %arg6[%c0_7, %c0_8], %28 {strides = array<i32>} : memref<104x256xf32, #tpu.memory_space<vmem>>, vector<8x256xf32>,
    %c10_i32 = arith.constant 10 : i32
    %30 = tpu.dynamic_rotate %23 by %c10_i32 dim 1 : vector<8x256xf32>, i32 -> vector<8x256xf32>
    %c10_i32_9 = arith.constant 10 : i32
    %31 = vector.broadcast %c10_i32_9 : i32 to vector<8x256xi32>
    %32 = arith.cmpi sge, %16, %31 : vector<8x256xi32>
    %cst_10 = arith.constant 0.000000e+00 : f32
    %33 = vector.broadcast %cst_10 : f32 to vector<8x256xf32>
    %34 = arith.select %32, %30, %33 : vector<8x256xi1>, vector<8x256xf32>
    %c8 = arith.constant 8 : index
    %c0_11 = arith.constant 0 : index
    %35 = vector.load %arg6[%c8, %c0_11] : memref<104x256xf32, #tpu.memory_space<vmem>>, vector<8x256xf32>
    tpu.vector_store %arg6[%c8, %c0_11], %34 {strides = array<i32>} : memref<104x256xf32, #tpu.memory_space<vmem>>, vector<8x256xf32>,
    %c9_i32 = arith.constant 9 : i32
    %36 = tpu.dynamic_rotate %23 by %c9_i32 dim 1 : vector<8x256xf32>, i32 -> vector<8x256xf32>
    %c9_i32_12 = arith.constant 9 : i32
    %37 = vector.broadcast %c9_i32_12 : i32 to vector<8x256xi32>
    %38 = arith.cmpi sge, %16, %37 : vector<8x256xi32>
    %cst_13 = arith.constant 0.000000e+00 : f32
    %39 = vector.broadcast %cst_13 : f32 to vector<8x256xf32>
    %40 = arith.select %38, %36, %39 : vector<8x256xi1>, vector<8x256xf32>
    %c16 = arith.constant 16 : index
    %c0_14 = arith.constant 0 : index
    %41 = vector.load %arg6[%c16, %c0_14] : memref<104x256xf32, #tpu.memory_space<vmem>>, vector<8x256xf32>
    tpu.vector_store %arg6[%c16, %c0_14], %40 {strides = array<i32>} : memref<104x256xf32, #tpu.memory_space<vmem>>, vector<8x256xf32>,
    %c8_i32 = arith.constant 8 : i32
    %42 = tpu.dynamic_rotate %23 by %c8_i32 dim 1 : vector<8x256xf32>, i32 -> vector<8x256xf32>
    %c8_i32_15 = arith.constant 8 : i32
    %43 = vector.broadcast %c8_i32_15 : i32 to vector<8x256xi32>
    %44 = arith.cmpi sge, %16, %43 : vector<8x256xi32>
    %cst_16 = arith.constant 0.000000e+00 : f32
    %45 = vector.broadcast %cst_16 : f32 to vector<8x256xf32>
    %46 = arith.select %44, %42, %45 : vector<8x256xi1>, vector<8x256xf32>
    %c24 = arith.constant 24 : index
    %c0_17 = arith.constant 0 : index
    %47 = vector.load %arg6[%c24, %c0_17] : memref<104x256xf32, #tpu.memory_space<vmem>>, vector<8x256xf32>
    tpu.vector_store %arg6[%c24, %c0_17], %46 {strides = array<i32>} : memref<104x256xf32, #tpu.memory_space<vmem>>, vector<8x256xf32>,
    %c7_i32 = arith.constant 7 : i32
    %48 = tpu.dynamic_rotate %23 by %c7_i32 dim 1 : vector<8x256xf32>, i32 -> vector<8x256xf32>
    %c7_i32_18 = arith.constant 7 : i32
    %49 = vector.broadcast %c7_i32_18 : i32 to vector<8x256xi32>
    %50 = arith.cmpi sge, %16, %49 : vector<8x256xi32>
    %cst_19 = arith.constant 0.000000e+00 : f32
    %51 = vector.broadcast %cst_19 : f32 to vector<8x256xf32>
    %52 = arith.select %50, %48, %51 : vector<8x256xi1>, vector<8x256xf32>
    %c32 = arith.constant 32 : index
    %c0_20 = arith.constant 0 : index
    %53 = vector.load %arg6[%c32, %c0_20] : memref<104x256xf32, #tpu.memory_space<vmem>>, vector<8x256xf32>
    tpu.vector_store %arg6[%c32, %c0_20], %52 {strides = array<i32>} : memref<104x256xf32, #tpu.memory_space<vmem>>, vector<8x256xf32>,
    %c6_i32 = arith.constant 6 : i32
    %54 = tpu.dynamic_rotate %23 by %c6_i32 dim 1 : vector<8x256xf32>, i32 -> vector<8x256xf32>
    %c6_i32_21 = arith.constant 6 : i32
    %55 = vector.broadcast %c6_i32_21 : i32 to vector<8x256xi32>
    %56 = arith.cmpi sge, %16, %55 : vector<8x256xi32>
    %cst_22 = arith.constant 0.000000e+00 : f32
    %57 = vector.broadcast %cst_22 : f32 to vector<8x256xf32>
    %58 = arith.select %56, %54, %57 : vector<8x256xi1>, vector<8x256xf32>
    %c40 = arith.constant 40 : index
    %c0_23 = arith.constant 0 : index
    %59 = vector.load %arg6[%c40, %c0_23] : memref<104x256xf32, #tpu.memory_space<vmem>>, vector<8x256xf32>
    tpu.vector_store %arg6[%c40, %c0_23], %58 {strides = array<i32>} : memref<104x256xf32, #tpu.memory_space<vmem>>, vector<8x256xf32>,
    %c5_i32 = arith.constant 5 : i32
    %60 = tpu.dynamic_rotate %23 by %c5_i32 dim 1 : vector<8x256xf32>, i32 -> vector<8x256xf32>
    %c5_i32_24 = arith.constant 5 : i32
    %61 = vector.broadcast %c5_i32_24 : i32 to vector<8x256xi32>
    %62 = arith.cmpi sge, %16, %61 : vector<8x256xi32>
    %cst_25 = arith.constant 0.000000e+00 : f32
    %63 = vector.broadcast %cst_25 : f32 to vector<8x256xf32>
    %64 = arith.select %62, %60, %63 : vector<8x256xi1>, vector<8x256xf32>
    %c48 = arith.constant 48 : index
    %c0_26 = arith.constant 0 : index
    %65 = vector.load %arg6[%c48, %c0_26] : memref<104x256xf32, #tpu.memory_space<vmem>>, vector<8x256xf32>
    tpu.vector_store %arg6[%c48, %c0_26], %64 {strides = array<i32>} : memref<104x256xf32, #tpu.memory_space<vmem>>, vector<8x256xf32>,
    %c4_i32 = arith.constant 4 : i32
    %66 = tpu.dynamic_rotate %23 by %c4_i32 dim 1 : vector<8x256xf32>, i32 -> vector<8x256xf32>
    %c4_i32_27 = arith.constant 4 : i32
    %67 = vector.broadcast %c4_i32_27 : i32 to vector<8x256xi32>
    %68 = arith.cmpi sge, %16, %67 : vector<8x256xi32>
    %cst_28 = arith.constant 0.000000e+00 : f32
    %69 = vector.broadcast %cst_28 : f32 to vector<8x256xf32>
    %70 = arith.select %68, %66, %69 : vector<8x256xi1>, vector<8x256xf32>
    %c56 = arith.constant 56 : index
    %c0_29 = arith.constant 0 : index
    %71 = vector.load %arg6[%c56, %c0_29] : memref<104x256xf32, #tpu.memory_space<vmem>>, vector<8x256xf32>
    tpu.vector_store %arg6[%c56, %c0_29], %70 {strides = array<i32>} : memref<104x256xf32, #tpu.memory_space<vmem>>, vector<8x256xf32>,
    %c3_i32 = arith.constant 3 : i32
    %72 = tpu.dynamic_rotate %23 by %c3_i32 dim 1 : vector<8x256xf32>, i32 -> vector<8x256xf32>
    %c3_i32_30 = arith.constant 3 : i32
    %73 = vector.broadcast %c3_i32_30 : i32 to vector<8x256xi32>
    %74 = arith.cmpi sge, %16, %73 : vector<8x256xi32>
    %cst_31 = arith.constant 0.000000e+00 : f32
    %75 = vector.broadcast %cst_31 : f32 to vector<8x256xf32>
    %76 = arith.select %74, %72, %75 : vector<8x256xi1>, vector<8x256xf32>
    %c64 = arith.constant 64 : index
    %c0_32 = arith.constant 0 : index
    %77 = vector.load %arg6[%c64, %c0_32] : memref<104x256xf32, #tpu.memory_space<vmem>>, vector<8x256xf32>
    tpu.vector_store %arg6[%c64, %c0_32], %76 {strides = array<i32>} : memref<104x256xf32, #tpu.memory_space<vmem>>, vector<8x256xf32>,
    %c2_i32 = arith.constant 2 : i32
    %78 = tpu.dynamic_rotate %23 by %c2_i32 dim 1 : vector<8x256xf32>, i32 -> vector<8x256xf32>
    %c2_i32_33 = arith.constant 2 : i32
    %79 = vector.broadcast %c2_i32_33 : i32 to vector<8x256xi32>
    %80 = arith.cmpi sge, %16, %79 : vector<8x256xi32>
    %cst_34 = arith.constant 0.000000e+00 : f32
    %81 = vector.broadcast %cst_34 : f32 to vector<8x256xf32>
    %82 = arith.select %80, %78, %81 : vector<8x256xi1>, vector<8x256xf32>
    %c72 = arith.constant 72 : index
    %c0_35 = arith.constant 0 : index
    %83 = vector.load %arg6[%c72, %c0_35] : memref<104x256xf32, #tpu.memory_space<vmem>>, vector<8x256xf32>
    tpu.vector_store %arg6[%c72, %c0_35], %82 {strides = array<i32>} : memref<104x256xf32, #tpu.memory_space<vmem>>, vector<8x256xf32>,
    %c1_i32_36 = arith.constant 1 : i32
    %84 = tpu.dynamic_rotate %23 by %c1_i32_36 dim 1 : vector<8x256xf32>, i32 -> vector<8x256xf32>
    %c1_i32_37 = arith.constant 1 : i32
    %85 = vector.broadcast %c1_i32_37 : i32 to vector<8x256xi32>
    %86 = arith.cmpi sge, %16, %85 : vector<8x256xi32>
    %cst_38 = arith.constant 0.000000e+00 : f32
    %87 = vector.broadcast %cst_38 : f32 to vector<8x256xf32>
    %88 = arith.select %86, %84, %87 : vector<8x256xi1>, vector<8x256xf32>
    %c80 = arith.constant 80 : index
    %c0_39 = arith.constant 0 : index
    %89 = vector.load %arg6[%c80, %c0_39] : memref<104x256xf32, #tpu.memory_space<vmem>>, vector<8x256xf32>
    tpu.vector_store %arg6[%c80, %c0_39], %88 {strides = array<i32>} : memref<104x256xf32, #tpu.memory_space<vmem>>, vector<8x256xf32>,
    %c88 = arith.constant 88 : index
    %c0_40 = arith.constant 0 : index
    %90 = vector.load %arg6[%c88, %c0_40] : memref<104x256xf32, #tpu.memory_space<vmem>>, vector<8x256xf32>
    tpu.vector_store %arg6[%c88, %c0_40], %23 {strides = array<i32>} : memref<104x256xf32, #tpu.memory_space<vmem>>, vector<8x256xf32>,
    %c0_41 = arith.constant 0 : index
    %c0_42 = arith.constant 0 : index
    %91 = vector.load %arg2[%c0_41, %c0_42] : memref<16x104xf32, #tpu.memory_space<vmem>>, vector<16x104xf32>
    %c0_43 = arith.constant 0 : index
    %c0_44 = arith.constant 0 : index
    %92 = vector.load %arg6[%c0_43, %c0_44] : memref<104x256xf32, #tpu.memory_space<vmem>>, vector<104x256xf32>
    %cst_45 = arith.constant dense<0.000000e+00> : vector<16x256xf32>
    %93 = tpu.matmul %91, %92, %cst_45 {dimension_numbers = #tpu.dot_dimension_numbers<[1], [0], [0], [1], [0, 0, 1, 1], [], []>} : vector<16x104xf32>, vector<104x256xf32>, vector<16x256xf32> -> vector<16x256xf32>
    %94 = vector.extract_strided_slice %93 {offsets = [0, 0], sizes = [8, 256], strides = [1, 1]} : vector<16x256xf32> to vector<8x256xf32>
    %95 = math.tanh %94 : vector<8x256xf32>
    %96 = vector.extract_strided_slice %93 {offsets = [8, 0], sizes = [8, 256], strides = [1, 1]} : vector<16x256xf32> to vector<8x256xf32>
    %c11_i32_46 = arith.constant 11 : i32
    %97 = tpu.dynamic_rotate %95 by %c11_i32_46 dim 1 : vector<8x256xf32>, i32 -> vector<8x256xf32>
    %c11_i32_47 = arith.constant 11 : i32
    %98 = vector.broadcast %c11_i32_47 : i32 to vector<8x256xi32>
    %99 = arith.cmpi sge, %16, %98 : vector<8x256xi32>
    %cst_48 = arith.constant 0.000000e+00 : f32
    %100 = vector.broadcast %cst_48 : f32 to vector<8x256xf32>
    %101 = arith.select %99, %97, %100 : vector<8x256xi1>, vector<8x256xf32>
    %c0_49 = arith.constant 0 : index
    %c0_50 = arith.constant 0 : index
    %102 = vector.load %arg6[%c0_49, %c0_50] : memref<104x256xf32, #tpu.memory_space<vmem>>, vector<8x256xf32>
    tpu.vector_store %arg6[%c0_49, %c0_50], %101 {strides = array<i32>} : memref<104x256xf32, #tpu.memory_space<vmem>>, vector<8x256xf32>,
    %c10_i32_51 = arith.constant 10 : i32
    %103 = tpu.dynamic_rotate %95 by %c10_i32_51 dim 1 : vector<8x256xf32>, i32 -> vector<8x256xf32>
    %c10_i32_52 = arith.constant 10 : i32
    %104 = vector.broadcast %c10_i32_52 : i32 to vector<8x256xi32>
    %105 = arith.cmpi sge, %16, %104 : vector<8x256xi32>
    %cst_53 = arith.constant 0.000000e+00 : f32
    %106 = vector.broadcast %cst_53 : f32 to vector<8x256xf32>
    %107 = arith.select %105, %103, %106 : vector<8x256xi1>, vector<8x256xf32>
    %c8_54 = arith.constant 8 : index
    %c0_55 = arith.constant 0 : index
    %108 = vector.load %arg6[%c8_54, %c0_55] : memref<104x256xf32, #tpu.memory_space<vmem>>, vector<8x256xf32>
    tpu.vector_store %arg6[%c8_54, %c0_55], %107 {strides = array<i32>} : memref<104x256xf32, #tpu.memory_space<vmem>>, vector<8x256xf32>,
    %c9_i32_56 = arith.constant 9 : i32
    %109 = tpu.dynamic_rotate %95 by %c9_i32_56 dim 1 : vector<8x256xf32>, i32 -> vector<8x256xf32>
    %c9_i32_57 = arith.constant 9 : i32
    %110 = vector.broadcast %c9_i32_57 : i32 to vector<8x256xi32>
    %111 = arith.cmpi sge, %16, %110 : vector<8x256xi32>
    %cst_58 = arith.constant 0.000000e+00 : f32
    %112 = vector.broadcast %cst_58 : f32 to vector<8x256xf32>
    %113 = arith.select %111, %109, %112 : vector<8x256xi1>, vector<8x256xf32>
    %c16_59 = arith.constant 16 : index
    %c0_60 = arith.constant 0 : index
    %114 = vector.load %arg6[%c16_59, %c0_60] : memref<104x256xf32, #tpu.memory_space<vmem>>, vector<8x256xf32>
    tpu.vector_store %arg6[%c16_59, %c0_60], %113 {strides = array<i32>} : memref<104x256xf32, #tpu.memory_space<vmem>>, vector<8x256xf32>,
    %c8_i32_61 = arith.constant 8 : i32
    %115 = tpu.dynamic_rotate %95 by %c8_i32_61 dim 1 : vector<8x256xf32>, i32 -> vector<8x256xf32>
    %c8_i32_62 = arith.constant 8 : i32
    %116 = vector.broadcast %c8_i32_62 : i32 to vector<8x256xi32>
    %117 = arith.cmpi sge, %16, %116 : vector<8x256xi32>
    %cst_63 = arith.constant 0.000000e+00 : f32
    %118 = vector.broadcast %cst_63 : f32 to vector<8x256xf32>
    %119 = arith.select %117, %115, %118 : vector<8x256xi1>, vector<8x256xf32>
    %c24_64 = arith.constant 24 : index
    %c0_65 = arith.constant 0 : index
    %120 = vector.load %arg6[%c24_64, %c0_65] : memref<104x256xf32, #tpu.memory_space<vmem>>, vector<8x256xf32>
    tpu.vector_store %arg6[%c24_64, %c0_65], %119 {strides = array<i32>} : memref<104x256xf32, #tpu.memory_space<vmem>>, vector<8x256xf32>,
    %c7_i32_66 = arith.constant 7 : i32
    %121 = tpu.dynamic_rotate %95 by %c7_i32_66 dim 1 : vector<8x256xf32>, i32 -> vector<8x256xf32>
    %c7_i32_67 = arith.constant 7 : i32
    %122 = vector.broadcast %c7_i32_67 : i32 to vector<8x256xi32>
    %123 = arith.cmpi sge, %16, %122 : vector<8x256xi32>
    %cst_68 = arith.constant 0.000000e+00 : f32
    %124 = vector.broadcast %cst_68 : f32 to vector<8x256xf32>
    %125 = arith.select %123, %121, %124 : vector<8x256xi1>, vector<8x256xf32>
    %c32_69 = arith.constant 32 : index
    %c0_70 = arith.constant 0 : index
    %126 = vector.load %arg6[%c32_69, %c0_70] : memref<104x256xf32, #tpu.memory_space<vmem>>, vector<8x256xf32>
    tpu.vector_store %arg6[%c32_69, %c0_70], %125 {strides = array<i32>} : memref<104x256xf32, #tpu.memory_space<vmem>>, vector<8x256xf32>,
    %c6_i32_71 = arith.constant 6 : i32
    %127 = tpu.dynamic_rotate %95 by %c6_i32_71 dim 1 : vector<8x256xf32>, i32 -> vector<8x256xf32>
    %c6_i32_72 = arith.constant 6 : i32
    %128 = vector.broadcast %c6_i32_72 : i32 to vector<8x256xi32>
    %129 = arith.cmpi sge, %16, %128 : vector<8x256xi32>
    %cst_73 = arith.constant 0.000000e+00 : f32
    %130 = vector.broadcast %cst_73 : f32 to vector<8x256xf32>
    %131 = arith.select %129, %127, %130 : vector<8x256xi1>, vector<8x256xf32>
    %c40_74 = arith.constant 40 : index
    %c0_75 = arith.constant 0 : index
    %132 = vector.load %arg6[%c40_74, %c0_75] : memref<104x256xf32, #tpu.memory_space<vmem>>, vector<8x256xf32>
    tpu.vector_store %arg6[%c40_74, %c0_75], %131 {strides = array<i32>} : memref<104x256xf32, #tpu.memory_space<vmem>>, vector<8x256xf32>,
    %c5_i32_76 = arith.constant 5 : i32
    %133 = tpu.dynamic_rotate %95 by %c5_i32_76 dim 1 : vector<8x256xf32>, i32 -> vector<8x256xf32>
    %c5_i32_77 = arith.constant 5 : i32
    %134 = vector.broadcast %c5_i32_77 : i32 to vector<8x256xi32>
    %135 = arith.cmpi sge, %16, %134 : vector<8x256xi32>
    %cst_78 = arith.constant 0.000000e+00 : f32
    %136 = vector.broadcast %cst_78 : f32 to vector<8x256xf32>
    %137 = arith.select %135, %133, %136 : vector<8x256xi1>, vector<8x256xf32>
    %c48_79 = arith.constant 48 : index
    %c0_80 = arith.constant 0 : index
    %138 = vector.load %arg6[%c48_79, %c0_80] : memref<104x256xf32, #tpu.memory_space<vmem>>, vector<8x256xf32>
    tpu.vector_store %arg6[%c48_79, %c0_80], %137 {strides = array<i32>} : memref<104x256xf32, #tpu.memory_space<vmem>>, vector<8x256xf32>,
    %c4_i32_81 = arith.constant 4 : i32
    %139 = tpu.dynamic_rotate %95 by %c4_i32_81 dim 1 : vector<8x256xf32>, i32 -> vector<8x256xf32>
    %c4_i32_82 = arith.constant 4 : i32
    %140 = vector.broadcast %c4_i32_82 : i32 to vector<8x256xi32>
    %141 = arith.cmpi sge, %16, %140 : vector<8x256xi32>
    %cst_83 = arith.constant 0.000000e+00 : f32
    %142 = vector.broadcast %cst_83 : f32 to vector<8x256xf32>
    %143 = arith.select %141, %139, %142 : vector<8x256xi1>, vector<8x256xf32>
    %c56_84 = arith.constant 56 : index
    %c0_85 = arith.constant 0 : index
    %144 = vector.load %arg6[%c56_84, %c0_85] : memref<104x256xf32, #tpu.memory_space<vmem>>, vector<8x256xf32>
    tpu.vector_store %arg6[%c56_84, %c0_85], %143 {strides = array<i32>} : memref<104x256xf32, #tpu.memory_space<vmem>>, vector<8x256xf32>,
    %c3_i32_86 = arith.constant 3 : i32
    %145 = tpu.dynamic_rotate %95 by %c3_i32_86 dim 1 : vector<8x256xf32>, i32 -> vector<8x256xf32>
    %c3_i32_87 = arith.constant 3 : i32
    %146 = vector.broadcast %c3_i32_87 : i32 to vector<8x256xi32>
    %147 = arith.cmpi sge, %16, %146 : vector<8x256xi32>
    %cst_88 = arith.constant 0.000000e+00 : f32
    %148 = vector.broadcast %cst_88 : f32 to vector<8x256xf32>
    %149 = arith.select %147, %145, %148 : vector<8x256xi1>, vector<8x256xf32>
    %c64_89 = arith.constant 64 : index
    %c0_90 = arith.constant 0 : index
    %150 = vector.load %arg6[%c64_89, %c0_90] : memref<104x256xf32, #tpu.memory_space<vmem>>, vector<8x256xf32>
    tpu.vector_store %arg6[%c64_89, %c0_90], %149 {strides = array<i32>} : memref<104x256xf32, #tpu.memory_space<vmem>>, vector<8x256xf32>,
    %c2_i32_91 = arith.constant 2 : i32
    %151 = tpu.dynamic_rotate %95 by %c2_i32_91 dim 1 : vector<8x256xf32>, i32 -> vector<8x256xf32>
    %c2_i32_92 = arith.constant 2 : i32
    %152 = vector.broadcast %c2_i32_92 : i32 to vector<8x256xi32>
    %153 = arith.cmpi sge, %16, %152 : vector<8x256xi32>
    %cst_93 = arith.constant 0.000000e+00 : f32
    %154 = vector.broadcast %cst_93 : f32 to vector<8x256xf32>
    %155 = arith.select %153, %151, %154 : vector<8x256xi1>, vector<8x256xf32>
    %c72_94 = arith.constant 72 : index
    %c0_95 = arith.constant 0 : index
    %156 = vector.load %arg6[%c72_94, %c0_95] : memref<104x256xf32, #tpu.memory_space<vmem>>, vector<8x256xf32>
    tpu.vector_store %arg6[%c72_94, %c0_95], %155 {strides = array<i32>} : memref<104x256xf32, #tpu.memory_space<vmem>>, vector<8x256xf32>,
    %c1_i32_96 = arith.constant 1 : i32
    %157 = tpu.dynamic_rotate %95 by %c1_i32_96 dim 1 : vector<8x256xf32>, i32 -> vector<8x256xf32>
    %c1_i32_97 = arith.constant 1 : i32
    %158 = vector.broadcast %c1_i32_97 : i32 to vector<8x256xi32>
    %159 = arith.cmpi sge, %16, %158 : vector<8x256xi32>
    %cst_98 = arith.constant 0.000000e+00 : f32
    %160 = vector.broadcast %cst_98 : f32 to vector<8x256xf32>
    %161 = arith.select %159, %157, %160 : vector<8x256xi1>, vector<8x256xf32>
    %c80_99 = arith.constant 80 : index
    %c0_100 = arith.constant 0 : index
    %162 = vector.load %arg6[%c80_99, %c0_100] : memref<104x256xf32, #tpu.memory_space<vmem>>, vector<8x256xf32>
    tpu.vector_store %arg6[%c80_99, %c0_100], %161 {strides = array<i32>} : memref<104x256xf32, #tpu.memory_space<vmem>>, vector<8x256xf32>,
    %c88_101 = arith.constant 88 : index
    %c0_102 = arith.constant 0 : index
    %163 = vector.load %arg6[%c88_101, %c0_102] : memref<104x256xf32, #tpu.memory_space<vmem>>, vector<8x256xf32>
    tpu.vector_store %arg6[%c88_101, %c0_102], %95 {strides = array<i32>} : memref<104x256xf32, #tpu.memory_space<vmem>>, vector<8x256xf32>,
    %c0_103 = arith.constant 0 : index
    %c0_104 = arith.constant 0 : index
    %c0_105 = arith.constant 0 : index
    %164 = vector.load %arg3[%c0_103, %c0_104, %c0_105] : memref<5x8x104xf32, #tpu.memory_space<vmem>>, vector<1x8x104xf32>
    %165 = vector.shape_cast %164 : vector<1x8x104xf32> to vector<8x104xf32>
    %c0_106 = arith.constant 0 : index
    %c0_107 = arith.constant 0 : index
    %166 = vector.load %arg6[%c0_106, %c0_107] : memref<104x256xf32, #tpu.memory_space<vmem>>, vector<104x256xf32>
    %cst_108 = arith.constant dense<0.000000e+00> : vector<8x256xf32>
    %167 = tpu.matmul %165, %166, %cst_108 {dimension_numbers = #tpu.dot_dimension_numbers<[1], [0], [0], [1], [0, 0, 1, 1], [], []>} : vector<8x104xf32>, vector<104x256xf32>, vector<8x256xf32> -> vector<8x256xf32>
    %168 = math.tanh %167 : vector<8x256xf32>
    %169 = arith.addf %168, %96 : vector<8x256xf32>
    %170 = math.tanh %169 : vector<8x256xf32>
    %c22_i32 = arith.constant 22 : i32
    %171 = tpu.dynamic_rotate %170 by %c22_i32 dim 1 : vector<8x256xf32>, i32 -> vector<8x256xf32>
    %c22_i32_109 = arith.constant 22 : i32
    %172 = vector.broadcast %c22_i32_109 : i32 to vector<8x256xi32>
    %173 = arith.cmpi sge, %16, %172 : vector<8x256xi32>
    %cst_110 = arith.constant 0.000000e+00 : f32
    %174 = vector.broadcast %cst_110 : f32 to vector<8x256xf32>
    %175 = arith.select %173, %171, %174 : vector<8x256xi1>, vector<8x256xf32>
    %c0_111 = arith.constant 0 : index
    %c0_112 = arith.constant 0 : index
    %176 = vector.load %arg6[%c0_111, %c0_112] : memref<104x256xf32, #tpu.memory_space<vmem>>, vector<8x256xf32>
    tpu.vector_store %arg6[%c0_111, %c0_112], %175 {strides = array<i32>} : memref<104x256xf32, #tpu.memory_space<vmem>>, vector<8x256xf32>,
    %c20_i32 = arith.constant 20 : i32
    %177 = tpu.dynamic_rotate %170 by %c20_i32 dim 1 : vector<8x256xf32>, i32 -> vector<8x256xf32>
    %c20_i32_113 = arith.constant 20 : i32
    %178 = vector.broadcast %c20_i32_113 : i32 to vector<8x256xi32>
    %179 = arith.cmpi sge, %16, %178 : vector<8x256xi32>
    %cst_114 = arith.constant 0.000000e+00 : f32
    %180 = vector.broadcast %cst_114 : f32 to vector<8x256xf32>
    %181 = arith.select %179, %177, %180 : vector<8x256xi1>, vector<8x256xf32>
    %c8_115 = arith.constant 8 : index
    %c0_116 = arith.constant 0 : index
    %182 = vector.load %arg6[%c8_115, %c0_116] : memref<104x256xf32, #tpu.memory_space<vmem>>, vector<8x256xf32>
    tpu.vector_store %arg6[%c8_115, %c0_116], %181 {strides = array<i32>} : memref<104x256xf32, #tpu.memory_space<vmem>>, vector<8x256xf32>,
    %c18_i32 = arith.constant 18 : i32
    %183 = tpu.dynamic_rotate %170 by %c18_i32 dim 1 : vector<8x256xf32>, i32 -> vector<8x256xf32>
    %c18_i32_117 = arith.constant 18 : i32
    %184 = vector.broadcast %c18_i32_117 : i32 to vector<8x256xi32>
    %185 = arith.cmpi sge, %16, %184 : vector<8x256xi32>
    %cst_118 = arith.constant 0.000000e+00 : f32
    %186 = vector.broadcast %cst_118 : f32 to vector<8x256xf32>
    %187 = arith.select %185, %183, %186 : vector<8x256xi1>, vector<8x256xf32>
    %c16_119 = arith.constant 16 : index
    %c0_120 = arith.constant 0 : index
    %188 = vector.load %arg6[%c16_119, %c0_120] : memref<104x256xf32, #tpu.memory_space<vmem>>, vector<8x256xf32>
    tpu.vector_store %arg6[%c16_119, %c0_120], %187 {strides = array<i32>} : memref<104x256xf32, #tpu.memory_space<vmem>>, vector<8x256xf32>,
    %c16_i32 = arith.constant 16 : i32
    %189 = tpu.dynamic_rotate %170 by %c16_i32 dim 1 : vector<8x256xf32>, i32 -> vector<8x256xf32>
    %c16_i32_121 = arith.constant 16 : i32
    %190 = vector.broadcast %c16_i32_121 : i32 to vector<8x256xi32>
    %191 = arith.cmpi sge, %16, %190 : vector<8x256xi32>
    %cst_122 = arith.constant 0.000000e+00 : f32
    %192 = vector.broadcast %cst_122 : f32 to vector<8x256xf32>
    %193 = arith.select %191, %189, %192 : vector<8x256xi1>, vector<8x256xf32>
    %c24_123 = arith.constant 24 : index
    %c0_124 = arith.constant 0 : index
    %194 = vector.load %arg6[%c24_123, %c0_124] : memref<104x256xf32, #tpu.memory_space<vmem>>, vector<8x256xf32>
    tpu.vector_store %arg6[%c24_123, %c0_124], %193 {strides = array<i32>} : memref<104x256xf32, #tpu.memory_space<vmem>>, vector<8x256xf32>,
    %c14_i32 = arith.constant 14 : i32
    %195 = tpu.dynamic_rotate %170 by %c14_i32 dim 1 : vector<8x256xf32>, i32 -> vector<8x256xf32>
    %c14_i32_125 = arith.constant 14 : i32
    %196 = vector.broadcast %c14_i32_125 : i32 to vector<8x256xi32>
    %197 = arith.cmpi sge, %16, %196 : vector<8x256xi32>
    %cst_126 = arith.constant 0.000000e+00 : f32
    %198 = vector.broadcast %cst_126 : f32 to vector<8x256xf32>
    %199 = arith.select %197, %195, %198 : vector<8x256xi1>, vector<8x256xf32>
    %c32_127 = arith.constant 32 : index
    %c0_128 = arith.constant 0 : index
    %200 = vector.load %arg6[%c32_127, %c0_128] : memref<104x256xf32, #tpu.memory_space<vmem>>, vector<8x256xf32>
    tpu.vector_store %arg6[%c32_127, %c0_128], %199 {strides = array<i32>} : memref<104x256xf32, #tpu.memory_space<vmem>>, vector<8x256xf32>,
    %c12_i32 = arith.constant 12 : i32
    %201 = tpu.dynamic_rotate %170 by %c12_i32 dim 1 : vector<8x256xf32>, i32 -> vector<8x256xf32>
    %c12_i32_129 = arith.constant 12 : i32
    %202 = vector.broadcast %c12_i32_129 : i32 to vector<8x256xi32>
    %203 = arith.cmpi sge, %16, %202 : vector<8x256xi32>
    %cst_130 = arith.constant 0.000000e+00 : f32
    %204 = vector.broadcast %cst_130 : f32 to vector<8x256xf32>
    %205 = arith.select %203, %201, %204 : vector<8x256xi1>, vector<8x256xf32>
    %c40_131 = arith.constant 40 : index
    %c0_132 = arith.constant 0 : index
    %206 = vector.load %arg6[%c40_131, %c0_132] : memref<104x256xf32, #tpu.memory_space<vmem>>, vector<8x256xf32>
    tpu.vector_store %arg6[%c40_131, %c0_132], %205 {strides = array<i32>} : memref<104x256xf32, #tpu.memory_space<vmem>>, vector<8x256xf32>,
    %c10_i32_133 = arith.constant 10 : i32
    %207 = tpu.dynamic_rotate %170 by %c10_i32_133 dim 1 : vector<8x256xf32>, i32 -> vector<8x256xf32>
    %c10_i32_134 = arith.constant 10 : i32
    %208 = vector.broadcast %c10_i32_134 : i32 to vector<8x256xi32>
    %209 = arith.cmpi sge, %16, %208 : vector<8x256xi32>
    %cst_135 = arith.constant 0.000000e+00 : f32
    %210 = vector.broadcast %cst_135 : f32 to vector<8x256xf32>
    %211 = arith.select %209, %207, %210 : vector<8x256xi1>, vector<8x256xf32>
    %c48_136 = arith.constant 48 : index
    %c0_137 = arith.constant 0 : index
    %212 = vector.load %arg6[%c48_136, %c0_137] : memref<104x256xf32, #tpu.memory_space<vmem>>, vector<8x256xf32>
    tpu.vector_store %arg6[%c48_136, %c0_137], %211 {strides = array<i32>} : memref<104x256xf32, #tpu.memory_space<vmem>>, vector<8x256xf32>,
    %c8_i32_138 = arith.constant 8 : i32
    %213 = tpu.dynamic_rotate %170 by %c8_i32_138 dim 1 : vector<8x256xf32>, i32 -> vector<8x256xf32>
    %c8_i32_139 = arith.constant 8 : i32
    %214 = vector.broadcast %c8_i32_139 : i32 to vector<8x256xi32>
    %215 = arith.cmpi sge, %16, %214 : vector<8x256xi32>
    %cst_140 = arith.constant 0.000000e+00 : f32
    %216 = vector.broadcast %cst_140 : f32 to vector<8x256xf32>
    %217 = arith.select %215, %213, %216 : vector<8x256xi1>, vector<8x256xf32>
    %c56_141 = arith.constant 56 : index
    %c0_142 = arith.constant 0 : index
    %218 = vector.load %arg6[%c56_141, %c0_142] : memref<104x256xf32, #tpu.memory_space<vmem>>, vector<8x256xf32>
    tpu.vector_store %arg6[%c56_141, %c0_142], %217 {strides = array<i32>} : memref<104x256xf32, #tpu.memory_space<vmem>>, vector<8x256xf32>,
    %c6_i32_143 = arith.constant 6 : i32
    %219 = tpu.dynamic_rotate %170 by %c6_i32_143 dim 1 : vector<8x256xf32>, i32 -> vector<8x256xf32>
    %c6_i32_144 = arith.constant 6 : i32
    %220 = vector.broadcast %c6_i32_144 : i32 to vector<8x256xi32>
    %221 = arith.cmpi sge, %16, %220 : vector<8x256xi32>
    %cst_145 = arith.constant 0.000000e+00 : f32
    %222 = vector.broadcast %cst_145 : f32 to vector<8x256xf32>
    %223 = arith.select %221, %219, %222 : vector<8x256xi1>, vector<8x256xf32>
    %c64_146 = arith.constant 64 : index
    %c0_147 = arith.constant 0 : index
    %224 = vector.load %arg6[%c64_146, %c0_147] : memref<104x256xf32, #tpu.memory_space<vmem>>, vector<8x256xf32>
    tpu.vector_store %arg6[%c64_146, %c0_147], %223 {strides = array<i32>} : memref<104x256xf32, #tpu.memory_space<vmem>>, vector<8x256xf32>,
    %c4_i32_148 = arith.constant 4 : i32
    %225 = tpu.dynamic_rotate %170 by %c4_i32_148 dim 1 : vector<8x256xf32>, i32 -> vector<8x256xf32>
    %c4_i32_149 = arith.constant 4 : i32
    %226 = vector.broadcast %c4_i32_149 : i32 to vector<8x256xi32>
    %227 = arith.cmpi sge, %16, %226 : vector<8x256xi32>
    %cst_150 = arith.constant 0.000000e+00 : f32
    %228 = vector.broadcast %cst_150 : f32 to vector<8x256xf32>
    %229 = arith.select %227, %225, %228 : vector<8x256xi1>, vector<8x256xf32>
    %c72_151 = arith.constant 72 : index
    %c0_152 = arith.constant 0 : index
    %230 = vector.load %arg6[%c72_151, %c0_152] : memref<104x256xf32, #tpu.memory_space<vmem>>, vector<8x256xf32>
    tpu.vector_store %arg6[%c72_151, %c0_152], %229 {strides = array<i32>} : memref<104x256xf32, #tpu.memory_space<vmem>>, vector<8x256xf32>,
    %c2_i32_153 = arith.constant 2 : i32
    %231 = tpu.dynamic_rotate %170 by %c2_i32_153 dim 1 : vector<8x256xf32>, i32 -> vector<8x256xf32>
    %c2_i32_154 = arith.constant 2 : i32
    %232 = vector.broadcast %c2_i32_154 : i32 to vector<8x256xi32>
    %233 = arith.cmpi sge, %16, %232 : vector<8x256xi32>
    %cst_155 = arith.constant 0.000000e+00 : f32
    %234 = vector.broadcast %cst_155 : f32 to vector<8x256xf32>
    %235 = arith.select %233, %231, %234 : vector<8x256xi1>, vector<8x256xf32>
    %c80_156 = arith.constant 80 : index
    %c0_157 = arith.constant 0 : index
    %236 = vector.load %arg6[%c80_156, %c0_157] : memref<104x256xf32, #tpu.memory_space<vmem>>, vector<8x256xf32>
    tpu.vector_store %arg6[%c80_156, %c0_157], %235 {strides = array<i32>} : memref<104x256xf32, #tpu.memory_space<vmem>>, vector<8x256xf32>,
    %c88_158 = arith.constant 88 : index
    %c0_159 = arith.constant 0 : index
    %237 = vector.load %arg6[%c88_158, %c0_159] : memref<104x256xf32, #tpu.memory_space<vmem>>, vector<8x256xf32>
    tpu.vector_store %arg6[%c88_158, %c0_159], %170 {strides = array<i32>} : memref<104x256xf32, #tpu.memory_space<vmem>>, vector<8x256xf32>,
    %c1 = arith.constant 1 : index
    %c0_160 = arith.constant 0 : index
    %c0_161 = arith.constant 0 : index
    %238 = vector.load %arg3[%c1, %c0_160, %c0_161] : memref<5x8x104xf32, #tpu.memory_space<vmem>>, vector<1x8x104xf32>
    %239 = vector.shape_cast %238 : vector<1x8x104xf32> to vector<8x104xf32>
    %c0_162 = arith.constant 0 : index
    %c0_163 = arith.constant 0 : index
    %240 = vector.load %arg6[%c0_162, %c0_163] : memref<104x256xf32, #tpu.memory_space<vmem>>, vector<104x256xf32>
    %cst_164 = arith.constant dense<0.000000e+00> : vector<8x256xf32>
    %241 = tpu.matmul %239, %240, %cst_164 {dimension_numbers = #tpu.dot_dimension_numbers<[1], [0], [0], [1], [0, 0, 1, 1], [], []>} : vector<8x104xf32>, vector<104x256xf32>, vector<8x256xf32> -> vector<8x256xf32>
    %242 = math.tanh %241 : vector<8x256xf32>
    %c22_i32_165 = arith.constant 22 : i32
    %243 = tpu.dynamic_rotate %242 by %c22_i32_165 dim 1 : vector<8x256xf32>, i32 -> vector<8x256xf32>
    %c22_i32_166 = arith.constant 22 : i32
    %244 = vector.broadcast %c22_i32_166 : i32 to vector<8x256xi32>
    %245 = arith.cmpi sge, %16, %244 : vector<8x256xi32>
    %cst_167 = arith.constant 0.000000e+00 : f32
    %246 = vector.broadcast %cst_167 : f32 to vector<8x256xf32>
    %247 = arith.select %245, %243, %246 : vector<8x256xi1>, vector<8x256xf32>
    %c0_168 = arith.constant 0 : index
    %c0_169 = arith.constant 0 : index
    %248 = vector.load %arg6[%c0_168, %c0_169] : memref<104x256xf32, #tpu.memory_space<vmem>>, vector<8x256xf32>
    tpu.vector_store %arg6[%c0_168, %c0_169], %247 {strides = array<i32>} : memref<104x256xf32, #tpu.memory_space<vmem>>, vector<8x256xf32>,
    %c20_i32_170 = arith.constant 20 : i32
    %249 = tpu.dynamic_rotate %242 by %c20_i32_170 dim 1 : vector<8x256xf32>, i32 -> vector<8x256xf32>
    %c20_i32_171 = arith.constant 20 : i32
    %250 = vector.broadcast %c20_i32_171 : i32 to vector<8x256xi32>
    %251 = arith.cmpi sge, %16, %250 : vector<8x256xi32>
    %cst_172 = arith.constant 0.000000e+00 : f32
    %252 = vector.broadcast %cst_172 : f32 to vector<8x256xf32>
    %253 = arith.select %251, %249, %252 : vector<8x256xi1>, vector<8x256xf32>
    %c8_173 = arith.constant 8 : index
    %c0_174 = arith.constant 0 : index
    %254 = vector.load %arg6[%c8_173, %c0_174] : memref<104x256xf32, #tpu.memory_space<vmem>>, vector<8x256xf32>
    tpu.vector_store %arg6[%c8_173, %c0_174], %253 {strides = array<i32>} : memref<104x256xf32, #tpu.memory_space<vmem>>, vector<8x256xf32>,
    %c18_i32_175 = arith.constant 18 : i32
    %255 = tpu.dynamic_rotate %242 by %c18_i32_175 dim 1 : vector<8x256xf32>, i32 -> vector<8x256xf32>
    %c18_i32_176 = arith.constant 18 : i32
    %256 = vector.broadcast %c18_i32_176 : i32 to vector<8x256xi32>
    %257 = arith.cmpi sge, %16, %256 : vector<8x256xi32>
    %cst_177 = arith.constant 0.000000e+00 : f32
    %258 = vector.broadcast %cst_177 : f32 to vector<8x256xf32>
    %259 = arith.select %257, %255, %258 : vector<8x256xi1>, vector<8x256xf32>
    %c16_178 = arith.constant 16 : index
    %c0_179 = arith.constant 0 : index
    %260 = vector.load %arg6[%c16_178, %c0_179] : memref<104x256xf32, #tpu.memory_space<vmem>>, vector<8x256xf32>
    tpu.vector_store %arg6[%c16_178, %c0_179], %259 {strides = array<i32>} : memref<104x256xf32, #tpu.memory_space<vmem>>, vector<8x256xf32>,
    %c16_i32_180 = arith.constant 16 : i32
    %261 = tpu.dynamic_rotate %242 by %c16_i32_180 dim 1 : vector<8x256xf32>, i32 -> vector<8x256xf32>
    %c16_i32_181 = arith.constant 16 : i32
    %262 = vector.broadcast %c16_i32_181 : i32 to vector<8x256xi32>
    %263 = arith.cmpi sge, %16, %262 : vector<8x256xi32>
    %cst_182 = arith.constant 0.000000e+00 : f32
    %264 = vector.broadcast %cst_182 : f32 to vector<8x256xf32>
    %265 = arith.select %263, %261, %264 : vector<8x256xi1>, vector<8x256xf32>
    %c24_183 = arith.constant 24 : index
    %c0_184 = arith.constant 0 : index
    %266 = vector.load %arg6[%c24_183, %c0_184] : memref<104x256xf32, #tpu.memory_space<vmem>>, vector<8x256xf32>
    tpu.vector_store %arg6[%c24_183, %c0_184], %265 {strides = array<i32>} : memref<104x256xf32, #tpu.memory_space<vmem>>, vector<8x256xf32>,
    %c14_i32_185 = arith.constant 14 : i32
    %267 = tpu.dynamic_rotate %242 by %c14_i32_185 dim 1 : vector<8x256xf32>, i32 -> vector<8x256xf32>
    %c14_i32_186 = arith.constant 14 : i32
    %268 = vector.broadcast %c14_i32_186 : i32 to vector<8x256xi32>
    %269 = arith.cmpi sge, %16, %268 : vector<8x256xi32>
    %cst_187 = arith.constant 0.000000e+00 : f32
    %270 = vector.broadcast %cst_187 : f32 to vector<8x256xf32>
    %271 = arith.select %269, %267, %270 : vector<8x256xi1>, vector<8x256xf32>
    %c32_188 = arith.constant 32 : index
    %c0_189 = arith.constant 0 : index
    %272 = vector.load %arg6[%c32_188, %c0_189] : memref<104x256xf32, #tpu.memory_space<vmem>>, vector<8x256xf32>
    tpu.vector_store %arg6[%c32_188, %c0_189], %271 {strides = array<i32>} : memref<104x256xf32, #tpu.memory_space<vmem>>, vector<8x256xf32>,
    %c12_i32_190 = arith.constant 12 : i32
    %273 = tpu.dynamic_rotate %242 by %c12_i32_190 dim 1 : vector<8x256xf32>, i32 -> vector<8x256xf32>
    %c12_i32_191 = arith.constant 12 : i32
    %274 = vector.broadcast %c12_i32_191 : i32 to vector<8x256xi32>
    %275 = arith.cmpi sge, %16, %274 : vector<8x256xi32>
    %cst_192 = arith.constant 0.000000e+00 : f32
    %276 = vector.broadcast %cst_192 : f32 to vector<8x256xf32>
    %277 = arith.select %275, %273, %276 : vector<8x256xi1>, vector<8x256xf32>
    %c40_193 = arith.constant 40 : index
    %c0_194 = arith.constant 0 : index
    %278 = vector.load %arg6[%c40_193, %c0_194] : memref<104x256xf32, #tpu.memory_space<vmem>>, vector<8x256xf32>
    tpu.vector_store %arg6[%c40_193, %c0_194], %277 {strides = array<i32>} : memref<104x256xf32, #tpu.memory_space<vmem>>, vector<8x256xf32>,
    %c10_i32_195 = arith.constant 10 : i32
    %279 = tpu.dynamic_rotate %242 by %c10_i32_195 dim 1 : vector<8x256xf32>, i32 -> vector<8x256xf32>
    %c10_i32_196 = arith.constant 10 : i32
    %280 = vector.broadcast %c10_i32_196 : i32 to vector<8x256xi32>
    %281 = arith.cmpi sge, %16, %280 : vector<8x256xi32>
    %cst_197 = arith.constant 0.000000e+00 : f32
    %282 = vector.broadcast %cst_197 : f32 to vector<8x256xf32>
    %283 = arith.select %281, %279, %282 : vector<8x256xi1>, vector<8x256xf32>
    %c48_198 = arith.constant 48 : index
    %c0_199 = arith.constant 0 : index
    %284 = vector.load %arg6[%c48_198, %c0_199] : memref<104x256xf32, #tpu.memory_space<vmem>>, vector<8x256xf32>
    tpu.vector_store %arg6[%c48_198, %c0_199], %283 {strides = array<i32>} : memref<104x256xf32, #tpu.memory_space<vmem>>, vector<8x256xf32>,
    %c8_i32_200 = arith.constant 8 : i32
    %285 = tpu.dynamic_rotate %242 by %c8_i32_200 dim 1 : vector<8x256xf32>, i32 -> vector<8x256xf32>
    %c8_i32_201 = arith.constant 8 : i32
    %286 = vector.broadcast %c8_i32_201 : i32 to vector<8x256xi32>
    %287 = arith.cmpi sge, %16, %286 : vector<8x256xi32>
    %cst_202 = arith.constant 0.000000e+00 : f32
    %288 = vector.broadcast %cst_202 : f32 to vector<8x256xf32>
    %289 = arith.select %287, %285, %288 : vector<8x256xi1>, vector<8x256xf32>
    %c56_203 = arith.constant 56 : index
    %c0_204 = arith.constant 0 : index
    %290 = vector.load %arg6[%c56_203, %c0_204] : memref<104x256xf32, #tpu.memory_space<vmem>>, vector<8x256xf32>
    tpu.vector_store %arg6[%c56_203, %c0_204], %289 {strides = array<i32>} : memref<104x256xf32, #tpu.memory_space<vmem>>, vector<8x256xf32>,
    %c6_i32_205 = arith.constant 6 : i32
    %291 = tpu.dynamic_rotate %242 by %c6_i32_205 dim 1 : vector<8x256xf32>, i32 -> vector<8x256xf32>
    %c6_i32_206 = arith.constant 6 : i32
    %292 = vector.broadcast %c6_i32_206 : i32 to vector<8x256xi32>
    %293 = arith.cmpi sge, %16, %292 : vector<8x256xi32>
    %cst_207 = arith.constant 0.000000e+00 : f32
    %294 = vector.broadcast %cst_207 : f32 to vector<8x256xf32>
    %295 = arith.select %293, %291, %294 : vector<8x256xi1>, vector<8x256xf32>
    %c64_208 = arith.constant 64 : index
    %c0_209 = arith.constant 0 : index
    %296 = vector.load %arg6[%c64_208, %c0_209] : memref<104x256xf32, #tpu.memory_space<vmem>>, vector<8x256xf32>
    tpu.vector_store %arg6[%c64_208, %c0_209], %295 {strides = array<i32>} : memref<104x256xf32, #tpu.memory_space<vmem>>, vector<8x256xf32>,
    %c4_i32_210 = arith.constant 4 : i32
    %297 = tpu.dynamic_rotate %242 by %c4_i32_210 dim 1 : vector<8x256xf32>, i32 -> vector<8x256xf32>
    %c4_i32_211 = arith.constant 4 : i32
    %298 = vector.broadcast %c4_i32_211 : i32 to vector<8x256xi32>
    %299 = arith.cmpi sge, %16, %298 : vector<8x256xi32>
    %cst_212 = arith.constant 0.000000e+00 : f32
    %300 = vector.broadcast %cst_212 : f32 to vector<8x256xf32>
    %301 = arith.select %299, %297, %300 : vector<8x256xi1>, vector<8x256xf32>
    %c72_213 = arith.constant 72 : index
    %c0_214 = arith.constant 0 : index
    %302 = vector.load %arg6[%c72_213, %c0_214] : memref<104x256xf32, #tpu.memory_space<vmem>>, vector<8x256xf32>
    tpu.vector_store %arg6[%c72_213, %c0_214], %301 {strides = array<i32>} : memref<104x256xf32, #tpu.memory_space<vmem>>, vector<8x256xf32>,
    %c2_i32_215 = arith.constant 2 : i32
    %303 = tpu.dynamic_rotate %242 by %c2_i32_215 dim 1 : vector<8x256xf32>, i32 -> vector<8x256xf32>
    %c2_i32_216 = arith.constant 2 : i32
    %304 = vector.broadcast %c2_i32_216 : i32 to vector<8x256xi32>
    %305 = arith.cmpi sge, %16, %304 : vector<8x256xi32>
    %cst_217 = arith.constant 0.000000e+00 : f32
    %306 = vector.broadcast %cst_217 : f32 to vector<8x256xf32>
    %307 = arith.select %305, %303, %306 : vector<8x256xi1>, vector<8x256xf32>
    %c80_218 = arith.constant 80 : index
    %c0_219 = arith.constant 0 : index
    %308 = vector.load %arg6[%c80_218, %c0_219] : memref<104x256xf32, #tpu.memory_space<vmem>>, vector<8x256xf32>
    tpu.vector_store %arg6[%c80_218, %c0_219], %307 {strides = array<i32>} : memref<104x256xf32, #tpu.memory_space<vmem>>, vector<8x256xf32>,
    %c88_220 = arith.constant 88 : index
    %c0_221 = arith.constant 0 : index
    %309 = vector.load %arg6[%c88_220, %c0_221] : memref<104x256xf32, #tpu.memory_space<vmem>>, vector<8x256xf32>
    tpu.vector_store %arg6[%c88_220, %c0_221], %242 {strides = array<i32>} : memref<104x256xf32, #tpu.memory_space<vmem>>, vector<8x256xf32>,
    %c2 = arith.constant 2 : index
    %c0_222 = arith.constant 0 : index
    %c0_223 = arith.constant 0 : index
    %310 = vector.load %arg3[%c2, %c0_222, %c0_223] : memref<5x8x104xf32, #tpu.memory_space<vmem>>, vector<1x8x104xf32>
    %311 = vector.shape_cast %310 : vector<1x8x104xf32> to vector<8x104xf32>
    %c0_224 = arith.constant 0 : index
    %c0_225 = arith.constant 0 : index
    %312 = vector.load %arg6[%c0_224, %c0_225] : memref<104x256xf32, #tpu.memory_space<vmem>>, vector<104x256xf32>
    %cst_226 = arith.constant dense<0.000000e+00> : vector<8x256xf32>
    %313 = tpu.matmul %311, %312, %cst_226 {dimension_numbers = #tpu.dot_dimension_numbers<[1], [0], [0], [1], [0, 0, 1, 1], [], []>} : vector<8x104xf32>, vector<104x256xf32>, vector<8x256xf32> -> vector<8x256xf32>
    %314 = math.tanh %313 : vector<8x256xf32>
    %315 = arith.addf %314, %170 : vector<8x256xf32>
    %316 = math.tanh %315 : vector<8x256xf32>
    %c44_i32 = arith.constant 44 : i32
    %317 = tpu.dynamic_rotate %316 by %c44_i32 dim 1 : vector<8x256xf32>, i32 -> vector<8x256xf32>
    %c44_i32_227 = arith.constant 44 : i32
    %318 = vector.broadcast %c44_i32_227 : i32 to vector<8x256xi32>
    %319 = arith.cmpi sge, %16, %318 : vector<8x256xi32>
    %cst_228 = arith.constant 0.000000e+00 : f32
    %320 = vector.broadcast %cst_228 : f32 to vector<8x256xf32>
    %321 = arith.select %319, %317, %320 : vector<8x256xi1>, vector<8x256xf32>
    %c0_229 = arith.constant 0 : index
    %c0_230 = arith.constant 0 : index
    %322 = vector.load %arg6[%c0_229, %c0_230] : memref<104x256xf32, #tpu.memory_space<vmem>>, vector<8x256xf32>
    tpu.vector_store %arg6[%c0_229, %c0_230], %321 {strides = array<i32>} : memref<104x256xf32, #tpu.memory_space<vmem>>, vector<8x256xf32>,
    %c40_i32 = arith.constant 40 : i32
    %323 = tpu.dynamic_rotate %316 by %c40_i32 dim 1 : vector<8x256xf32>, i32 -> vector<8x256xf32>
    %c40_i32_231 = arith.constant 40 : i32
    %324 = vector.broadcast %c40_i32_231 : i32 to vector<8x256xi32>
    %325 = arith.cmpi sge, %16, %324 : vector<8x256xi32>
    %cst_232 = arith.constant 0.000000e+00 : f32
    %326 = vector.broadcast %cst_232 : f32 to vector<8x256xf32>
    %327 = arith.select %325, %323, %326 : vector<8x256xi1>, vector<8x256xf32>
    %c8_233 = arith.constant 8 : index
    %c0_234 = arith.constant 0 : index
    %328 = vector.load %arg6[%c8_233, %c0_234] : memref<104x256xf32, #tpu.memory_space<vmem>>, vector<8x256xf32>
    tpu.vector_store %arg6[%c8_233, %c0_234], %327 {strides = array<i32>} : memref<104x256xf32, #tpu.memory_space<vmem>>, vector<8x256xf32>,
    %c36_i32 = arith.constant 36 : i32
    %329 = tpu.dynamic_rotate %316 by %c36_i32 dim 1 : vector<8x256xf32>, i32 -> vector<8x256xf32>
    %c36_i32_235 = arith.constant 36 : i32
    %330 = vector.broadcast %c36_i32_235 : i32 to vector<8x256xi32>
    %331 = arith.cmpi sge, %16, %330 : vector<8x256xi32>
    %cst_236 = arith.constant 0.000000e+00 : f32
    %332 = vector.broadcast %cst_236 : f32 to vector<8x256xf32>
    %333 = arith.select %331, %329, %332 : vector<8x256xi1>, vector<8x256xf32>
    %c16_237 = arith.constant 16 : index
    %c0_238 = arith.constant 0 : index
    %334 = vector.load %arg6[%c16_237, %c0_238] : memref<104x256xf32, #tpu.memory_space<vmem>>, vector<8x256xf32>
    tpu.vector_store %arg6[%c16_237, %c0_238], %333 {strides = array<i32>} : memref<104x256xf32, #tpu.memory_space<vmem>>, vector<8x256xf32>,
    %c32_i32 = arith.constant 32 : i32
    %335 = tpu.dynamic_rotate %316 by %c32_i32 dim 1 : vector<8x256xf32>, i32 -> vector<8x256xf32>
    %c32_i32_239 = arith.constant 32 : i32
    %336 = vector.broadcast %c32_i32_239 : i32 to vector<8x256xi32>
    %337 = arith.cmpi sge, %16, %336 : vector<8x256xi32>
    %cst_240 = arith.constant 0.000000e+00 : f32
    %338 = vector.broadcast %cst_240 : f32 to vector<8x256xf32>
    %339 = arith.select %337, %335, %338 : vector<8x256xi1>, vector<8x256xf32>
    %c24_241 = arith.constant 24 : index
    %c0_242 = arith.constant 0 : index
    %340 = vector.load %arg6[%c24_241, %c0_242] : memref<104x256xf32, #tpu.memory_space<vmem>>, vector<8x256xf32>
    tpu.vector_store %arg6[%c24_241, %c0_242], %339 {strides = array<i32>} : memref<104x256xf32, #tpu.memory_space<vmem>>, vector<8x256xf32>,
    %c28_i32 = arith.constant 28 : i32
    %341 = tpu.dynamic_rotate %316 by %c28_i32 dim 1 : vector<8x256xf32>, i32 -> vector<8x256xf32>
    %c28_i32_243 = arith.constant 28 : i32
    %342 = vector.broadcast %c28_i32_243 : i32 to vector<8x256xi32>
    %343 = arith.cmpi sge, %16, %342 : vector<8x256xi32>
    %cst_244 = arith.constant 0.000000e+00 : f32
    %344 = vector.broadcast %cst_244 : f32 to vector<8x256xf32>
    %345 = arith.select %343, %341, %344 : vector<8x256xi1>, vector<8x256xf32>
    %c32_245 = arith.constant 32 : index
    %c0_246 = arith.constant 0 : index
    %346 = vector.load %arg6[%c32_245, %c0_246] : memref<104x256xf32, #tpu.memory_space<vmem>>, vector<8x256xf32>
    tpu.vector_store %arg6[%c32_245, %c0_246], %345 {strides = array<i32>} : memref<104x256xf32, #tpu.memory_space<vmem>>, vector<8x256xf32>,
    %c24_i32 = arith.constant 24 : i32
    %347 = tpu.dynamic_rotate %316 by %c24_i32 dim 1 : vector<8x256xf32>, i32 -> vector<8x256xf32>
    %c24_i32_247 = arith.constant 24 : i32
    %348 = vector.broadcast %c24_i32_247 : i32 to vector<8x256xi32>
    %349 = arith.cmpi sge, %16, %348 : vector<8x256xi32>
    %cst_248 = arith.constant 0.000000e+00 : f32
    %350 = vector.broadcast %cst_248 : f32 to vector<8x256xf32>
    %351 = arith.select %349, %347, %350 : vector<8x256xi1>, vector<8x256xf32>
    %c40_249 = arith.constant 40 : index
    %c0_250 = arith.constant 0 : index
    %352 = vector.load %arg6[%c40_249, %c0_250] : memref<104x256xf32, #tpu.memory_space<vmem>>, vector<8x256xf32>
    tpu.vector_store %arg6[%c40_249, %c0_250], %351 {strides = array<i32>} : memref<104x256xf32, #tpu.memory_space<vmem>>, vector<8x256xf32>,
    %c20_i32_251 = arith.constant 20 : i32
    %353 = tpu.dynamic_rotate %316 by %c20_i32_251 dim 1 : vector<8x256xf32>, i32 -> vector<8x256xf32>
    %c20_i32_252 = arith.constant 20 : i32
    %354 = vector.broadcast %c20_i32_252 : i32 to vector<8x256xi32>
    %355 = arith.cmpi sge, %16, %354 : vector<8x256xi32>
    %cst_253 = arith.constant 0.000000e+00 : f32
    %356 = vector.broadcast %cst_253 : f32 to vector<8x256xf32>
    %357 = arith.select %355, %353, %356 : vector<8x256xi1>, vector<8x256xf32>
    %c48_254 = arith.constant 48 : index
    %c0_255 = arith.constant 0 : index
    %358 = vector.load %arg6[%c48_254, %c0_255] : memref<104x256xf32, #tpu.memory_space<vmem>>, vector<8x256xf32>
    tpu.vector_store %arg6[%c48_254, %c0_255], %357 {strides = array<i32>} : memref<104x256xf32, #tpu.memory_space<vmem>>, vector<8x256xf32>,
    %c16_i32_256 = arith.constant 16 : i32
    %359 = tpu.dynamic_rotate %316 by %c16_i32_256 dim 1 : vector<8x256xf32>, i32 -> vector<8x256xf32>
    %c16_i32_257 = arith.constant 16 : i32
    %360 = vector.broadcast %c16_i32_257 : i32 to vector<8x256xi32>
    %361 = arith.cmpi sge, %16, %360 : vector<8x256xi32>
    %cst_258 = arith.constant 0.000000e+00 : f32
    %362 = vector.broadcast %cst_258 : f32 to vector<8x256xf32>
    %363 = arith.select %361, %359, %362 : vector<8x256xi1>, vector<8x256xf32>
    %c56_259 = arith.constant 56 : index
    %c0_260 = arith.constant 0 : index
    %364 = vector.load %arg6[%c56_259, %c0_260] : memref<104x256xf32, #tpu.memory_space<vmem>>, vector<8x256xf32>
    tpu.vector_store %arg6[%c56_259, %c0_260], %363 {strides = array<i32>} : memref<104x256xf32, #tpu.memory_space<vmem>>, vector<8x256xf32>,
    %c12_i32_261 = arith.constant 12 : i32
    %365 = tpu.dynamic_rotate %316 by %c12_i32_261 dim 1 : vector<8x256xf32>, i32 -> vector<8x256xf32>
    %c12_i32_262 = arith.constant 12 : i32
    %366 = vector.broadcast %c12_i32_262 : i32 to vector<8x256xi32>
    %367 = arith.cmpi sge, %16, %366 : vector<8x256xi32>
    %cst_263 = arith.constant 0.000000e+00 : f32
    %368 = vector.broadcast %cst_263 : f32 to vector<8x256xf32>
    %369 = arith.select %367, %365, %368 : vector<8x256xi1>, vector<8x256xf32>
    %c64_264 = arith.constant 64 : index
    %c0_265 = arith.constant 0 : index
    %370 = vector.load %arg6[%c64_264, %c0_265] : memref<104x256xf32, #tpu.memory_space<vmem>>, vector<8x256xf32>
    tpu.vector_store %arg6[%c64_264, %c0_265], %369 {strides = array<i32>} : memref<104x256xf32, #tpu.memory_space<vmem>>, vector<8x256xf32>,
    %c8_i32_266 = arith.constant 8 : i32
    %371 = tpu.dynamic_rotate %316 by %c8_i32_266 dim 1 : vector<8x256xf32>, i32 -> vector<8x256xf32>
    %c8_i32_267 = arith.constant 8 : i32
    %372 = vector.broadcast %c8_i32_267 : i32 to vector<8x256xi32>
    %373 = arith.cmpi sge, %16, %372 : vector<8x256xi32>
    %cst_268 = arith.constant 0.000000e+00 : f32
    %374 = vector.broadcast %cst_268 : f32 to vector<8x256xf32>
    %375 = arith.select %373, %371, %374 : vector<8x256xi1>, vector<8x256xf32>
    %c72_269 = arith.constant 72 : index
    %c0_270 = arith.constant 0 : index
    %376 = vector.load %arg6[%c72_269, %c0_270] : memref<104x256xf32, #tpu.memory_space<vmem>>, vector<8x256xf32>
    tpu.vector_store %arg6[%c72_269, %c0_270], %375 {strides = array<i32>} : memref<104x256xf32, #tpu.memory_space<vmem>>, vector<8x256xf32>,
    %c4_i32_271 = arith.constant 4 : i32
    %377 = tpu.dynamic_rotate %316 by %c4_i32_271 dim 1 : vector<8x256xf32>, i32 -> vector<8x256xf32>
    %c4_i32_272 = arith.constant 4 : i32
    %378 = vector.broadcast %c4_i32_272 : i32 to vector<8x256xi32>
    %379 = arith.cmpi sge, %16, %378 : vector<8x256xi32>
    %cst_273 = arith.constant 0.000000e+00 : f32
    %380 = vector.broadcast %cst_273 : f32 to vector<8x256xf32>
    %381 = arith.select %379, %377, %380 : vector<8x256xi1>, vector<8x256xf32>
    %c80_274 = arith.constant 80 : index
    %c0_275 = arith.constant 0 : index
    %382 = vector.load %arg6[%c80_274, %c0_275] : memref<104x256xf32, #tpu.memory_space<vmem>>, vector<8x256xf32>
    tpu.vector_store %arg6[%c80_274, %c0_275], %381 {strides = array<i32>} : memref<104x256xf32, #tpu.memory_space<vmem>>, vector<8x256xf32>,
    %c88_276 = arith.constant 88 : index
    %c0_277 = arith.constant 0 : index
    %383 = vector.load %arg6[%c88_276, %c0_277] : memref<104x256xf32, #tpu.memory_space<vmem>>, vector<8x256xf32>
    tpu.vector_store %arg6[%c88_276, %c0_277], %316 {strides = array<i32>} : memref<104x256xf32, #tpu.memory_space<vmem>>, vector<8x256xf32>,
    %c3 = arith.constant 3 : index
    %c0_278 = arith.constant 0 : index
    %c0_279 = arith.constant 0 : index
    %384 = vector.load %arg3[%c3, %c0_278, %c0_279] : memref<5x8x104xf32, #tpu.memory_space<vmem>>, vector<1x8x104xf32>
    %385 = vector.shape_cast %384 : vector<1x8x104xf32> to vector<8x104xf32>
    %c0_280 = arith.constant 0 : index
    %c0_281 = arith.constant 0 : index
    %386 = vector.load %arg6[%c0_280, %c0_281] : memref<104x256xf32, #tpu.memory_space<vmem>>, vector<104x256xf32>
    %cst_282 = arith.constant dense<0.000000e+00> : vector<8x256xf32>
    %387 = tpu.matmul %385, %386, %cst_282 {dimension_numbers = #tpu.dot_dimension_numbers<[1], [0], [0], [1], [0, 0, 1, 1], [], []>} : vector<8x104xf32>, vector<104x256xf32>, vector<8x256xf32> -> vector<8x256xf32>
    %388 = math.tanh %387 : vector<8x256xf32>
    %c44_i32_283 = arith.constant 44 : i32
    %389 = tpu.dynamic_rotate %388 by %c44_i32_283 dim 1 : vector<8x256xf32>, i32 -> vector<8x256xf32>
    %c44_i32_284 = arith.constant 44 : i32
    %390 = vector.broadcast %c44_i32_284 : i32 to vector<8x256xi32>
    %391 = arith.cmpi sge, %16, %390 : vector<8x256xi32>
    %cst_285 = arith.constant 0.000000e+00 : f32
    %392 = vector.broadcast %cst_285 : f32 to vector<8x256xf32>
    %393 = arith.select %391, %389, %392 : vector<8x256xi1>, vector<8x256xf32>
    %c0_286 = arith.constant 0 : index
    %c0_287 = arith.constant 0 : index
    %394 = vector.load %arg6[%c0_286, %c0_287] : memref<104x256xf32, #tpu.memory_space<vmem>>, vector<8x256xf32>
    tpu.vector_store %arg6[%c0_286, %c0_287], %393 {strides = array<i32>} : memref<104x256xf32, #tpu.memory_space<vmem>>, vector<8x256xf32>,
    %c40_i32_288 = arith.constant 40 : i32
    %395 = tpu.dynamic_rotate %388 by %c40_i32_288 dim 1 : vector<8x256xf32>, i32 -> vector<8x256xf32>
    %c40_i32_289 = arith.constant 40 : i32
    %396 = vector.broadcast %c40_i32_289 : i32 to vector<8x256xi32>
    %397 = arith.cmpi sge, %16, %396 : vector<8x256xi32>
    %cst_290 = arith.constant 0.000000e+00 : f32
    %398 = vector.broadcast %cst_290 : f32 to vector<8x256xf32>
    %399 = arith.select %397, %395, %398 : vector<8x256xi1>, vector<8x256xf32>
    %c8_291 = arith.constant 8 : index
    %c0_292 = arith.constant 0 : index
    %400 = vector.load %arg6[%c8_291, %c0_292] : memref<104x256xf32, #tpu.memory_space<vmem>>, vector<8x256xf32>
    tpu.vector_store %arg6[%c8_291, %c0_292], %399 {strides = array<i32>} : memref<104x256xf32, #tpu.memory_space<vmem>>, vector<8x256xf32>,
    %c36_i32_293 = arith.constant 36 : i32
    %401 = tpu.dynamic_rotate %388 by %c36_i32_293 dim 1 : vector<8x256xf32>, i32 -> vector<8x256xf32>
    %c36_i32_294 = arith.constant 36 : i32
    %402 = vector.broadcast %c36_i32_294 : i32 to vector<8x256xi32>
    %403 = arith.cmpi sge, %16, %402 : vector<8x256xi32>
    %cst_295 = arith.constant 0.000000e+00 : f32
    %404 = vector.broadcast %cst_295 : f32 to vector<8x256xf32>
    %405 = arith.select %403, %401, %404 : vector<8x256xi1>, vector<8x256xf32>
    %c16_296 = arith.constant 16 : index
    %c0_297 = arith.constant 0 : index
    %406 = vector.load %arg6[%c16_296, %c0_297] : memref<104x256xf32, #tpu.memory_space<vmem>>, vector<8x256xf32>
    tpu.vector_store %arg6[%c16_296, %c0_297], %405 {strides = array<i32>} : memref<104x256xf32, #tpu.memory_space<vmem>>, vector<8x256xf32>,
    %c32_i32_298 = arith.constant 32 : i32
    %407 = tpu.dynamic_rotate %388 by %c32_i32_298 dim 1 : vector<8x256xf32>, i32 -> vector<8x256xf32>
    %c32_i32_299 = arith.constant 32 : i32
    %408 = vector.broadcast %c32_i32_299 : i32 to vector<8x256xi32>
    %409 = arith.cmpi sge, %16, %408 : vector<8x256xi32>
    %cst_300 = arith.constant 0.000000e+00 : f32
    %410 = vector.broadcast %cst_300 : f32 to vector<8x256xf32>
    %411 = arith.select %409, %407, %410 : vector<8x256xi1>, vector<8x256xf32>
    %c24_301 = arith.constant 24 : index
    %c0_302 = arith.constant 0 : index
    %412 = vector.load %arg6[%c24_301, %c0_302] : memref<104x256xf32, #tpu.memory_space<vmem>>, vector<8x256xf32>
    tpu.vector_store %arg6[%c24_301, %c0_302], %411 {strides = array<i32>} : memref<104x256xf32, #tpu.memory_space<vmem>>, vector<8x256xf32>,
    %c28_i32_303 = arith.constant 28 : i32
    %413 = tpu.dynamic_rotate %388 by %c28_i32_303 dim 1 : vector<8x256xf32>, i32 -> vector<8x256xf32>
    %c28_i32_304 = arith.constant 28 : i32
    %414 = vector.broadcast %c28_i32_304 : i32 to vector<8x256xi32>
    %415 = arith.cmpi sge, %16, %414 : vector<8x256xi32>
    %cst_305 = arith.constant 0.000000e+00 : f32
    %416 = vector.broadcast %cst_305 : f32 to vector<8x256xf32>
    %417 = arith.select %415, %413, %416 : vector<8x256xi1>, vector<8x256xf32>
    %c32_306 = arith.constant 32 : index
    %c0_307 = arith.constant 0 : index
    %418 = vector.load %arg6[%c32_306, %c0_307] : memref<104x256xf32, #tpu.memory_space<vmem>>, vector<8x256xf32>
    tpu.vector_store %arg6[%c32_306, %c0_307], %417 {strides = array<i32>} : memref<104x256xf32, #tpu.memory_space<vmem>>, vector<8x256xf32>,
    %c24_i32_308 = arith.constant 24 : i32
    %419 = tpu.dynamic_rotate %388 by %c24_i32_308 dim 1 : vector<8x256xf32>, i32 -> vector<8x256xf32>
    %c24_i32_309 = arith.constant 24 : i32
    %420 = vector.broadcast %c24_i32_309 : i32 to vector<8x256xi32>
    %421 = arith.cmpi sge, %16, %420 : vector<8x256xi32>
    %cst_310 = arith.constant 0.000000e+00 : f32
    %422 = vector.broadcast %cst_310 : f32 to vector<8x256xf32>
    %423 = arith.select %421, %419, %422 : vector<8x256xi1>, vector<8x256xf32>
    %c40_311 = arith.constant 40 : index
    %c0_312 = arith.constant 0 : index
    %424 = vector.load %arg6[%c40_311, %c0_312] : memref<104x256xf32, #tpu.memory_space<vmem>>, vector<8x256xf32>
    tpu.vector_store %arg6[%c40_311, %c0_312], %423 {strides = array<i32>} : memref<104x256xf32, #tpu.memory_space<vmem>>, vector<8x256xf32>,
    %c20_i32_313 = arith.constant 20 : i32
    %425 = tpu.dynamic_rotate %388 by %c20_i32_313 dim 1 : vector<8x256xf32>, i32 -> vector<8x256xf32>
    %c20_i32_314 = arith.constant 20 : i32
    %426 = vector.broadcast %c20_i32_314 : i32 to vector<8x256xi32>
    %427 = arith.cmpi sge, %16, %426 : vector<8x256xi32>
    %cst_315 = arith.constant 0.000000e+00 : f32
    %428 = vector.broadcast %cst_315 : f32 to vector<8x256xf32>
    %429 = arith.select %427, %425, %428 : vector<8x256xi1>, vector<8x256xf32>
    %c48_316 = arith.constant 48 : index
    %c0_317 = arith.constant 0 : index
    %430 = vector.load %arg6[%c48_316, %c0_317] : memref<104x256xf32, #tpu.memory_space<vmem>>, vector<8x256xf32>
    tpu.vector_store %arg6[%c48_316, %c0_317], %429 {strides = array<i32>} : memref<104x256xf32, #tpu.memory_space<vmem>>, vector<8x256xf32>,
    %c16_i32_318 = arith.constant 16 : i32
    %431 = tpu.dynamic_rotate %388 by %c16_i32_318 dim 1 : vector<8x256xf32>, i32 -> vector<8x256xf32>
    %c16_i32_319 = arith.constant 16 : i32
    %432 = vector.broadcast %c16_i32_319 : i32 to vector<8x256xi32>
    %433 = arith.cmpi sge, %16, %432 : vector<8x256xi32>
    %cst_320 = arith.constant 0.000000e+00 : f32
    %434 = vector.broadcast %cst_320 : f32 to vector<8x256xf32>
    %435 = arith.select %433, %431, %434 : vector<8x256xi1>, vector<8x256xf32>
    %c56_321 = arith.constant 56 : index
    %c0_322 = arith.constant 0 : index
    %436 = vector.load %arg6[%c56_321, %c0_322] : memref<104x256xf32, #tpu.memory_space<vmem>>, vector<8x256xf32>
    tpu.vector_store %arg6[%c56_321, %c0_322], %435 {strides = array<i32>} : memref<104x256xf32, #tpu.memory_space<vmem>>, vector<8x256xf32>,
    %c12_i32_323 = arith.constant 12 : i32
    %437 = tpu.dynamic_rotate %388 by %c12_i32_323 dim 1 : vector<8x256xf32>, i32 -> vector<8x256xf32>
    %c12_i32_324 = arith.constant 12 : i32
    %438 = vector.broadcast %c12_i32_324 : i32 to vector<8x256xi32>
    %439 = arith.cmpi sge, %16, %438 : vector<8x256xi32>
    %cst_325 = arith.constant 0.000000e+00 : f32
    %440 = vector.broadcast %cst_325 : f32 to vector<8x256xf32>
    %441 = arith.select %439, %437, %440 : vector<8x256xi1>, vector<8x256xf32>
    %c64_326 = arith.constant 64 : index
    %c0_327 = arith.constant 0 : index
    %442 = vector.load %arg6[%c64_326, %c0_327] : memref<104x256xf32, #tpu.memory_space<vmem>>, vector<8x256xf32>
    tpu.vector_store %arg6[%c64_326, %c0_327], %441 {strides = array<i32>} : memref<104x256xf32, #tpu.memory_space<vmem>>, vector<8x256xf32>,
    %c8_i32_328 = arith.constant 8 : i32
    %443 = tpu.dynamic_rotate %388 by %c8_i32_328 dim 1 : vector<8x256xf32>, i32 -> vector<8x256xf32>
    %c8_i32_329 = arith.constant 8 : i32
    %444 = vector.broadcast %c8_i32_329 : i32 to vector<8x256xi32>
    %445 = arith.cmpi sge, %16, %444 : vector<8x256xi32>
    %cst_330 = arith.constant 0.000000e+00 : f32
    %446 = vector.broadcast %cst_330 : f32 to vector<8x256xf32>
    %447 = arith.select %445, %443, %446 : vector<8x256xi1>, vector<8x256xf32>
    %c72_331 = arith.constant 72 : index
    %c0_332 = arith.constant 0 : index
    %448 = vector.load %arg6[%c72_331, %c0_332] : memref<104x256xf32, #tpu.memory_space<vmem>>, vector<8x256xf32>
    tpu.vector_store %arg6[%c72_331, %c0_332], %447 {strides = array<i32>} : memref<104x256xf32, #tpu.memory_space<vmem>>, vector<8x256xf32>,
    %c4_i32_333 = arith.constant 4 : i32
    %449 = tpu.dynamic_rotate %388 by %c4_i32_333 dim 1 : vector<8x256xf32>, i32 -> vector<8x256xf32>
    %c4_i32_334 = arith.constant 4 : i32
    %450 = vector.broadcast %c4_i32_334 : i32 to vector<8x256xi32>
    %451 = arith.cmpi sge, %16, %450 : vector<8x256xi32>
    %cst_335 = arith.constant 0.000000e+00 : f32
    %452 = vector.broadcast %cst_335 : f32 to vector<8x256xf32>
    %453 = arith.select %451, %449, %452 : vector<8x256xi1>, vector<8x256xf32>
    %c80_336 = arith.constant 80 : index
    %c0_337 = arith.constant 0 : index
    %454 = vector.load %arg6[%c80_336, %c0_337] : memref<104x256xf32, #tpu.memory_space<vmem>>, vector<8x256xf32>
    tpu.vector_store %arg6[%c80_336, %c0_337], %453 {strides = array<i32>} : memref<104x256xf32, #tpu.memory_space<vmem>>, vector<8x256xf32>,
    %c88_338 = arith.constant 88 : index
    %c0_339 = arith.constant 0 : index
    %455 = vector.load %arg6[%c88_338, %c0_339] : memref<104x256xf32, #tpu.memory_space<vmem>>, vector<8x256xf32>
    tpu.vector_store %arg6[%c88_338, %c0_339], %388 {strides = array<i32>} : memref<104x256xf32, #tpu.memory_space<vmem>>, vector<8x256xf32>,
    %c4 = arith.constant 4 : index
    %c0_340 = arith.constant 0 : index
    %c0_341 = arith.constant 0 : index
    %456 = vector.load %arg3[%c4, %c0_340, %c0_341] : memref<5x8x104xf32, #tpu.memory_space<vmem>>, vector<1x8x104xf32>
    %457 = vector.shape_cast %456 : vector<1x8x104xf32> to vector<8x104xf32>
    %c0_342 = arith.constant 0 : index
    %c0_343 = arith.constant 0 : index
    %458 = vector.load %arg6[%c0_342, %c0_343] : memref<104x256xf32, #tpu.memory_space<vmem>>, vector<104x256xf32>
    %cst_344 = arith.constant dense<0.000000e+00> : vector<8x256xf32>
    %459 = tpu.matmul %457, %458, %cst_344 {dimension_numbers = #tpu.dot_dimension_numbers<[1], [0], [0], [1], [0, 0, 1, 1], [], []>} : vector<8x104xf32>, vector<104x256xf32>, vector<8x256xf32> -> vector<8x256xf32>
    %460 = math.tanh %459 : vector<8x256xf32>
    %461 = arith.addf %460, %316 : vector<8x256xf32>
    %462 = math.tanh %461 : vector<8x256xf32>
    %c0_345 = arith.constant 0 : index
    %c0_346 = arith.constant 0 : index
    %463 = vector.load %arg4[%c0_345, %c0_346] : memref<8x16xf32, #tpu.memory_space<vmem>>, vector<8x16xf32>
    %464 = vector.extract_strided_slice %463 {offsets = [0, 0], sizes = [8, 8], strides = [1, 1]} : vector<8x16xf32> to vector<8x8xf32>
    %cst_347 = arith.constant dense<0.000000e+00> : vector<8x256xf32>
    %465 = tpu.matmul %464, %462, %cst_347 {dimension_numbers = #tpu.dot_dimension_numbers<[1], [0], [0], [1], [0, 0, 1, 1], [], []>} : vector<8x8xf32>, vector<8x256xf32>, vector<8x256xf32> -> vector<8x256xf32>
    %466 = vector.extract_strided_slice %465 {offsets = [0, 0], sizes = [1, 256], strides = [1, 1]} : vector<8x256xf32> to vector<1x256xf32>
    %467 = vector.extract_strided_slice %463 {offsets = [0, 8], sizes = [1, 1], strides = [1, 1]} : vector<8x16xf32> to vector<1x1xf32>
    %468 = vector.broadcast %467 : vector<1x1xf32> to vector<1x256xf32>
    %469 = arith.addf %466, %468 : vector<1x256xf32>
    %c0_348 = arith.constant 0 : index
    %c0_349 = arith.constant 0 : index
    %470 = vector.load %arg5[%c0_348, %c0_349] : memref<1x256xf32, #tpu.memory_space<vmem>>, vector<1x256xf32>
    tpu.vector_store %arg5[%c0_348, %c0_349], %469 {strides = array<i32>} : memref<1x256xf32, #tpu.memory_space<vmem>>, vector<1x256xf32>,
    return
  }
  func.func @transform_0(%arg0: i32) -> (i32, i32) {
    %c0_i32 = arith.constant 0 : i32
    %c0_i32_0 = arith.constant 0 : i32
    return %c0_i32, %arg0 : i32, i32
  }
  func.func @transform_1(%arg0: i32) -> (i32, i32) {
    %c0_i32 = arith.constant 0 : i32
    %c0_i32_0 = arith.constant 0 : i32
    %c0_i32_1 = arith.constant 0 : i32
    return %c0_i32, %c0_i32_0 : i32, i32
  }
  func.func @transform_2(%arg0: i32) -> (i32, i32, i32) {
    %c0_i32 = arith.constant 0 : i32
    %c0_i32_0 = arith.constant 0 : i32
    %c0_i32_1 = arith.constant 0 : i32
    %c0_i32_2 = arith.constant 0 : i32
    return %c0_i32, %c0_i32_0, %c0_i32_1 : i32, i32, i32
  }
  func.func @transform_3(%arg0: i32) -> (i32, i32) {
    %c0_i32 = arith.constant 0 : i32
    %c0_i32_0 = arith.constant 0 : i32
    %c0_i32_1 = arith.constant 0 : i32
    return %c0_i32, %c0_i32_0 : i32, i32
  }
  func.func @transform_4(%arg0: i32) -> (i32, i32) {
    %c0_i32 = arith.constant 0 : i32
    %c0_i32_0 = arith.constant 0 : i32
    return %c0_i32, %arg0 : i32, i32
  }
}

</mosaic_0001>

<llo_original>
// kernel: tpu_custom_call.1
$region0: #{tpu_custom_call.1}
  #allocation0 [shape = 'u32[]', space=smem, size = 0x4, offset = 0x4, fixed_abs, tag = 'smem constant byte address 0x4 - core index']
  #allocation1 [shape = 'u32[144,128]{1,0:T(1,128)}', space=vmem, size = 0x12000, scoped, tag = 'internal scratch']
  #allocation2 [shape = 'f32[104,256]{1,0:T(8,128)}', space=vmem, size = 0x1a000, scoped, tag = 'scratch operand']
  %s0 = inlined_call_operand.hbm [shape: f32[8,512], index: 0, kind: input, shape index: {}]
  %s1 = inlined_call_operand.hbm [shape: f32[16,104], index: 1, kind: input, shape index: {}]
  %s2 = inlined_call_operand.hbm [shape: f32[5,8,104], index: 2, kind: input, shape index: {}]
  %s3 = inlined_call_operand.vmem [shape: f32[8,16], index: 3, kind: input, shape index: {}]
  %s4 = inlined_call_operand.hbm [shape: f32[1,512], index: 4, kind: output, shape index: {}]
  %s5 = sld [smem:[#allocation0]]
  $region61: #{tpu_custom_call.1} parent=0
    _
  %s7 = ssub.s32 1, %s5
  %s8 = scalar_select 0, %s7, %s5
  $region1: #{tpu_custom_call.1} parent=0
    #allocation3 [shape = 'u8[16384]{0}', space=vmem, size = 0x4000, scoped, tag = 'input window, operand 0']
    #allocation4 [shape = 's32[2]{0}', space=sflag, size = 0x8, scoped, tag = 'scoped memory for tpu_custom_call.1']
    #allocation5 [shape = 's32[2]{0}', space=sflag, size = 0x8, scoped, tag = 'scoped memory for tpu_custom_call.1']
    #allocation6 [shape = 'u8[8192]{0}', space=vmem, size = 0x2000, scoped, tag = 'input window, operand 1, single buffered']
    #allocation7 [shape = 's32[1]{0}', space=sflag, size = 0x4, scoped, tag = 'scoped memory for tpu_custom_call.1']
    #allocation8 [shape = 'u8[20480]{0}', space=vmem, size = 0x5000, scoped, tag = 'input window, operand 2, single buffered']
    #allocation9 [shape = 'u8[2048]{0}', space=vmem, size = 0x800, scoped, tag = 'output window, operand 0']
    %9 = vsyncpa [#allocation4], 0
    %s10 = scalar_lea.sflag [#allocation4], 1
    %11 = vsyncpa %s10, 0
    %12 = vsyncpa [#allocation7], 0
    %13 = vsyncpa [#allocation5], 0
    %s14 = scalar_lea.sflag [#allocation5], 1
    %15 = vsyncpa %s14, 0
    loop: start=0, step=1, limit=4
    $region2: #{tpu_custom_call.1} parent=1 // loop_pre_header
      _
    $region3: #{tpu_custom_call.1} parent=1 // loop_header
      %s17 = sphi 0, %s21
      %p18 = scmp.ge.s32.totalorder %s17, 4
      %s27 = sphi 0, %s29
      %s30 = sphi 0, %s27
      %s31 = sphi 0, %s30
      %s47 = sphi 0, %s31
      %s51 = sphi 0, %s51
      %s53 = sphi 0, %s51
      %s54 = sphi 0, %s53
      %s68 = sphi 0, %s54
      %s72 = sphi 0, %s72
      %s74 = sphi 0, %s72
      %s75 = sphi 0, %s74
      %s89 = sphi 0, %s75
      %s93 = sphi 0, %s93
      %s95 = sphi 0, %s93
      %s96 = sphi 0, %s95
      %s110 = sphi 0, %s96
      %s116 = sphi 0, %s118
      %s119 = sphi 0, %s116
      %s120 = sphi 0, %s119
      %s136 = sphi 0, %s120
    $region4: #{tpu_custom_call.1} parent=1 // loop_header_branch
      %20 = sbr.rel (%p18) target = $region8
    $region5: #{tpu_custom_call.1} parent=1 // loop_body
      %s22 = ssub.s32 %s17, 1
      %s23 = ssub.s32 %s17, 2
      %s24 = sadd.s32 %s17, 1
      %s25 = ssub.s32 %s17, %s24
      %p26 = scmp.eq.s32.totalorder %s25, 0
      %s28 = sadd.s32 %s27, 1
      %s29 = scalar_select %p26, %s27, %s28
      %p32 = pneg %p26
      %p33 = scmp.eq.s32.totalorder %s17, 1
      %p34 = por %p32, %p33
      %p35 = scmp.ne.s32.totalorder %s27, %s30
      %p36 = scmp.eq.s32.totalorder %s17, 0
      %p37 = por %p35, %p36
      %p38 = scmp.ne.s32.totalorder %s27, %s30
      %p39 = scmp.eq.s32.totalorder %s22, 1
      %p40 = por %p38, %p39
      %p41 = scmp.ne.s32.totalorder %s30, %s31
      %p42 = scmp.eq.s32.totalorder %s22, 0
      %p43 = por %p41, %p42
      %p44 = scmp.ne.s32.totalorder %s30, %s31
      %p45 = scmp.eq.s32.totalorder %s23, 1
      %p46 = por %p44, %p45
      %p48 = scmp.ne.s32.totalorder %s31, %s47
      %p49 = scmp.eq.s32.totalorder %s23, 0
      %p50 = por %p48, %p49
      %s52 = sadd.s32 %s51, 1
      %p55 = scmp.eq.s32.totalorder %s17, 1
      %p56 = scmp.ne.s32.totalorder %s51, %s53
      %p57 = scmp.eq.s32.totalorder %s17, 0
      %p58 = por %p56, %p57
      %p59 = scmp.ne.s32.totalorder %s51, %s53
      %p60 = scmp.eq.s32.totalorder %s22, 1
      %p61 = por %p59, %p60
      %p62 = scmp.ne.s32.totalorder %s53, %s54
      %p63 = scmp.eq.s32.totalorder %s22, 0
      %p64 = por %p62, %p63
      %p65 = scmp.ne.s32.totalorder %s53, %s54
      %p66 = scmp.eq.s32.totalorder %s23, 1
      %p67 = por %p65, %p66
      %p69 = scmp.ne.s32.totalorder %s54, %s68
      %p70 = scmp.eq.s32.totalorder %s23, 0
      %p71 = por %p69, %p70
      %s73 = sadd.s32 %s72, 1
      %p76 = scmp.eq.s32.totalorder %s17, 1
      %p77 = scmp.ne.s32.totalorder %s72, %s74
      %p78 = scmp.eq.s32.totalorder %s17, 0
      %p79 = por %p77, %p78
      %p80 = scmp.ne.s32.totalorder %s72, %s74
      %p81 = scmp.eq.s32.totalorder %s22, 1
      %p82 = por %p80, %p81
      %p83 = scmp.ne.s32.totalorder %s74, %s75
      %p84 = scmp.eq.s32.totalorder %s22, 0
      %p85 = por %p83, %p84
      %p86 = scmp.ne.s32.totalorder %s74, %s75
      %p87 = scmp.eq.s32.totalorder %s23, 1
      %p88 = por %p86, %p87
      %p90 = scmp.ne.s32.totalorder %s75, %s89
      %p91 = scmp.eq.s32.totalorder %s23, 0
      %p92 = por %p90, %p91
      %s94 = sadd.s32 %s93, 1
      %p97 = scmp.eq.s32.totalorder %s17, 1
      %p98 = scmp.ne.s32.totalorder %s93, %s95
      %p99 = scmp.eq.s32.totalorder %s17, 0
      %p100 = por %p98, %p99
      %p101 = scmp.ne.s32.totalorder %s93, %s95
      %p102 = scmp.eq.s32.totalorder %s22, 1
      %p103 = por %p101, %p102
      %p104 = scmp.ne.s32.totalorder %s95, %s96
      %p105 = scmp.eq.s32.totalorder %s22, 0
      %p106 = por %p104, %p105
      %p107 = scmp.ne.s32.totalorder %s95, %s96
      %p108 = scmp.eq.s32.totalorder %s23, 1
      %p109 = por %p107, %p108
      %p111 = scmp.ne.s32.totalorder %s96, %s110
      %p112 = scmp.eq.s32.totalorder %s23, 0
      %p113 = por %p111, %p112
      %s114 = ssub.s32 %s17, %s24
      %p115 = scmp.eq.s32.totalorder %s114, 0
      %s117 = sadd.s32 %s116, 1
      %s118 = scalar_select %p115, %s116, %s117
      %p121 = pneg %p115
      %p122 = scmp.eq.s32.totalorder %s17, 1
      %p123 = por %p121, %p122
      %p124 = scmp.ne.s32.totalorder %s116, %s119
      %p125 = scmp.eq.s32.totalorder %s17, 0
      %p126 = por %p124, %p125
      %p127 = scmp.ne.s32.totalorder %s116, %s119
      %p128 = scmp.eq.s32.totalorder %s22, 1
      %p129 = por %p127, %p128
      %p130 = scmp.ne.s32.totalorder %s119, %s120
      %p131 = scmp.eq.s32.totalorder %s22, 0
      %p132 = por %p130, %p131
      %p133 = scmp.ne.s32.totalorder %s119, %s120
      %p134 = scmp.eq.s32.totalorder %s23, 1
      %p135 = por %p133, %p134
      %p137 = scmp.ne.s32.totalorder %s120, %s136
      %p138 = scmp.eq.s32.totalorder %s23, 0
      %p139 = por %p137, %p138
      %p140 = scmp.le.s32.totalorder 1, %s17
      %p141 = scmp.lt.s32.totalorder %s17, 3
      %p142 = pnand %p140, %p141
      %p143 = pneg %p142
      // Predicated region
      $region9: #{tpu_custom_call.1} parent=5 // pred_check
        _
      $region10: #{tpu_custom_call.1} parent=5 // pred_check_branch
        %145 = sbr.rel (%p142) target = $region12
      $region11: #{tpu_custom_call.1} parent=5 // pred_region
        %s146 = ssub.s32 %s17, 1
        // Predicated region
        $region13: #{tpu_custom_call.1} parent=11 // pred_check
          %p147 = pneg %p64
        $region14: #{tpu_custom_call.1} parent=11 // pred_check_branch
          %149 = sbr.rel (%p147) target = $region16
        $region15: #{tpu_custom_call.1} parent=11 // pred_region
          %s151 = ssub.s32 256, 256
          %152 = vsyncadd [#allocation7], %s151
          %s153 = sshll.u32 [#allocation6], 4
          %s154 = int_to_ptr.vmem [resolvable:$true] %s153
          %159 = dma.hbm_to_vmem [thread:$0]  %s1, 256, %s154, [#allocation7], 128, 128, 8
        $region16: #{tpu_custom_call.1} parent=11 // pred_fallthru
          _
        // Predicated region
        $region17: #{tpu_custom_call.1} parent=11 // pred_check
          %p160 = pneg %p85
        $region18: #{tpu_custom_call.1} parent=11 // pred_check_branch
          %162 = sbr.rel (%p160) target = $region20
        $region19: #{tpu_custom_call.1} parent=11 // pred_region
          %s164 = ssub.s32 640, 640
          %165 = vsyncadd [#allocation7], %s164
          %s166 = sshll.u32 [#allocation8], 4
          %s167 = int_to_ptr.vmem [resolvable:$true] %s166
          %172 = dma.hbm_to_vmem [thread:$0]  %s2, 640, %s167, [#allocation7], 128, 128, 8
        $region20: #{tpu_custom_call.1} parent=11 // pred_fallthru
          _
        // Predicated region
        $region21: #{tpu_custom_call.1} parent=11 // pred_check
          %p173 = pneg %p106
        $region22: #{tpu_custom_call.1} parent=11 // pred_check_branch
          %175 = sbr.rel (%p173) target = $region24
        $region23: #{tpu_custom_call.1} parent=11 // pred_region
          _
        $region24: #{tpu_custom_call.1} parent=11 // pred_fallthru
          _
      $region12: #{tpu_custom_call.1} parent=5 // pred_fallthru
        _
      %p176 = scmp.lt.s32.totalorder %s17, 2
      // Predicated region
      $region25: #{tpu_custom_call.1} parent=5 // pred_check
        %p177 = pneg %p176
      $region26: #{tpu_custom_call.1} parent=5 // pred_check_branch
        %179 = sbr.rel (%p177) target = $region28
      $region27: #{tpu_custom_call.1} parent=5 // pred_region
        // Predicated region
        $region29: #{tpu_custom_call.1} parent=27 // pred_check
          %p180 = pneg %p37
        $region30: #{tpu_custom_call.1} parent=27 // pred_check_branch
          %182 = sbr.rel (%p180) target = $region32
        $region31: #{tpu_custom_call.1} parent=27 // pred_region
          %s183 = sand.u32 %s27, 1
          %s184 = scalar_lea.sflag [#allocation4], %s183
          %s185 = sand.u32 %s27, 1
          %s186 = smul.addr %s185, 16
          %s187 = scalar_lea.vmem [#allocation3], %s186
          %s188 = smul.u32 2, %s17
          %s190 = ssub.s32 256, 256
          %191 = vsyncadd %s184, %s190
          %s192 = smul.addr %s188, 128
          %s193 = scalar_lea.hbm %s0, %s192
          %s195 = sshll.u32 %s187, 4
          %s196 = int_to_ptr.vmem [resolvable:$true] %s195
          %198 = dma.hbm_to_vmem [thread:$0]  %s193, 256, %s196, %s184
        $region32: #{tpu_custom_call.1} parent=27 // pred_fallthru
          _
      $region28: #{tpu_custom_call.1} parent=5 // pred_fallthru
        _
      %p199 = scmp.le.s32.totalorder 1, %s17
      %p200 = scmp.lt.s32.totalorder %s17, 3
      %p201 = pnand %p199, %p200
      %p202 = pneg %p201
      // Predicated region
      $region33: #{tpu_custom_call.1} parent=5 // pred_check
        _
      $region34: #{tpu_custom_call.1} parent=5 // pred_check_branch
        %204 = sbr.rel (%p201) target = $region36
      $region35: #{tpu_custom_call.1} parent=5 // pred_region
        %s205 = ssub.s32 %s17, 1
        %s206 = sand.u32 %s30, 1
        %s207 = scalar_lea.sflag [#allocation4], %s206
        %s208 = sand.u32 %s30, 1
        %s209 = smul.addr %s208, 16
        %s210 = scalar_lea.vmem [#allocation3], %s209
        // Predicated region
        $region37: #{tpu_custom_call.1} parent=35 // pred_check
          %p211 = pneg %p43
        $region38: #{tpu_custom_call.1} parent=35 // pred_check_branch
          %213 = sbr.rel (%p211) target = $region40
        $region39: #{tpu_custom_call.1} parent=35 // pred_region
          %214 = dma.done %s207, 256
        $region40: #{tpu_custom_call.1} parent=35 // pred_fallthru
          _
        // Predicated region
        $region41: #{tpu_custom_call.1} parent=35 // pred_check
          %p215 = pneg %p64
        $region42: #{tpu_custom_call.1} parent=35 // pred_check_branch
          %217 = sbr.rel (%p215) target = $region44
        $region43: #{tpu_custom_call.1} parent=35 // pred_region
          %218 = dma.done [#allocation7], 256
        $region44: #{tpu_custom_call.1} parent=35 // pred_fallthru
          _
        // Predicated region
        $region45: #{tpu_custom_call.1} parent=35 // pred_check
          %p219 = pneg %p85
        $region46: #{tpu_custom_call.1} parent=35 // pred_check_branch
          %221 = sbr.rel (%p219) target = $region48
        $region47: #{tpu_custom_call.1} parent=35 // pred_region
          %222 = dma.done [#allocation7], 640
        $region48: #{tpu_custom_call.1} parent=35 // pred_fallthru
          _
        %s223 = sand.u32 %s30, 1
        %s224 = scalar_lea.sflag [#allocation4], %s223
        %s225 = sand.u32 %s30, 1
        %s226 = smul.addr %s225, 16
        %s227 = scalar_lea.vmem [#allocation3], %s226
        %p228 = pneg %p43
        %p229 = pneg %p40
        %p230 = pneg %p64
        %p231 = pneg %p61
        %p232 = pneg %p85
        %p233 = pneg %p82
        %p234 = pneg %p106
        %p235 = pneg %p103
        %p236 = pneg %p132
        %p237 = pneg %p129
        %s238 = sand.u32 %s119, 1
        %s239 = scalar_lea.sflag [#allocation5], %s238
        %s240 = sand.u32 %s119, 1
        %s241 = smul.addr %s240, 2
        %s242 = scalar_lea.vmem [#allocation9], %s241
        %s243 = smul.u32 2, %s22
        %s244 = smul.u32 2, %s22
        %v245 = vlaneseq
        %v246 = vand.u32 %v245, 127
        %v247 = vadd.s32 %v246, 128
        %vm248 = vcmp.lt.s32.totalorder %v246, 0
        %v249 = vsub.s32 0, %v246
        %v250 = vsel %vm248, %v249, %v246
        %v251 = vshrl.u32 %v250, 7
        %v252 = vand.u32 %v250, 127
        %v253 = vsub.s32 0, %v252
        %v254 = vsel %vm248, %v253, %v252
        %vm255 = vcmp.lt.s32.totalorder %v247, 0
        %v256 = vsub.s32 0, %v247
        %v257 = vsel %vm255, %v256, %v247
        %v258 = vshrl.u32 %v257, 7
        %v259 = vand.u32 %v257, 127
        %v260 = vsub.s32 0, %v259
        %v261 = vsel %vm255, %v260, %v259
        %vm262 = vcmp.ne.s32.totalorder %v254, 0
        %vm263 = vcmp.ne.s32.totalorder %v261, 0
        %vm264 = vcmp.lt.s32.totalorder %v254, 0
        %vm265 = vcmp.lt.s32.totalorder %v261, 0
        %vm266 = vmand %vm264, %vm262
        %vm267 = vmand %vm265, %vm263
        %v268 = vadd.s32 %v254, 128
        %v269 = vadd.s32 %v261, 128
        %v270 = vsel %vm266, %v268, %v254
        %v271 = vsel %vm267, %v269, %v261
        %v272 = vlaneseq
        %v273 = vshrl.u32 %v272, 7
        %vm274 = vcmp.eq.s32.totalorder %v273, 0
        %v275 = vsel %vm274, 1, 0
        %v276 = vcvt.s32.f32 %v275
        %277 = vst [vmem:[#allocation2 + $0xc0] sm:$0xff] %v276
        %278 = vst [vmem:[#allocation2 + $0xc8] sm:$0xff] %v276
        %v279 = vld [vmem:[%s210] sm:$0xff]
        %v280 = vld [vmem:[%s210 + $0x8] sm:$0xff]
        %281 = vrot.lane.b32.xlu0 %v279, 11
        %v282 = vpop.permute.xlu0 %281
        %283 = vrot.lane.b32.xlu0 %v280, 11
        %v284 = vpop.permute.xlu0 %283
        %vm285 = vcmp.lt.s32.totalorder %v246, 11
        %v286 = vsel %vm285, %v282, %v284
        %v287 = vsel %vm285, %v284, %v282
        %vm288 = vcmp.ge.s32.totalorder %v270, 11
        %vm289 = vcmp.ge.s32.totalorder %v271, 11
        %v290 = vsel %vm288, %v287, 0.0
        %v291 = vsel %vm289, %v286, 0.0
        %292 = vst [vmem:[#allocation2] sm:$0xff] %v290
        %293 = vst [vmem:[#allocation2 + $0x8] sm:$0xff] %v291
        %294 = vrot.lane.b32.xlu0 %v279, 10
        %v295 = vpop.permute.xlu0 %294
        %296 = vrot.lane.b32.xlu0 %v280, 10
        %v297 = vpop.permute.xlu0 %296
        %vm298 = vcmp.lt.s32.totalorder %v246, 10
        %v299 = vsel %vm298, %v295, %v297
        %v300 = vsel %vm298, %v297, %v295
        %vm301 = vcmp.ge.s32.totalorder %v270, 10
        %vm302 = vcmp.ge.s32.totalorder %v271, 10
        %v303 = vsel %vm301, %v300, 0.0
        %v304 = vsel %vm302, %v299, 0.0
        %305 = vst [vmem:[#allocation2 + $0x10] sm:$0xff] %v303
        %306 = vst [vmem:[#allocation2 + $0x18] sm:$0xff] %v304
        %307 = vrot.lane.b32.xlu0 %v279, 9
        %v308 = vpop.permute.xlu0 %307
        %309 = vrot.lane.b32.xlu0 %v280, 9
        %v310 = vpop.permute.xlu0 %309
        %vm311 = vcmp.lt.s32.totalorder %v246, 9
        %v312 = vsel %vm311, %v308, %v310
        %v313 = vsel %vm311, %v310, %v308
        %vm314 = vcmp.ge.s32.totalorder %v270, 9
        %vm315 = vcmp.ge.s32.totalorder %v271, 9
        %v316 = vsel %vm314, %v313, 0.0
        %v317 = vsel %vm315, %v312, 0.0
        %318 = vst [vmem:[#allocation2 + $0x20] sm:$0xff] %v316
        %319 = vst [vmem:[#allocation2 + $0x28] sm:$0xff] %v317
        %320 = vrot.lane.b32.xlu0 %v279, 8
        %v321 = vpop.permute.xlu0 %320
        %322 = vrot.lane.b32.xlu0 %v280, 8
        %v323 = vpop.permute.xlu0 %322
        %vm324 = vcmp.lt.s32.totalorder %v246, 8
        %v325 = vsel %vm324, %v321, %v323
        %v326 = vsel %vm324, %v323, %v321
        %vm327 = vcmp.ge.s32.totalorder %v270, 8
        %vm328 = vcmp.ge.s32.totalorder %v271, 8
        %v329 = vsel %vm327, %v326, 0.0
        %v330 = vsel %vm328, %v325, 0.0
        %331 = vst [vmem:[#allocation2 + $0x30] sm:$0xff] %v329
        %332 = vst [vmem:[#allocation2 + $0x38] sm:$0xff] %v330
        %333 = vrot.lane.b32.xlu0 %v279, 7
        %v334 = vpop.permute.xlu0 %333
        %335 = vrot.lane.b32.xlu0 %v280, 7
        %v336 = vpop.permute.xlu0 %335
        %vm337 = vcmp.lt.s32.totalorder %v246, 7
        %v338 = vsel %vm337, %v334, %v336
        %v339 = vsel %vm337, %v336, %v334
        %vm340 = vcmp.ge.s32.totalorder %v270, 7
        %vm341 = vcmp.ge.s32.totalorder %v271, 7
        %v342 = vsel %vm340, %v339, 0.0
        %v343 = vsel %vm341, %v338, 0.0
        %344 = vst [vmem:[#allocation2 + $0x40] sm:$0xff] %v342
        %345 = vst [vmem:[#allocation2 + $0x48] sm:$0xff] %v343
        %346 = vrot.lane.b32.xlu0 %v279, 6
        %v347 = vpop.permute.xlu0 %346
        %348 = vrot.lane.b32.xlu0 %v280, 6
        %v349 = vpop.permute.xlu0 %348
        %vm350 = vcmp.lt.s32.totalorder %v246, 6
        %v351 = vsel %vm350, %v347, %v349
        %v352 = vsel %vm350, %v349, %v347
        %vm353 = vcmp.ge.s32.totalorder %v270, 6
        %vm354 = vcmp.ge.s32.totalorder %v271, 6
        %v355 = vsel %vm353, %v352, 0.0
        %v356 = vsel %vm354, %v351, 0.0
        %357 = vst [vmem:[#allocation2 + $0x50] sm:$0xff] %v355
        %358 = vst [vmem:[#allocation2 + $0x58] sm:$0xff] %v356
        %359 = vrot.lane.b32.xlu0 %v279, 5
        %v360 = vpop.permute.xlu0 %359
        %361 = vrot.lane.b32.xlu0 %v280, 5
        %v362 = vpop.permute.xlu0 %361
        %vm363 = vcmp.lt.s32.totalorder %v246, 5
        %v364 = vsel %vm363, %v360, %v362
        %v365 = vsel %vm363, %v362, %v360
        %vm366 = vcmp.ge.s32.totalorder %v270, 5
        %vm367 = vcmp.ge.s32.totalorder %v271, 5
        %v368 = vsel %vm366, %v365, 0.0
        %v369 = vsel %vm367, %v364, 0.0
        %370 = vst [vmem:[#allocation2 + $0x60] sm:$0xff] %v368
        %371 = vst [vmem:[#allocation2 + $0x68] sm:$0xff] %v369
        %372 = vrot.lane.b32.xlu0 %v279, 4
        %v373 = vpop.permute.xlu0 %372
        %374 = vrot.lane.b32.xlu0 %v280, 4
        %v375 = vpop.permute.xlu0 %374
        %vm376 = vcmp.lt.s32.totalorder %v246, 4
        %v377 = vsel %vm376, %v373, %v375
        %v378 = vsel %vm376, %v375, %v373
        %vm379 = vcmp.ge.s32.totalorder %v270, 4
        %vm380 = vcmp.ge.s32.totalorder %v271, 4
        %v381 = vsel %vm379, %v378, 0.0
        %v382 = vsel %vm380, %v377, 0.0
        %383 = vst [vmem:[#allocation2 + $0x70] sm:$0xff] %v381
        %384 = vst [vmem:[#allocation2 + $0x78] sm:$0xff] %v382
        %385 = vrot.lane.b32.xlu0 %v279, 3
        %v386 = vpop.permute.xlu0 %385
        %387 = vrot.lane.b32.xlu0 %v280, 3
        %v388 = vpop.permute.xlu0 %387
        %vm389 = vcmp.lt.s32.totalorder %v246, 3
        %v390 = vsel %vm389, %v386, %v388
        %v391 = vsel %vm389, %v388, %v386
        %vm392 = vcmp.ge.s32.totalorder %v270, 3
        %vm393 = vcmp.ge.s32.totalorder %v271, 3
        %v394 = vsel %vm392, %v391, 0.0
        %v395 = vsel %vm393, %v390, 0.0
        %396 = vst [vmem:[#allocation2 + $0x80] sm:$0xff] %v394
        %397 = vst [vmem:[#allocation2 + $0x88] sm:$0xff] %v395
        %398 = vrot.lane.b32.xlu0 %v279, 2
        %v399 = vpop.permute.xlu0 %398
        %400 = vrot.lane.b32.xlu0 %v280, 2
        %v401 = vpop.permute.xlu0 %400
        %vm402 = vcmp.lt.s32.totalorder %v246, 2
        %v403 = vsel %vm402, %v399, %v401
        %v404 = vsel %vm402, %v401, %v399
        %vm405 = vcmp.ge.s32.totalorder %v270, 2
        %vm406 = vcmp.ge.s32.totalorder %v271, 2
        %v407 = vsel %vm405, %v404, 0.0
        %v408 = vsel %vm406, %v403, 0.0
        %409 = vst [vmem:[#allocation2 + $0x90] sm:$0xff] %v407
        %410 = vst [vmem:[#allocation2 + $0x98] sm:$0xff] %v408
        %411 = vrot.lane.b32.xlu0 %v279, 1
        %v412 = vpop.permute.xlu0 %411
        %413 = vrot.lane.b32.xlu0 %v280, 1
        %v414 = vpop.permute.xlu0 %413
        %vm415 = vcmp.lt.s32.totalorder %v246, 1
        %v416 = vsel %vm415, %v412, %v414
        %v417 = vsel %vm415, %v414, %v412
        %vm418 = vcmp.ge.s32.totalorder %v270, 1
        %vm419 = vcmp.ge.s32.totalorder %v271, 1
        %v420 = vsel %vm418, %v417, 0.0
        %v421 = vsel %vm419, %v416, 0.0
        %422 = vst [vmem:[#allocation2 + $0xa0] sm:$0xff] %v420
        %423 = vst [vmem:[#allocation2 + $0xa8] sm:$0xff] %v421
        %424 = vst [vmem:[#allocation2 + $0xb0] sm:$0xff] %v279
        %425 = vst [vmem:[#allocation2 + $0xb8] sm:$0xff] %v280
        %v426 = vld [vmem:[#allocation6] sm:$0xff]
        %v427 = vld [vmem:[#allocation6 + $0x8] sm:$0xff]
        %v428 = vld [vmem:[#allocation2] sm:$0xff]
        %v429 = vld [vmem:[#allocation2 + $0x8] sm:$0xff]
        %v430 = vld [vmem:[#allocation2 + $0x10] sm:$0xff]
        %v431 = vld [vmem:[#allocation2 + $0x18] sm:$0xff]
        %v432 = vld [vmem:[#allocation2 + $0x20] sm:$0xff]
        %v433 = vld [vmem:[#allocation2 + $0x28] sm:$0xff]
        %v434 = vld [vmem:[#allocation2 + $0x30] sm:$0xff]
        %v435 = vld [vmem:[#allocation2 + $0x38] sm:$0xff]
        %v436 = vld [vmem:[#allocation2 + $0x40] sm:$0xff]
        %v437 = vld [vmem:[#allocation2 + $0x48] sm:$0xff]
        %v438 = vld [vmem:[#allocation2 + $0x50] sm:$0xff]
        %v439 = vld [vmem:[#allocation2 + $0x58] sm:$0xff]
        %v440 = vld [vmem:[#allocation2 + $0x60] sm:$0xff]
        %v441 = vld [vmem:[#allocation2 + $0x68] sm:$0xff]
        %v442 = vld [vmem:[#allocation2 + $0x70] sm:$0xff]
        %v443 = vld [vmem:[#allocation2 + $0x78] sm:$0xff]
        %v444 = vld [vmem:[#allocation2 + $0x80] sm:$0xff]
        %v445 = vld [vmem:[#allocation2 + $0x88] sm:$0xff]
        %v446 = vld [vmem:[#allocation2 + $0x90] sm:$0xff]
        %v447 = vld [vmem:[#allocation2 + $0x98] sm:$0xff]
        %v448 = vld [vmem:[#allocation2 + $0xa0] sm:$0xff]
        %v449 = vld [vmem:[#allocation2 + $0xa8] sm:$0xff]
        %v450 = vld [vmem:[#allocation2 + $0xb0] sm:$0xff]
        %v451 = vld [vmem:[#allocation2 + $0xb8] sm:$0xff]
        %v452 = vld [vmem:[#allocation2 + $0xc0] sm:$0xff]
        %v453 = vld [vmem:[#allocation2 + $0xc8] sm:$0xff]
        %vm454 = vcmask 850944
        %v456 = vsel %vm454, %v426, 0
        %v459 = vsel %vm454, %v427, 0
        %461 = vmatprep.subr.mxu0 %v429
        %462 = vmatpush1.msra.mxu0 %v428
        %463 = vmatprep.subr.mxu0 %v431
        %464 = vmatpush1.msra.mxu0 %v430
        %465 = vmatprep.subr.mxu0 %v433
        %466 = vmatpush1.msra.mxu0 %v432
        %467 = vmatprep.subr.mxu0 %v435
        %468 = vmatpush1.msra.mxu0 %v434
        %469 = vmatprep.subr.mxu0 %v437
        %470 = vmatpush1.msra.mxu0 %v436
        %471 = vmatprep.subr.mxu0 %v439
        %472 = vmatpush1.msra.mxu0 %v438
        %473 = vmatprep.subr.mxu0 %v441
        %474 = vmatpush1.msra.mxu0 %v440
        %475 = vmatprep.subr.mxu0 %v443
        %476 = vmatpush1.msra.mxu0 %v442
        %477 = vmatprep.subr.mxu0 %v445
        %478 = vmatpush1.msra.mxu0 %v444
        %479 = vmatprep.subr.mxu0 %v447
        %480 = vmatpush1.msra.mxu0 %v446
        %481 = vmatprep.subr.mxu0 %v449
        %482 = vmatpush1.msra.mxu0 %v448
        %483 = vmatprep.subr.mxu0 %v451
        %484 = vmatpush1.msra.mxu0 %v450
        %485 = vmatprep.subr.mxu0 %v453
        %486 = vmatpush1.msra.mxu0 %v452
        %487 = vmatprep.subr.mxu0 0.0
        %488 = vmatpush1.msra.mxu0 0.0
        %489 = vmatprep.subr.mxu0 0.0
        %490 = vmatpush1.msra.mxu0 0.0
        %491 = vmatprep.subr.mxu0 0.0
        %492 = vmatpush1.msra.mxu0 0.0
        %493 = vmatprep.subr.mxu0 0.0
        %494 = vmatpush1.msra.mxu0 0.0
        %495 = vmatprep.subr.mxu0 0.0
        %496 = vmatpush1.msra.mxu0 0.0
        %497 = vmatprep.subr.mxu0 0.0
        %498 = vmatpush1.msra.mxu0 0.0
        %499 = vmatprep.subr.mxu0 0.0
        %500 = vmatpush1.msra.mxu0 0.0
        %501 = vmatprep.subr.mxu0 0.0
        %502 = vmatpush1.msra.mxu0 0.0
        %503 = vmatprep.subr.mxu0 0.0
        %504 = vmatpush1.msra.mxu0 0.0
        %505 = vmatprep.subr.mxu0 0.0
        %506 = vmatpush1.msra.mxu0 0.0
        %507 = vmatprep.subr.mxu0 0.0
        %508 = vmatpush1.msra.mxu0 0.0
        %509 = vmatprep.subr.mxu0 0.0
        %510 = vmatpush1.msra.mxu0 0.0
        %511 = vmatprep.subr.mxu0 0.0
        %512 = vmatpush1.msra.mxu0 0.0
        %513 = vmatprep.subr.mxu0 0.0
        %514 = vmatpush1.msra.mxu0 0.0
        %515 = vmatprep.subr.mxu0 0.0
        %516 = vmatpush1.msra.mxu0 0.0
        %517 = vmatprep.subr.mxu0 0.0
        %518 = vmatpush1.msra.mxu0 0.0
        %519 = vmatprep.subr.mxu0 0.0
        %520 = vmatpush1.msra.mxu0 0.0
        %521 = vmatprep.subr.mxu0 0.0
        %522 = vmatpush1.msra.mxu0 0.0
        %523 = vmatprep.subr.mxu0 0.0
        %524 = vmatpush1.msra.mxu0 0.0
        %525 = vmatprep.mubr.f32.mxu0 0.0
        %526 = vmatmul.mubr.f32.gmra.mrb[0].mxu0 %v456
        %v527 = vpop.f32.mrb[0].mxu0
        %v528 = vadd.f32 0.0, %v527
        %v529 = vpop.f32.mrb[0].mxu0
        %v530 = vadd.f32 0.0, %v529
        %531 = vmatprep.mubr.f32.mxu0 0.0
        %532 = vmatmul.mubr.f32.gmra.mrb[0].mxu0 %v459
        %v533 = vpop.f32.mrb[0].mxu0
        %v534 = vadd.f32 0.0, %v533
        %v535 = vpop.f32.mrb[0].mxu0
        %v536 = vadd.f32 0.0, %v535
        %537 = vdwg.mxu0
        %v538 = vtanh.pop %v528
        %v539 = vtanh.pop %v530
        %540 = vrot.lane.b32.xlu0 %v538, 11
        %v541 = vpop.permute.xlu0 %540
        %542 = vrot.lane.b32.xlu0 %v539, 11
        %v543 = vpop.permute.xlu0 %542
        %v544 = vsel %vm285, %v541, %v543
        %v545 = vsel %vm285, %v543, %v541
        %v546 = vsel %vm288, %v545, 0.0
        %v547 = vsel %vm289, %v544, 0.0
        %548 = vst [vmem:[#allocation2] sm:$0xff] %v546
        %549 = vst [vmem:[#allocation2 + $0x8] sm:$0xff] %v547
        %550 = vrot.lane.b32.xlu0 %v538, 10
        %v551 = vpop.permute.xlu0 %550
        %552 = vrot.lane.b32.xlu0 %v539, 10
        %v553 = vpop.permute.xlu0 %552
        %v554 = vsel %vm298, %v551, %v553
        %v555 = vsel %vm298, %v553, %v551
        %v556 = vsel %vm301, %v555, 0.0
        %v557 = vsel %vm302, %v554, 0.0
        %558 = vst [vmem:[#allocation2 + $0x10] sm:$0xff] %v556
        %559 = vst [vmem:[#allocation2 + $0x18] sm:$0xff] %v557
        %560 = vrot.lane.b32.xlu0 %v538, 9
        %v561 = vpop.permute.xlu0 %560
        %562 = vrot.lane.b32.xlu0 %v539, 9
        %v563 = vpop.permute.xlu0 %562
        %v564 = vsel %vm311, %v561, %v563
        %v565 = vsel %vm311, %v563, %v561
        %v566 = vsel %vm314, %v565, 0.0
        %v567 = vsel %vm315, %v564, 0.0
        %568 = vst [vmem:[#allocation2 + $0x20] sm:$0xff] %v566
        %569 = vst [vmem:[#allocation2 + $0x28] sm:$0xff] %v567
        %570 = vrot.lane.b32.xlu0 %v538, 8
        %v571 = vpop.permute.xlu0 %570
        %572 = vrot.lane.b32.xlu0 %v539, 8
        %v573 = vpop.permute.xlu0 %572
        %v574 = vsel %vm324, %v571, %v573
        %v575 = vsel %vm324, %v573, %v571
        %v576 = vsel %vm327, %v575, 0.0
        %v577 = vsel %vm328, %v574, 0.0
        %578 = vst [vmem:[#allocation2 + $0x30] sm:$0xff] %v576
        %579 = vst [vmem:[#allocation2 + $0x38] sm:$0xff] %v577
        %580 = vrot.lane.b32.xlu0 %v538, 7
        %v581 = vpop.permute.xlu0 %580
        %582 = vrot.lane.b32.xlu0 %v539, 7
        %v583 = vpop.permute.xlu0 %582
        %v584 = vsel %vm337, %v581, %v583
        %v585 = vsel %vm337, %v583, %v581
        %v586 = vsel %vm340, %v585, 0.0
        %v587 = vsel %vm341, %v584, 0.0
        %588 = vst [vmem:[#allocation2 + $0x40] sm:$0xff] %v586
        %589 = vst [vmem:[#allocation2 + $0x48] sm:$0xff] %v587
        %590 = vrot.lane.b32.xlu0 %v538, 6
        %v591 = vpop.permute.xlu0 %590
        %592 = vrot.lane.b32.xlu0 %v539, 6
        %v593 = vpop.permute.xlu0 %592
        %v594 = vsel %vm350, %v591, %v593
        %v595 = vsel %vm350, %v593, %v591
        %v596 = vsel %vm353, %v595, 0.0
        %v597 = vsel %vm354, %v594, 0.0
        %598 = vst [vmem:[#allocation2 + $0x50] sm:$0xff] %v596
        %599 = vst [vmem:[#allocation2 + $0x58] sm:$0xff] %v597
        %600 = vrot.lane.b32.xlu0 %v538, 5
        %v601 = vpop.permute.xlu0 %600
        %602 = vrot.lane.b32.xlu0 %v539, 5
        %v603 = vpop.permute.xlu0 %602
        %v604 = vsel %vm363, %v601, %v603
        %v605 = vsel %vm363, %v603, %v601
        %v606 = vsel %vm366, %v605, 0.0
        %v607 = vsel %vm367, %v604, 0.0
        %608 = vst [vmem:[#allocation2 + $0x60] sm:$0xff] %v606
        %609 = vst [vmem:[#allocation2 + $0x68] sm:$0xff] %v607
        %610 = vrot.lane.b32.xlu0 %v538, 4
        %v611 = vpop.permute.xlu0 %610
        %612 = vrot.lane.b32.xlu0 %v539, 4
        %v613 = vpop.permute.xlu0 %612
        %v614 = vsel %vm376, %v611, %v613
        %v615 = vsel %vm376, %v613, %v611
        %v616 = vsel %vm379, %v615, 0.0
        %v617 = vsel %vm380, %v614, 0.0
        %618 = vst [vmem:[#allocation2 + $0x70] sm:$0xff] %v616
        %619 = vst [vmem:[#allocation2 + $0x78] sm:$0xff] %v617
        %620 = vrot.lane.b32.xlu0 %v538, 3
        %v621 = vpop.permute.xlu0 %620
        %622 = vrot.lane.b32.xlu0 %v539, 3
        %v623 = vpop.permute.xlu0 %622
        %v624 = vsel %vm389, %v621, %v623
        %v625 = vsel %vm389, %v623, %v621
        %v626 = vsel %vm392, %v625, 0.0
        %v627 = vsel %vm393, %v624, 0.0
        %628 = vst [vmem:[#allocation2 + $0x80] sm:$0xff] %v626
        %629 = vst [vmem:[#allocation2 + $0x88] sm:$0xff] %v627
        %630 = vrot.lane.b32.xlu0 %v538, 2
        %v631 = vpop.permute.xlu0 %630
        %632 = vrot.lane.b32.xlu0 %v539, 2
        %v633 = vpop.permute.xlu0 %632
        %v634 = vsel %vm402, %v631, %v633
        %v635 = vsel %vm402, %v633, %v631
        %v636 = vsel %vm405, %v635, 0.0
        %v637 = vsel %vm406, %v634, 0.0
        %638 = vst [vmem:[#allocation2 + $0x90] sm:$0xff] %v636
        %639 = vst [vmem:[#allocation2 + $0x98] sm:$0xff] %v637
        %640 = vrot.lane.b32.xlu0 %v538, 1
        %v641 = vpop.permute.xlu0 %640
        %642 = vrot.lane.b32.xlu0 %v539, 1
        %v643 = vpop.permute.xlu0 %642
        %v644 = vsel %vm415, %v641, %v643
        %v645 = vsel %vm415, %v643, %v641
        %v646 = vsel %vm418, %v645, 0.0
        %v647 = vsel %vm419, %v644, 0.0
        %648 = vst [vmem:[#allocation2 + $0xa0] sm:$0xff] %v646
        %649 = vst [vmem:[#allocation2 + $0xa8] sm:$0xff] %v647
        %650 = vst [vmem:[#allocation2 + $0xb0] sm:$0xff] %v538
        %651 = vst [vmem:[#allocation2 + $0xb8] sm:$0xff] %v539
        %v652 = vld [vmem:[#allocation8] sm:$0xff]
        %v653 = vld [vmem:[#allocation2] sm:$0xff]
        %v654 = vld [vmem:[#allocation2 + $0x8] sm:$0xff]
        %v655 = vld [vmem:[#allocation2 + $0x10] sm:$0xff]
        %v656 = vld [vmem:[#allocation2 + $0x18] sm:$0xff]
        %v657 = vld [vmem:[#allocation2 + $0x20] sm:$0xff]
        %v658 = vld [vmem:[#allocation2 + $0x28] sm:$0xff]
        %v659 = vld [vmem:[#allocation2 + $0x30] sm:$0xff]
        %v660 = vld [vmem:[#allocation2 + $0x38] sm:$0xff]
        %v661 = vld [vmem:[#allocation2 + $0x40] sm:$0xff]
        %v662 = vld [vmem:[#allocation2 + $0x48] sm:$0xff]
        %v663 = vld [vmem:[#allocation2 + $0x50] sm:$0xff]
        %v664 = vld [vmem:[#allocation2 + $0x58] sm:$0xff]
        %v665 = vld [vmem:[#allocation2 + $0x60] sm:$0xff]
        %v666 = vld [vmem:[#allocation2 + $0x68] sm:$0xff]
        %v667 = vld [vmem:[#allocation2 + $0x70] sm:$0xff]
        %v668 = vld [vmem:[#allocation2 + $0x78] sm:$0xff]
        %v669 = vld [vmem:[#allocation2 + $0x80] sm:$0xff]
        %v670 = vld [vmem:[#allocation2 + $0x88] sm:$0xff]
        %v671 = vld [vmem:[#allocation2 + $0x90] sm:$0xff]
        %v672 = vld [vmem:[#allocation2 + $0x98] sm:$0xff]
        %v673 = vld [vmem:[#allocation2 + $0xa0] sm:$0xff]
        %v674 = vld [vmem:[#allocation2 + $0xa8] sm:$0xff]
        %v675 = vld [vmem:[#allocation2 + $0xb0] sm:$0xff]
        %v676 = vld [vmem:[#allocation2 + $0xb8] sm:$0xff]
        %v677 = vld [vmem:[#allocation2 + $0xc0] sm:$0xff]
        %v678 = vld [vmem:[#allocation2 + $0xc8] sm:$0xff]
        %v680 = vsel %vm454, %v652, 0
        %682 = vmatprep.subr.mxu0 %v654
        %683 = vmatpush1.msra.mxu0 %v653
        %684 = vmatprep.subr.mxu0 %v656
        %685 = vmatpush1.msra.mxu0 %v655
        %686 = vmatprep.subr.mxu0 %v658
        %687 = vmatpush1.msra.mxu0 %v657
        %688 = vmatprep.subr.mxu0 %v660
        %689 = vmatpush1.msra.mxu0 %v659
        %690 = vmatprep.subr.mxu0 %v662
        %691 = vmatpush1.msra.mxu0 %v661
        %692 = vmatprep.subr.mxu0 %v664
        %693 = vmatpush1.msra.mxu0 %v663
        %694 = vmatprep.subr.mxu0 %v666
        %695 = vmatpush1.msra.mxu0 %v665
        %696 = vmatprep.subr.mxu0 %v668
        %697 = vmatpush1.msra.mxu0 %v667
        %698 = vmatprep.subr.mxu0 %v670
        %699 = vmatpush1.msra.mxu0 %v669
        %700 = vmatprep.subr.mxu0 %v672
        %701 = vmatpush1.msra.mxu0 %v671
        %702 = vmatprep.subr.mxu0 %v674
        %703 = vmatpush1.msra.mxu0 %v673
        %704 = vmatprep.subr.mxu0 %v676
        %705 = vmatpush1.msra.mxu0 %v675
        %706 = vmatprep.subr.mxu0 %v678
        %707 = vmatpush1.msra.mxu0 %v677
        %708 = vmatprep.subr.mxu0 0.0
        %709 = vmatpush1.msra.mxu0 0.0
        %710 = vmatprep.subr.mxu0 0.0
        %711 = vmatpush1.msra.mxu0 0.0
        %712 = vmatprep.subr.mxu0 0.0
        %713 = vmatpush1.msra.mxu0 0.0
        %714 = vmatprep.subr.mxu0 0.0
        %715 = vmatpush1.msra.mxu0 0.0
        %716 = vmatprep.subr.mxu0 0.0
        %717 = vmatpush1.msra.mxu0 0.0
        %718 = vmatprep.subr.mxu0 0.0
        %719 = vmatpush1.msra.mxu0 0.0
        %720 = vmatprep.subr.mxu0 0.0
        %721 = vmatpush1.msra.mxu0 0.0
        %722 = vmatprep.subr.mxu0 0.0
        %723 = vmatpush1.msra.mxu0 0.0
        %724 = vmatprep.subr.mxu0 0.0
        %725 = vmatpush1.msra.mxu0 0.0
        %726 = vmatprep.subr.mxu0 0.0
        %727 = vmatpush1.msra.mxu0 0.0
        %728 = vmatprep.subr.mxu0 0.0
        %729 = vmatpush1.msra.mxu0 0.0
        %730 = vmatprep.subr.mxu0 0.0
        %731 = vmatpush1.msra.mxu0 0.0
        %732 = vmatprep.subr.mxu0 0.0
        %733 = vmatpush1.msra.mxu0 0.0
        %734 = vmatprep.subr.mxu0 0.0
        %735 = vmatpush1.msra.mxu0 0.0
        %736 = vmatprep.subr.mxu0 0.0
        %737 = vmatpush1.msra.mxu0 0.0
        %738 = vmatprep.subr.mxu0 0.0
        %739 = vmatpush1.msra.mxu0 0.0
        %740 = vmatprep.subr.mxu0 0.0
        %741 = vmatpush1.msra.mxu0 0.0
        %742 = vmatprep.subr.mxu0 0.0
        %743 = vmatpush1.msra.mxu0 0.0
        %744 = vmatprep.subr.mxu0 0.0
        %745 = vmatpush1.msra.mxu0 0.0
        %746 = vmatprep.mubr.f32.mxu0 0.0
        %747 = vmatmul.mubr.f32.gmra.mrb[0].mxu0 %v680
        %v748 = vpop.f32.mrb[0].mxu0
        %v749 = vadd.f32 0.0, %v748
        %v750 = vpop.f32.mrb[0].mxu0
        %v751 = vadd.f32 0.0, %v750
        %752 = vdwg.mxu0
        %v753 = vtanh.pop %v749
        %v754 = vtanh.pop %v751
        %v755 = vadd.f32 %v753, %v534
        %v756 = vadd.f32 %v754, %v536
        %v757 = vtanh.pop %v755
        %v758 = vtanh.pop %v756
        %759 = vrot.lane.b32.xlu0 %v757, 22
        %v760 = vpop.permute.xlu0 %759
        %761 = vrot.lane.b32.xlu0 %v758, 22
        %v762 = vpop.permute.xlu0 %761
        %vm763 = vcmp.lt.s32.totalorder %v246, 22
        %v764 = vsel %vm763, %v760, %v762
        %v765 = vsel %vm763, %v762, %v760
        %vm766 = vcmp.ge.s32.totalorder %v270, 22
        %vm767 = vcmp.ge.s32.totalorder %v271, 22
        %v768 = vsel %vm766, %v765, 0.0
        %v769 = vsel %vm767, %v764, 0.0
        %770 = vst [vmem:[#allocation2] sm:$0xff] %v768
        %771 = vst [vmem:[#allocation2 + $0x8] sm:$0xff] %v769
        %772 = vrot.lane.b32.xlu0 %v757, 20
        %v773 = vpop.permute.xlu0 %772
        %774 = vrot.lane.b32.xlu0 %v758, 20
        %v775 = vpop.permute.xlu0 %774
        %vm776 = vcmp.lt.s32.totalorder %v246, 20
        %v777 = vsel %vm776, %v773, %v775
        %v778 = vsel %vm776, %v775, %v773
        %vm779 = vcmp.ge.s32.totalorder %v270, 20
        %vm780 = vcmp.ge.s32.totalorder %v271, 20
        %v781 = vsel %vm779, %v778, 0.0
        %v782 = vsel %vm780, %v777, 0.0
        %783 = vst [vmem:[#allocation2 + $0x10] sm:$0xff] %v781
        %784 = vst [vmem:[#allocation2 + $0x18] sm:$0xff] %v782
        %785 = vrot.lane.b32.xlu0 %v757, 18
        %v786 = vpop.permute.xlu0 %785
        %787 = vrot.lane.b32.xlu0 %v758, 18
        %v788 = vpop.permute.xlu0 %787
        %vm789 = vcmp.lt.s32.totalorder %v246, 18
        %v790 = vsel %vm789, %v786, %v788
        %v791 = vsel %vm789, %v788, %v786
        %vm792 = vcmp.ge.s32.totalorder %v270, 18
        %vm793 = vcmp.ge.s32.totalorder %v271, 18
        %v794 = vsel %vm792, %v791, 0.0
        %v795 = vsel %vm793, %v790, 0.0
        %796 = vst [vmem:[#allocation2 + $0x20] sm:$0xff] %v794
        %797 = vst [vmem:[#allocation2 + $0x28] sm:$0xff] %v795
        %798 = vrot.lane.b32.xlu0 %v757, 16
        %v799 = vpop.permute.xlu0 %798
        %800 = vrot.lane.b32.xlu0 %v758, 16
        %v801 = vpop.permute.xlu0 %800
        %vm802 = vcmp.lt.s32.totalorder %v246, 16
        %v803 = vsel %vm802, %v799, %v801
        %v804 = vsel %vm802, %v801, %v799
        %vm805 = vcmp.ge.s32.totalorder %v270, 16
        %vm806 = vcmp.ge.s32.totalorder %v271, 16
        %v807 = vsel %vm805, %v804, 0.0
        %v808 = vsel %vm806, %v803, 0.0
        %809 = vst [vmem:[#allocation2 + $0x30] sm:$0xff] %v807
        %810 = vst [vmem:[#allocation2 + $0x38] sm:$0xff] %v808
        %811 = vrot.lane.b32.xlu0 %v757, 14
        %v812 = vpop.permute.xlu0 %811
        %813 = vrot.lane.b32.xlu0 %v758, 14
        %v814 = vpop.permute.xlu0 %813
        %vm815 = vcmp.lt.s32.totalorder %v246, 14
        %v816 = vsel %vm815, %v812, %v814
        %v817 = vsel %vm815, %v814, %v812
        %vm818 = vcmp.ge.s32.totalorder %v270, 14
        %vm819 = vcmp.ge.s32.totalorder %v271, 14
        %v820 = vsel %vm818, %v817, 0.0
        %v821 = vsel %vm819, %v816, 0.0
        %822 = vst [vmem:[#allocation2 + $0x40] sm:$0xff] %v820
        %823 = vst [vmem:[#allocation2 + $0x48] sm:$0xff] %v821
        %824 = vrot.lane.b32.xlu0 %v757, 12
        %v825 = vpop.permute.xlu0 %824
        %826 = vrot.lane.b32.xlu0 %v758, 12
        %v827 = vpop.permute.xlu0 %826
        %vm828 = vcmp.lt.s32.totalorder %v246, 12
        %v829 = vsel %vm828, %v825, %v827
        %v830 = vsel %vm828, %v827, %v825
        %vm831 = vcmp.ge.s32.totalorder %v270, 12
        %vm832 = vcmp.ge.s32.totalorder %v271, 12
        %v833 = vsel %vm831, %v830, 0.0
        %v834 = vsel %vm832, %v829, 0.0
        %835 = vst [vmem:[#allocation2 + $0x50] sm:$0xff] %v833
        %836 = vst [vmem:[#allocation2 + $0x58] sm:$0xff] %v834
        %837 = vrot.lane.b32.xlu0 %v757, 10
        %v838 = vpop.permute.xlu0 %837
        %839 = vrot.lane.b32.xlu0 %v758, 10
        %v840 = vpop.permute.xlu0 %839
        %v841 = vsel %vm298, %v838, %v840
        %v842 = vsel %vm298, %v840, %v838
        %v843 = vsel %vm301, %v842, 0.0
        %v844 = vsel %vm302, %v841, 0.0
        %845 = vst [vmem:[#allocation2 + $0x60] sm:$0xff] %v843
        %846 = vst [vmem:[#allocation2 + $0x68] sm:$0xff] %v844
        %847 = vrot.lane.b32.xlu0 %v757, 8
        %v848 = vpop.permute.xlu0 %847
        %849 = vrot.lane.b32.xlu0 %v758, 8
        %v850 = vpop.permute.xlu0 %849
        %v851 = vsel %vm324, %v848, %v850
        %v852 = vsel %vm324, %v850, %v848
        %v853 = vsel %vm327, %v852, 0.0
        %v854 = vsel %vm328, %v851, 0.0
        %855 = vst [vmem:[#allocation2 + $0x70] sm:$0xff] %v853
        %856 = vst [vmem:[#allocation2 + $0x78] sm:$0xff] %v854
        %857 = vrot.lane.b32.xlu0 %v757, 6
        %v858 = vpop.permute.xlu0 %857
        %859 = vrot.lane.b32.xlu0 %v758, 6
        %v860 = vpop.permute.xlu0 %859
        %v861 = vsel %vm350, %v858, %v860
        %v862 = vsel %vm350, %v860, %v858
        %v863 = vsel %vm353, %v862, 0.0
        %v864 = vsel %vm354, %v861, 0.0
        %865 = vst [vmem:[#allocation2 + $0x80] sm:$0xff] %v863
        %866 = vst [vmem:[#allocation2 + $0x88] sm:$0xff] %v864
        %867 = vrot.lane.b32.xlu0 %v757, 4
        %v868 = vpop.permute.xlu0 %867
        %869 = vrot.lane.b32.xlu0 %v758, 4
        %v870 = vpop.permute.xlu0 %869
        %v871 = vsel %vm376, %v868, %v870
        %v872 = vsel %vm376, %v870, %v868
        %v873 = vsel %vm379, %v872, 0.0
        %v874 = vsel %vm380, %v871, 0.0
        %875 = vst [vmem:[#allocation2 + $0x90] sm:$0xff] %v873
        %876 = vst [vmem:[#allocation2 + $0x98] sm:$0xff] %v874
        %877 = vrot.lane.b32.xlu0 %v757, 2
        %v878 = vpop.permute.xlu0 %877
        %879 = vrot.lane.b32.xlu0 %v758, 2
        %v880 = vpop.permute.xlu0 %879
        %v881 = vsel %vm402, %v878, %v880
        %v882 = vsel %vm402, %v880, %v878
        %v883 = vsel %vm405, %v882, 0.0
        %v884 = vsel %vm406, %v881, 0.0
        %885 = vst [vmem:[#allocation2 + $0xa0] sm:$0xff] %v883
        %886 = vst [vmem:[#allocation2 + $0xa8] sm:$0xff] %v884
        %887 = vst [vmem:[#allocation2 + $0xb0] sm:$0xff] %v757
        %888 = vst [vmem:[#allocation2 + $0xb8] sm:$0xff] %v758
        %s889 = scalar_lea.vmem [#allocation8], 8
        %v890 = vld [vmem:[%s889] sm:$0xff]
        %v891 = vld [vmem:[#allocation2] sm:$0xff]
        %v892 = vld [vmem:[#allocation2 + $0x8] sm:$0xff]
        %v893 = vld [vmem:[#allocation2 + $0x10] sm:$0xff]
        %v894 = vld [vmem:[#allocation2 + $0x18] sm:$0xff]
        %v895 = vld [vmem:[#allocation2 + $0x20] sm:$0xff]
        %v896 = vld [vmem:[#allocation2 + $0x28] sm:$0xff]
        %v897 = vld [vmem:[#allocation2 + $0x30] sm:$0xff]
        %v898 = vld [vmem:[#allocation2 + $0x38] sm:$0xff]
        %v899 = vld [vmem:[#allocation2 + $0x40] sm:$0xff]
        %v900 = vld [vmem:[#allocation2 + $0x48] sm:$0xff]
        %v901 = vld [vmem:[#allocation2 + $0x50] sm:$0xff]
        %v902 = vld [vmem:[#allocation2 + $0x58] sm:$0xff]
        %v903 = vld [vmem:[#allocation2 + $0x60] sm:$0xff]
        %v904 = vld [vmem:[#allocation2 + $0x68] sm:$0xff]
        %v905 = vld [vmem:[#allocation2 + $0x70] sm:$0xff]
        %v906 = vld [vmem:[#allocation2 + $0x78] sm:$0xff]
        %v907 = vld [vmem:[#allocation2 + $0x80] sm:$0xff]
        %v908 = vld [vmem:[#allocation2 + $0x88] sm:$0xff]
        %v909 = vld [vmem:[#allocation2 + $0x90] sm:$0xff]
        %v910 = vld [vmem:[#allocation2 + $0x98] sm:$0xff]
        %v911 = vld [vmem:[#allocation2 + $0xa0] sm:$0xff]
        %v912 = vld [vmem:[#allocation2 + $0xa8] sm:$0xff]
        %v913 = vld [vmem:[#allocation2 + $0xb0] sm:$0xff]
        %v914 = vld [vmem:[#allocation2 + $0xb8] sm:$0xff]
        %v915 = vld [vmem:[#allocation2 + $0xc0] sm:$0xff]
        %v916 = vld [vmem:[#allocation2 + $0xc8] sm:$0xff]
        %v918 = vsel %vm454, %v890, 0
        %920 = vmatprep.subr.mxu0 %v892
        %921 = vmatpush1.msra.mxu0 %v891
        %922 = vmatprep.subr.mxu0 %v894
        %923 = vmatpush1.msra.mxu0 %v893
        %924 = vmatprep.subr.mxu0 %v896
        %925 = vmatpush1.msra.mxu0 %v895
        %926 = vmatprep.subr.mxu0 %v898
        %927 = vmatpush1.msra.mxu0 %v897
        %928 = vmatprep.subr.mxu0 %v900
        %929 = vmatpush1.msra.mxu0 %v899
        %930 = vmatprep.subr.mxu0 %v902
        %931 = vmatpush1.msra.mxu0 %v901
        %932 = vmatprep.subr.mxu0 %v904
        %933 = vmatpush1.msra.mxu0 %v903
        %934 = vmatprep.subr.mxu0 %v906
        %935 = vmatpush1.msra.mxu0 %v905
        %936 = vmatprep.subr.mxu0 %v908
        %937 = vmatpush1.msra.mxu0 %v907
        %938 = vmatprep.subr.mxu0 %v910
        %939 = vmatpush1.msra.mxu0 %v909
        %940 = vmatprep.subr.mxu0 %v912
        %941 = vmatpush1.msra.mxu0 %v911
        %942 = vmatprep.subr.mxu0 %v914
        %943 = vmatpush1.msra.mxu0 %v913
        %944 = vmatprep.subr.mxu0 %v916
        %945 = vmatpush1.msra.mxu0 %v915
        %946 = vmatprep.subr.mxu0 0.0
        %947 = vmatpush1.msra.mxu0 0.0
        %948 = vmatprep.subr.mxu0 0.0
        %949 = vmatpush1.msra.mxu0 0.0
        %950 = vmatprep.subr.mxu0 0.0
        %951 = vmatpush1.msra.mxu0 0.0
        %952 = vmatprep.subr.mxu0 0.0
        %953 = vmatpush1.msra.mxu0 0.0
        %954 = vmatprep.subr.mxu0 0.0
        %955 = vmatpush1.msra.mxu0 0.0
        %956 = vmatprep.subr.mxu0 0.0
        %957 = vmatpush1.msra.mxu0 0.0
        %958 = vmatprep.subr.mxu0 0.0
        %959 = vmatpush1.msra.mxu0 0.0
        %960 = vmatprep.subr.mxu0 0.0
        %961 = vmatpush1.msra.mxu0 0.0
        %962 = vmatprep.subr.mxu0 0.0
        %963 = vmatpush1.msra.mxu0 0.0
        %964 = vmatprep.subr.mxu0 0.0
        %965 = vmatpush1.msra.mxu0 0.0
        %966 = vmatprep.subr.mxu0 0.0
        %967 = vmatpush1.msra.mxu0 0.0
        %968 = vmatprep.subr.mxu0 0.0
        %969 = vmatpush1.msra.mxu0 0.0
        %970 = vmatprep.subr.mxu0 0.0
        %971 = vmatpush1.msra.mxu0 0.0
        %972 = vmatprep.subr.mxu0 0.0
        %973 = vmatpush1.msra.mxu0 0.0
        %974 = vmatprep.subr.mxu0 0.0
        %975 = vmatpush1.msra.mxu0 0.0
        %976 = vmatprep.subr.mxu0 0.0
        %977 = vmatpush1.msra.mxu0 0.0
        %978 = vmatprep.subr.mxu0 0.0
        %979 = vmatpush1.msra.mxu0 0.0
        %980 = vmatprep.subr.mxu0 0.0
        %981 = vmatpush1.msra.mxu0 0.0
        %982 = vmatprep.subr.mxu0 0.0
        %983 = vmatpush1.msra.mxu0 0.0
        %984 = vmatprep.mubr.f32.mxu0 0.0
        %985 = vmatmul.mubr.f32.gmra.mrb[0].mxu0 %v918
        %v986 = vpop.f32.mrb[0].mxu0
        %v987 = vadd.f32 0.0, %v986
        %v988 = vpop.f32.mrb[0].mxu0
        %v989 = vadd.f32 0.0, %v988
        %990 = vdwg.mxu0
        %v991 = vtanh.pop %v987
        %v992 = vtanh.pop %v989
        %993 = vrot.lane.b32.xlu0 %v991, 22
        %v994 = vpop.permute.xlu0 %993
        %995 = vrot.lane.b32.xlu0 %v992, 22
        %v996 = vpop.permute.xlu0 %995
        %v997 = vsel %vm763, %v994, %v996
        %v998 = vsel %vm763, %v996, %v994
        %v999 = vsel %vm766, %v998, 0.0
        %v1000 = vsel %vm767, %v997, 0.0
        %1001 = vst [vmem:[#allocation2] sm:$0xff] %v999
        %1002 = vst [vmem:[#allocation2 + $0x8] sm:$0xff] %v1000
        %1003 = vrot.lane.b32.xlu0 %v991, 20
        %v1004 = vpop.permute.xlu0 %1003
        %1005 = vrot.lane.b32.xlu0 %v992, 20
        %v1006 = vpop.permute.xlu0 %1005
        %v1007 = vsel %vm776, %v1004, %v1006
        %v1008 = vsel %vm776, %v1006, %v1004
        %v1009 = vsel %vm779, %v1008, 0.0
        %v1010 = vsel %vm780, %v1007, 0.0
        %1011 = vst [vmem:[#allocation2 + $0x10] sm:$0xff] %v1009
        %1012 = vst [vmem:[#allocation2 + $0x18] sm:$0xff] %v1010
        %1013 = vrot.lane.b32.xlu0 %v991, 18
        %v1014 = vpop.permute.xlu0 %1013
        %1015 = vrot.lane.b32.xlu0 %v992, 18
        %v1016 = vpop.permute.xlu0 %1015
        %v1017 = vsel %vm789, %v1014, %v1016
        %v1018 = vsel %vm789, %v1016, %v1014
        %v1019 = vsel %vm792, %v1018, 0.0
        %v1020 = vsel %vm793, %v1017, 0.0
        %1021 = vst [vmem:[#allocation2 + $0x20] sm:$0xff] %v1019
        %1022 = vst [vmem:[#allocation2 + $0x28] sm:$0xff] %v1020
        %1023 = vrot.lane.b32.xlu0 %v991, 16
        %v1024 = vpop.permute.xlu0 %1023
        %1025 = vrot.lane.b32.xlu0 %v992, 16
        %v1026 = vpop.permute.xlu0 %1025
        %v1027 = vsel %vm802, %v1024, %v1026
        %v1028 = vsel %vm802, %v1026, %v1024
        %v1029 = vsel %vm805, %v1028, 0.0
        %v1030 = vsel %vm806, %v1027, 0.0
        %1031 = vst [vmem:[#allocation2 + $0x30] sm:$0xff] %v1029
        %1032 = vst [vmem:[#allocation2 + $0x38] sm:$0xff] %v1030
        %1033 = vrot.lane.b32.xlu0 %v991, 14
        %v1034 = vpop.permute.xlu0 %1033
        %1035 = vrot.lane.b32.xlu0 %v992, 14
        %v1036 = vpop.permute.xlu0 %1035
        %v1037 = vsel %vm815, %v1034, %v1036
        %v1038 = vsel %vm815, %v1036, %v1034
        %v1039 = vsel %vm818, %v1038, 0.0
        %v1040 = vsel %vm819, %v1037, 0.0
        %1041 = vst [vmem:[#allocation2 + $0x40] sm:$0xff] %v1039
        %1042 = vst [vmem:[#allocation2 + $0x48] sm:$0xff] %v1040
        %1043 = vrot.lane.b32.xlu0 %v991, 12
        %v1044 = vpop.permute.xlu0 %1043
        %1045 = vrot.lane.b32.xlu0 %v992, 12
        %v1046 = vpop.permute.xlu0 %1045
        %v1047 = vsel %vm828, %v1044, %v1046
        %v1048 = vsel %vm828, %v1046, %v1044
        %v1049 = vsel %vm831, %v1048, 0.0
        %v1050 = vsel %vm832, %v1047, 0.0
        %1051 = vst [vmem:[#allocation2 + $0x50] sm:$0xff] %v1049
        %1052 = vst [vmem:[#allocation2 + $0x58] sm:$0xff] %v1050
        %1053 = vrot.lane.b32.xlu0 %v991, 10
        %v1054 = vpop.permute.xlu0 %1053
        %1055 = vrot.lane.b32.xlu0 %v992, 10
        %v1056 = vpop.permute.xlu0 %1055
        %v1057 = vsel %vm298, %v1054, %v1056
        %v1058 = vsel %vm298, %v1056, %v1054
        %v1059 = vsel %vm301, %v1058, 0.0
        %v1060 = vsel %vm302, %v1057, 0.0
        %1061 = vst [vmem:[#allocation2 + $0x60] sm:$0xff] %v1059
        %1062 = vst [vmem:[#allocation2 + $0x68] sm:$0xff] %v1060
        %1063 = vrot.lane.b32.xlu0 %v991, 8
        %v1064 = vpop.permute.xlu0 %1063
        %1065 = vrot.lane.b32.xlu0 %v992, 8
        %v1066 = vpop.permute.xlu0 %1065
        %v1067 = vsel %vm324, %v1064, %v1066
        %v1068 = vsel %vm324, %v1066, %v1064
        %v1069 = vsel %vm327, %v1068, 0.0
        %v1070 = vsel %vm328, %v1067, 0.0
        %1071 = vst [vmem:[#allocation2 + $0x70] sm:$0xff] %v1069
        %1072 = vst [vmem:[#allocation2 + $0x78] sm:$0xff] %v1070
        %1073 = vrot.lane.b32.xlu0 %v991, 6
        %v1074 = vpop.permute.xlu0 %1073
        %1075 = vrot.lane.b32.xlu0 %v992, 6
        %v1076 = vpop.permute.xlu0 %1075
        %v1077 = vsel %vm350, %v1074, %v1076
        %v1078 = vsel %vm350, %v1076, %v1074
        %v1079 = vsel %vm353, %v1078, 0.0
        %v1080 = vsel %vm354, %v1077, 0.0
        %1081 = vst [vmem:[#allocation2 + $0x80] sm:$0xff] %v1079
        %1082 = vst [vmem:[#allocation2 + $0x88] sm:$0xff] %v1080
        %1083 = vrot.lane.b32.xlu0 %v991, 4
        %v1084 = vpop.permute.xlu0 %1083
        %1085 = vrot.lane.b32.xlu0 %v992, 4
        %v1086 = vpop.permute.xlu0 %1085
        %v1087 = vsel %vm376, %v1084, %v1086
        %v1088 = vsel %vm376, %v1086, %v1084
        %v1089 = vsel %vm379, %v1088, 0.0
        %v1090 = vsel %vm380, %v1087, 0.0
        %1091 = vst [vmem:[#allocation2 + $0x90] sm:$0xff] %v1089
        %1092 = vst [vmem:[#allocation2 + $0x98] sm:$0xff] %v1090
        %1093 = vrot.lane.b32.xlu0 %v991, 2
        %v1094 = vpop.permute.xlu0 %1093
        %1095 = vrot.lane.b32.xlu0 %v992, 2
        %v1096 = vpop.permute.xlu0 %1095
        %v1097 = vsel %vm402, %v1094, %v1096
        %v1098 = vsel %vm402, %v1096, %v1094
        %v1099 = vsel %vm405, %v1098, 0.0
        %v1100 = vsel %vm406, %v1097, 0.0
        %1101 = vst [vmem:[#allocation2 + $0xa0] sm:$0xff] %v1099
        %1102 = vst [vmem:[#allocation2 + $0xa8] sm:$0xff] %v1100
        %1103 = vst [vmem:[#allocation2 + $0xb0] sm:$0xff] %v991
        %1104 = vst [vmem:[#allocation2 + $0xb8] sm:$0xff] %v992
        %s1105 = scalar_lea.vmem [#allocation8], 16
        %v1106 = vld [vmem:[%s1105] sm:$0xff]
        %v1107 = vld [vmem:[#allocation2] sm:$0xff]
        %v1108 = vld [vmem:[#allocation2 + $0x8] sm:$0xff]
        %v1109 = vld [vmem:[#allocation2 + $0x10] sm:$0xff]
        %v1110 = vld [vmem:[#allocation2 + $0x18] sm:$0xff]
        %v1111 = vld [vmem:[#allocation2 + $0x20] sm:$0xff]
        %v1112 = vld [vmem:[#allocation2 + $0x28] sm:$0xff]
        %v1113 = vld [vmem:[#allocation2 + $0x30] sm:$0xff]
        %v1114 = vld [vmem:[#allocation2 + $0x38] sm:$0xff]
        %v1115 = vld [vmem:[#allocation2 + $0x40] sm:$0xff]
        %v1116 = vld [vmem:[#allocation2 + $0x48] sm:$0xff]
        %v1117 = vld [vmem:[#allocation2 + $0x50] sm:$0xff]
        %v1118 = vld [vmem:[#allocation2 + $0x58] sm:$0xff]
        %v1119 = vld [vmem:[#allocation2 + $0x60] sm:$0xff]
        %v1120 = vld [vmem:[#allocation2 + $0x68] sm:$0xff]
        %v1121 = vld [vmem:[#allocation2 + $0x70] sm:$0xff]
        %v1122 = vld [vmem:[#allocation2 + $0x78] sm:$0xff]
        %v1123 = vld [vmem:[#allocation2 + $0x80] sm:$0xff]
        %v1124 = vld [vmem:[#allocation2 + $0x88] sm:$0xff]
        %v1125 = vld [vmem:[#allocation2 + $0x90] sm:$0xff]
        %v1126 = vld [vmem:[#allocation2 + $0x98] sm:$0xff]
        %v1127 = vld [vmem:[#allocation2 + $0xa0] sm:$0xff]
        %v1128 = vld [vmem:[#allocation2 + $0xa8] sm:$0xff]
        %v1129 = vld [vmem:[#allocation2 + $0xb0] sm:$0xff]
        %v1130 = vld [vmem:[#allocation2 + $0xb8] sm:$0xff]
        %v1131 = vld [vmem:[#allocation2 + $0xc0] sm:$0xff]
        %v1132 = vld [vmem:[#allocation2 + $0xc8] sm:$0xff]
        %v1134 = vsel %vm454, %v1106, 0
        %1136 = vmatprep.subr.mxu0 %v1108
        %1137 = vmatpush1.msra.mxu0 %v1107
        %1138 = vmatprep.subr.mxu0 %v1110
        %1139 = vmatpush1.msra.mxu0 %v1109
        %1140 = vmatprep.subr.mxu0 %v1112
        %1141 = vmatpush1.msra.mxu0 %v1111
        %1142 = vmatprep.subr.mxu0 %v1114
        %1143 = vmatpush1.msra.mxu0 %v1113
        %1144 = vmatprep.subr.mxu0 %v1116
        %1145 = vmatpush1.msra.mxu0 %v1115
        %1146 = vmatprep.subr.mxu0 %v1118
        %1147 = vmatpush1.msra.mxu0 %v1117
        %1148 = vmatprep.subr.mxu0 %v1120
        %1149 = vmatpush1.msra.mxu0 %v1119
        %1150 = vmatprep.subr.mxu0 %v1122
        %1151 = vmatpush1.msra.mxu0 %v1121
        %1152 = vmatprep.subr.mxu0 %v1124
        %1153 = vmatpush1.msra.mxu0 %v1123
        %1154 = vmatprep.subr.mxu0 %v1126
        %1155 = vmatpush1.msra.mxu0 %v1125
        %1156 = vmatprep.subr.mxu0 %v1128
        %1157 = vmatpush1.msra.mxu0 %v1127
        %1158 = vmatprep.subr.mxu0 %v1130
        %1159 = vmatpush1.msra.mxu0 %v1129
        %1160 = vmatprep.subr.mxu0 %v1132
        %1161 = vmatpush1.msra.mxu0 %v1131
        %1162 = vmatprep.subr.mxu0 0.0
        %1163 = vmatpush1.msra.mxu0 0.0
        %1164 = vmatprep.subr.mxu0 0.0
        %1165 = vmatpush1.msra.mxu0 0.0
        %1166 = vmatprep.subr.mxu0 0.0
        %1167 = vmatpush1.msra.mxu0 0.0
        %1168 = vmatprep.subr.mxu0 0.0
        %1169 = vmatpush1.msra.mxu0 0.0
        %1170 = vmatprep.subr.mxu0 0.0
        %1171 = vmatpush1.msra.mxu0 0.0
        %1172 = vmatprep.subr.mxu0 0.0
        %1173 = vmatpush1.msra.mxu0 0.0
        %1174 = vmatprep.subr.mxu0 0.0
        %1175 = vmatpush1.msra.mxu0 0.0
        %1176 = vmatprep.subr.mxu0 0.0
        %1177 = vmatpush1.msra.mxu0 0.0
        %1178 = vmatprep.subr.mxu0 0.0
        %1179 = vmatpush1.msra.mxu0 0.0
        %1180 = vmatprep.subr.mxu0 0.0
        %1181 = vmatpush1.msra.mxu0 0.0
        %1182 = vmatprep.subr.mxu0 0.0
        %1183 = vmatpush1.msra.mxu0 0.0
        %1184 = vmatprep.subr.mxu0 0.0
        %1185 = vmatpush1.msra.mxu0 0.0
        %1186 = vmatprep.subr.mxu0 0.0
        %1187 = vmatpush1.msra.mxu0 0.0
        %1188 = vmatprep.subr.mxu0 0.0
        %1189 = vmatpush1.msra.mxu0 0.0
        %1190 = vmatprep.subr.mxu0 0.0
        %1191 = vmatpush1.msra.mxu0 0.0
        %1192 = vmatprep.subr.mxu0 0.0
        %1193 = vmatpush1.msra.mxu0 0.0
        %1194 = vmatprep.subr.mxu0 0.0
        %1195 = vmatpush1.msra.mxu0 0.0
        %1196 = vmatprep.subr.mxu0 0.0
        %1197 = vmatpush1.msra.mxu0 0.0
        %1198 = vmatprep.subr.mxu0 0.0
        %1199 = vmatpush1.msra.mxu0 0.0
        %1200 = vmatprep.mubr.f32.mxu0 0.0
        %1201 = vmatmul.mubr.f32.gmra.mrb[0].mxu0 %v1134
        %v1202 = vpop.f32.mrb[0].mxu0
        %v1203 = vadd.f32 0.0, %v1202
        %v1204 = vpop.f32.mrb[0].mxu0
        %v1205 = vadd.f32 0.0, %v1204
        %1206 = vdwg.mxu0
        %v1207 = vtanh.pop %v1203
        %v1208 = vtanh.pop %v1205
        %v1209 = vadd.f32 %v1207, %v757
        %v1210 = vadd.f32 %v1208, %v758
        %v1211 = vtanh.pop %v1209
        %v1212 = vtanh.pop %v1210
        %1213 = vrot.lane.b32.xlu0 %v1211, 44
        %v1214 = vpop.permute.xlu0 %1213
        %1215 = vrot.lane.b32.xlu0 %v1212, 44
        %v1216 = vpop.permute.xlu0 %1215
        %vm1217 = vcmp.lt.s32.totalorder %v246, 44
        %v1218 = vsel %vm1217, %v1214, %v1216
        %v1219 = vsel %vm1217, %v1216, %v1214
        %vm1220 = vcmp.ge.s32.totalorder %v270, 44
        %vm1221 = vcmp.ge.s32.totalorder %v271, 44
        %v1222 = vsel %vm1220, %v1219, 0.0
        %v1223 = vsel %vm1221, %v1218, 0.0
        %1224 = vst [vmem:[#allocation2] sm:$0xff] %v1222
        %1225 = vst [vmem:[#allocation2 + $0x8] sm:$0xff] %v1223
        %1226 = vrot.lane.b32.xlu0 %v1211, 40
        %v1227 = vpop.permute.xlu0 %1226
        %1228 = vrot.lane.b32.xlu0 %v1212, 40
        %v1229 = vpop.permute.xlu0 %1228
        %vm1230 = vcmp.lt.s32.totalorder %v246, 40
        %v1231 = vsel %vm1230, %v1227, %v1229
        %v1232 = vsel %vm1230, %v1229, %v1227
        %vm1233 = vcmp.ge.s32.totalorder %v270, 40
        %vm1234 = vcmp.ge.s32.totalorder %v271, 40
        %v1235 = vsel %vm1233, %v1232, 0.0
        %v1236 = vsel %vm1234, %v1231, 0.0
        %1237 = vst [vmem:[#allocation2 + $0x10] sm:$0xff] %v1235
        %1238 = vst [vmem:[#allocation2 + $0x18] sm:$0xff] %v1236
        %1239 = vrot.lane.b32.xlu0 %v1211, 36
        %v1240 = vpop.permute.xlu0 %1239
        %1241 = vrot.lane.b32.xlu0 %v1212, 36
        %v1242 = vpop.permute.xlu0 %1241
        %vm1243 = vcmp.lt.s32.totalorder %v246, 36
        %v1244 = vsel %vm1243, %v1240, %v1242
        %v1245 = vsel %vm1243, %v1242, %v1240
        %vm1246 = vcmp.ge.s32.totalorder %v270, 36
        %vm1247 = vcmp.ge.s32.totalorder %v271, 36
        %v1248 = vsel %vm1246, %v1245, 0.0
        %v1249 = vsel %vm1247, %v1244, 0.0
        %1250 = vst [vmem:[#allocation2 + $0x20] sm:$0xff] %v1248
        %1251 = vst [vmem:[#allocation2 + $0x28] sm:$0xff] %v1249
        %1252 = vrot.lane.b32.xlu0 %v1211, 32
        %v1253 = vpop.permute.xlu0 %1252
        %1254 = vrot.lane.b32.xlu0 %v1212, 32
        %v1255 = vpop.permute.xlu0 %1254
        %vm1256 = vcmp.lt.s32.totalorder %v246, 32
        %v1257 = vsel %vm1256, %v1253, %v1255
        %v1258 = vsel %vm1256, %v1255, %v1253
        %vm1259 = vcmp.ge.s32.totalorder %v270, 32
        %vm1260 = vcmp.ge.s32.totalorder %v271, 32
        %v1261 = vsel %vm1259, %v1258, 0.0
        %v1262 = vsel %vm1260, %v1257, 0.0
        %1263 = vst [vmem:[#allocation2 + $0x30] sm:$0xff] %v1261
        %1264 = vst [vmem:[#allocation2 + $0x38] sm:$0xff] %v1262
        %1265 = vrot.lane.b32.xlu0 %v1211, 28
        %v1266 = vpop.permute.xlu0 %1265
        %1267 = vrot.lane.b32.xlu0 %v1212, 28
        %v1268 = vpop.permute.xlu0 %1267
        %vm1269 = vcmp.lt.s32.totalorder %v246, 28
        %v1270 = vsel %vm1269, %v1266, %v1268
        %v1271 = vsel %vm1269, %v1268, %v1266
        %vm1272 = vcmp.ge.s32.totalorder %v270, 28
        %vm1273 = vcmp.ge.s32.totalorder %v271, 28
        %v1274 = vsel %vm1272, %v1271, 0.0
        %v1275 = vsel %vm1273, %v1270, 0.0
        %1276 = vst [vmem:[#allocation2 + $0x40] sm:$0xff] %v1274
        %1277 = vst [vmem:[#allocation2 + $0x48] sm:$0xff] %v1275
        %1278 = vrot.lane.b32.xlu0 %v1211, 24
        %v1279 = vpop.permute.xlu0 %1278
        %1280 = vrot.lane.b32.xlu0 %v1212, 24
        %v1281 = vpop.permute.xlu0 %1280
        %vm1282 = vcmp.lt.s32.totalorder %v246, 24
        %v1283 = vsel %vm1282, %v1279, %v1281
        %v1284 = vsel %vm1282, %v1281, %v1279
        %vm1285 = vcmp.ge.s32.totalorder %v270, 24
        %vm1286 = vcmp.ge.s32.totalorder %v271, 24
        %v1287 = vsel %vm1285, %v1284, 0.0
        %v1288 = vsel %vm1286, %v1283, 0.0
        %1289 = vst [vmem:[#allocation2 + $0x50] sm:$0xff] %v1287
        %1290 = vst [vmem:[#allocation2 + $0x58] sm:$0xff] %v1288
        %1291 = vrot.lane.b32.xlu0 %v1211, 20
        %v1292 = vpop.permute.xlu0 %1291
        %1293 = vrot.lane.b32.xlu0 %v1212, 20
        %v1294 = vpop.permute.xlu0 %1293
        %v1295 = vsel %vm776, %v1292, %v1294
        %v1296 = vsel %vm776, %v1294, %v1292
        %v1297 = vsel %vm779, %v1296, 0.0
        %v1298 = vsel %vm780, %v1295, 0.0
        %1299 = vst [vmem:[#allocation2 + $0x60] sm:$0xff] %v1297
        %1300 = vst [vmem:[#allocation2 + $0x68] sm:$0xff] %v1298
        %1301 = vrot.lane.b32.xlu0 %v1211, 16
        %v1302 = vpop.permute.xlu0 %1301
        %1303 = vrot.lane.b32.xlu0 %v1212, 16
        %v1304 = vpop.permute.xlu0 %1303
        %v1305 = vsel %vm802, %v1302, %v1304
        %v1306 = vsel %vm802, %v1304, %v1302
        %v1307 = vsel %vm805, %v1306, 0.0
        %v1308 = vsel %vm806, %v1305, 0.0
        %1309 = vst [vmem:[#allocation2 + $0x70] sm:$0xff] %v1307
        %1310 = vst [vmem:[#allocation2 + $0x78] sm:$0xff] %v1308
        %1311 = vrot.lane.b32.xlu0 %v1211, 12
        %v1312 = vpop.permute.xlu0 %1311
        %1313 = vrot.lane.b32.xlu0 %v1212, 12
        %v1314 = vpop.permute.xlu0 %1313
        %v1315 = vsel %vm828, %v1312, %v1314
        %v1316 = vsel %vm828, %v1314, %v1312
        %v1317 = vsel %vm831, %v1316, 0.0
        %v1318 = vsel %vm832, %v1315, 0.0
        %1319 = vst [vmem:[#allocation2 + $0x80] sm:$0xff] %v1317
        %1320 = vst [vmem:[#allocation2 + $0x88] sm:$0xff] %v1318
        %1321 = vrot.lane.b32.xlu0 %v1211, 8
        %v1322 = vpop.permute.xlu0 %1321
        %1323 = vrot.lane.b32.xlu0 %v1212, 8
        %v1324 = vpop.permute.xlu0 %1323
        %v1325 = vsel %vm324, %v1322, %v1324
        %v1326 = vsel %vm324, %v1324, %v1322
        %v1327 = vsel %vm327, %v1326, 0.0
        %v1328 = vsel %vm328, %v1325, 0.0
        %1329 = vst [vmem:[#allocation2 + $0x90] sm:$0xff] %v1327
        %1330 = vst [vmem:[#allocation2 + $0x98] sm:$0xff] %v1328
        %1331 = vrot.lane.b32.xlu0 %v1211, 4
        %v1332 = vpop.permute.xlu0 %1331
        %1333 = vrot.lane.b32.xlu0 %v1212, 4
        %v1334 = vpop.permute.xlu0 %1333
        %v1335 = vsel %vm376, %v1332, %v1334
        %v1336 = vsel %vm376, %v1334, %v1332
        %v1337 = vsel %vm379, %v1336, 0.0
        %v1338 = vsel %vm380, %v1335, 0.0
        %1339 = vst [vmem:[#allocation2 + $0xa0] sm:$0xff] %v1337
        %1340 = vst [vmem:[#allocation2 + $0xa8] sm:$0xff] %v1338
        %1341 = vst [vmem:[#allocation2 + $0xb0] sm:$0xff] %v1211
        %1342 = vst [vmem:[#allocation2 + $0xb8] sm:$0xff] %v1212
        %s1343 = scalar_lea.vmem [#allocation8], 24
        %v1344 = vld [vmem:[%s1343] sm:$0xff]
        %v1345 = vld [vmem:[#allocation2] sm:$0xff]
        %v1346 = vld [vmem:[#allocation2 + $0x8] sm:$0xff]
        %v1347 = vld [vmem:[#allocation2 + $0x10] sm:$0xff]
        %v1348 = vld [vmem:[#allocation2 + $0x18] sm:$0xff]
        %v1349 = vld [vmem:[#allocation2 + $0x20] sm:$0xff]
        %v1350 = vld [vmem:[#allocation2 + $0x28] sm:$0xff]
        %v1351 = vld [vmem:[#allocation2 + $0x30] sm:$0xff]
        %v1352 = vld [vmem:[#allocation2 + $0x38] sm:$0xff]
        %v1353 = vld [vmem:[#allocation2 + $0x40] sm:$0xff]
        %v1354 = vld [vmem:[#allocation2 + $0x48] sm:$0xff]
        %v1355 = vld [vmem:[#allocation2 + $0x50] sm:$0xff]
        %v1356 = vld [vmem:[#allocation2 + $0x58] sm:$0xff]
        %v1357 = vld [vmem:[#allocation2 + $0x60] sm:$0xff]
        %v1358 = vld [vmem:[#allocation2 + $0x68] sm:$0xff]
        %v1359 = vld [vmem:[#allocation2 + $0x70] sm:$0xff]
        %v1360 = vld [vmem:[#allocation2 + $0x78] sm:$0xff]
        %v1361 = vld [vmem:[#allocation2 + $0x80] sm:$0xff]
        %v1362 = vld [vmem:[#allocation2 + $0x88] sm:$0xff]
        %v1363 = vld [vmem:[#allocation2 + $0x90] sm:$0xff]
        %v1364 = vld [vmem:[#allocation2 + $0x98] sm:$0xff]
        %v1365 = vld [vmem:[#allocation2 + $0xa0] sm:$0xff]
        %v1366 = vld [vmem:[#allocation2 + $0xa8] sm:$0xff]
        %v1367 = vld [vmem:[#allocation2 + $0xb0] sm:$0xff]
        %v1368 = vld [vmem:[#allocation2 + $0xb8] sm:$0xff]
        %v1369 = vld [vmem:[#allocation2 + $0xc0] sm:$0xff]
        %v1370 = vld [vmem:[#allocation2 + $0xc8] sm:$0xff]
        %v1372 = vsel %vm454, %v1344, 0
        %1374 = vmatprep.subr.mxu0 %v1346
        %1375 = vmatpush1.msra.mxu0 %v1345
        %1376 = vmatprep.subr.mxu0 %v1348
        %1377 = vmatpush1.msra.mxu0 %v1347
        %1378 = vmatprep.subr.mxu0 %v1350
        %1379 = vmatpush1.msra.mxu0 %v1349
        %1380 = vmatprep.subr.mxu0 %v1352
        %1381 = vmatpush1.msra.mxu0 %v1351
        %1382 = vmatprep.subr.mxu0 %v1354
        %1383 = vmatpush1.msra.mxu0 %v1353
        %1384 = vmatprep.subr.mxu0 %v1356
        %1385 = vmatpush1.msra.mxu0 %v1355
        %1386 = vmatprep.subr.mxu0 %v1358
        %1387 = vmatpush1.msra.mxu0 %v1357
        %1388 = vmatprep.subr.mxu0 %v1360
        %1389 = vmatpush1.msra.mxu0 %v1359
        %1390 = vmatprep.subr.mxu0 %v1362
        %1391 = vmatpush1.msra.mxu0 %v1361
        %1392 = vmatprep.subr.mxu0 %v1364
        %1393 = vmatpush1.msra.mxu0 %v1363
        %1394 = vmatprep.subr.mxu0 %v1366
        %1395 = vmatpush1.msra.mxu0 %v1365
        %1396 = vmatprep.subr.mxu0 %v1368
        %1397 = vmatpush1.msra.mxu0 %v1367
        %1398 = vmatprep.subr.mxu0 %v1370
        %1399 = vmatpush1.msra.mxu0 %v1369
        %1400 = vmatprep.subr.mxu0 0.0
        %1401 = vmatpush1.msra.mxu0 0.0
        %1402 = vmatprep.subr.mxu0 0.0
        %1403 = vmatpush1.msra.mxu0 0.0
        %1404 = vmatprep.subr.mxu0 0.0
        %1405 = vmatpush1.msra.mxu0 0.0
        %1406 = vmatprep.subr.mxu0 0.0
        %1407 = vmatpush1.msra.mxu0 0.0
        %1408 = vmatprep.subr.mxu0 0.0
        %1409 = vmatpush1.msra.mxu0 0.0
        %1410 = vmatprep.subr.mxu0 0.0
        %1411 = vmatpush1.msra.mxu0 0.0
        %1412 = vmatprep.subr.mxu0 0.0
        %1413 = vmatpush1.msra.mxu0 0.0
        %1414 = vmatprep.subr.mxu0 0.0
        %1415 = vmatpush1.msra.mxu0 0.0
        %1416 = vmatprep.subr.mxu0 0.0
        %1417 = vmatpush1.msra.mxu0 0.0
        %1418 = vmatprep.subr.mxu0 0.0
        %1419 = vmatpush1.msra.mxu0 0.0
        %1420 = vmatprep.subr.mxu0 0.0
        %1421 = vmatpush1.msra.mxu0 0.0
        %1422 = vmatprep.subr.mxu0 0.0
        %1423 = vmatpush1.msra.mxu0 0.0
        %1424 = vmatprep.subr.mxu0 0.0
        %1425 = vmatpush1.msra.mxu0 0.0
        %1426 = vmatprep.subr.mxu0 0.0
        %1427 = vmatpush1.msra.mxu0 0.0
        %1428 = vmatprep.subr.mxu0 0.0
        %1429 = vmatpush1.msra.mxu0 0.0
        %1430 = vmatprep.subr.mxu0 0.0
        %1431 = vmatpush1.msra.mxu0 0.0
        %1432 = vmatprep.subr.mxu0 0.0
        %1433 = vmatpush1.msra.mxu0 0.0
        %1434 = vmatprep.subr.mxu0 0.0
        %1435 = vmatpush1.msra.mxu0 0.0
        %1436 = vmatprep.subr.mxu0 0.0
        %1437 = vmatpush1.msra.mxu0 0.0
        %1438 = vmatprep.mubr.f32.mxu0 0.0
        %1439 = vmatmul.mubr.f32.gmra.mrb[0].mxu0 %v1372
        %v1440 = vpop.f32.mrb[0].mxu0
        %v1441 = vadd.f32 0.0, %v1440
        %v1442 = vpop.f32.mrb[0].mxu0
        %v1443 = vadd.f32 0.0, %v1442
        %1444 = vdwg.mxu0
        %v1445 = vtanh.pop %v1441
        %v1446 = vtanh.pop %v1443
        %1447 = vrot.lane.b32.xlu0 %v1445, 44
        %v1448 = vpop.permute.xlu0 %1447
        %1449 = vrot.lane.b32.xlu0 %v1446, 44
        %v1450 = vpop.permute.xlu0 %1449
        %v1451 = vsel %vm1217, %v1448, %v1450
        %v1452 = vsel %vm1217, %v1450, %v1448
        %v1453 = vsel %vm1220, %v1452, 0.0
        %v1454 = vsel %vm1221, %v1451, 0.0
        %1455 = vst [vmem:[#allocation2] sm:$0xff] %v1453
        %1456 = vst [vmem:[#allocation2 + $0x8] sm:$0xff] %v1454
        %1457 = vrot.lane.b32.xlu0 %v1445, 40
        %v1458 = vpop.permute.xlu0 %1457
        %1459 = vrot.lane.b32.xlu0 %v1446, 40
        %v1460 = vpop.permute.xlu0 %1459
        %v1461 = vsel %vm1230, %v1458, %v1460
        %v1462 = vsel %vm1230, %v1460, %v1458
        %v1463 = vsel %vm1233, %v1462, 0.0
        %v1464 = vsel %vm1234, %v1461, 0.0
        %1465 = vst [vmem:[#allocation2 + $0x10] sm:$0xff] %v1463
        %1466 = vst [vmem:[#allocation2 + $0x18] sm:$0xff] %v1464
        %1467 = vrot.lane.b32.xlu0 %v1445, 36
        %v1468 = vpop.permute.xlu0 %1467
        %1469 = vrot.lane.b32.xlu0 %v1446, 36
        %v1470 = vpop.permute.xlu0 %1469
        %v1471 = vsel %vm1243, %v1468, %v1470
        %v1472 = vsel %vm1243, %v1470, %v1468
        %v1473 = vsel %vm1246, %v1472, 0.0
        %v1474 = vsel %vm1247, %v1471, 0.0
        %1475 = vst [vmem:[#allocation2 + $0x20] sm:$0xff] %v1473
        %1476 = vst [vmem:[#allocation2 + $0x28] sm:$0xff] %v1474
        %1477 = vrot.lane.b32.xlu0 %v1445, 32
        %v1478 = vpop.permute.xlu0 %1477
        %1479 = vrot.lane.b32.xlu0 %v1446, 32
        %v1480 = vpop.permute.xlu0 %1479
        %v1481 = vsel %vm1256, %v1478, %v1480
        %v1482 = vsel %vm1256, %v1480, %v1478
        %v1483 = vsel %vm1259, %v1482, 0.0
        %v1484 = vsel %vm1260, %v1481, 0.0
        %1485 = vst [vmem:[#allocation2 + $0x30] sm:$0xff] %v1483
        %1486 = vst [vmem:[#allocation2 + $0x38] sm:$0xff] %v1484
        %1487 = vrot.lane.b32.xlu0 %v1445, 28
        %v1488 = vpop.permute.xlu0 %1487
        %1489 = vrot.lane.b32.xlu0 %v1446, 28
        %v1490 = vpop.permute.xlu0 %1489
        %v1491 = vsel %vm1269, %v1488, %v1490
        %v1492 = vsel %vm1269, %v1490, %v1488
        %v1493 = vsel %vm1272, %v1492, 0.0
        %v1494 = vsel %vm1273, %v1491, 0.0
        %1495 = vst [vmem:[#allocation2 + $0x40] sm:$0xff] %v1493
        %1496 = vst [vmem:[#allocation2 + $0x48] sm:$0xff] %v1494
        %1497 = vrot.lane.b32.xlu0 %v1445, 24
        %v1498 = vpop.permute.xlu0 %1497
        %1499 = vrot.lane.b32.xlu0 %v1446, 24
        %v1500 = vpop.permute.xlu0 %1499
        %v1501 = vsel %vm1282, %v1498, %v1500
        %v1502 = vsel %vm1282, %v1500, %v1498
        %v1503 = vsel %vm1285, %v1502, 0.0
        %v1504 = vsel %vm1286, %v1501, 0.0
        %1505 = vst [vmem:[#allocation2 + $0x50] sm:$0xff] %v1503
        %1506 = vst [vmem:[#allocation2 + $0x58] sm:$0xff] %v1504
        %1507 = vrot.lane.b32.xlu0 %v1445, 20
        %v1508 = vpop.permute.xlu0 %1507
        %1509 = vrot.lane.b32.xlu0 %v1446, 20
        %v1510 = vpop.permute.xlu0 %1509
        %v1511 = vsel %vm776, %v1508, %v1510
        %v1512 = vsel %vm776, %v1510, %v1508
        %v1513 = vsel %vm779, %v1512, 0.0
        %v1514 = vsel %vm780, %v1511, 0.0
        %1515 = vst [vmem:[#allocation2 + $0x60] sm:$0xff] %v1513
        %1516 = vst [vmem:[#allocation2 + $0x68] sm:$0xff] %v1514
        %1517 = vrot.lane.b32.xlu0 %v1445, 16
        %v1518 = vpop.permute.xlu0 %1517
        %1519 = vrot.lane.b32.xlu0 %v1446, 16
        %v1520 = vpop.permute.xlu0 %1519
        %v1521 = vsel %vm802, %v1518, %v1520
        %v1522 = vsel %vm802, %v1520, %v1518
        %v1523 = vsel %vm805, %v1522, 0.0
        %v1524 = vsel %vm806, %v1521, 0.0
        %1525 = vst [vmem:[#allocation2 + $0x70] sm:$0xff] %v1523
        %1526 = vst [vmem:[#allocation2 + $0x78] sm:$0xff] %v1524
        %1527 = vrot.lane.b32.xlu0 %v1445, 12
        %v1528 = vpop.permute.xlu0 %1527
        %1529 = vrot.lane.b32.xlu0 %v1446, 12
        %v1530 = vpop.permute.xlu0 %1529
        %v1531 = vsel %vm828, %v1528, %v1530
        %v1532 = vsel %vm828, %v1530, %v1528
        %v1533 = vsel %vm831, %v1532, 0.0
        %v1534 = vsel %vm832, %v1531, 0.0
        %1535 = vst [vmem:[#allocation2 + $0x80] sm:$0xff] %v1533
        %1536 = vst [vmem:[#allocation2 + $0x88] sm:$0xff] %v1534
        %1537 = vrot.lane.b32.xlu0 %v1445, 8
        %v1538 = vpop.permute.xlu0 %1537
        %1539 = vrot.lane.b32.xlu0 %v1446, 8
        %v1540 = vpop.permute.xlu0 %1539
        %v1541 = vsel %vm324, %v1538, %v1540
        %v1542 = vsel %vm324, %v1540, %v1538
        %v1543 = vsel %vm327, %v1542, 0.0
        %v1544 = vsel %vm328, %v1541, 0.0
        %1545 = vst [vmem:[#allocation2 + $0x90] sm:$0xff] %v1543
        %1546 = vst [vmem:[#allocation2 + $0x98] sm:$0xff] %v1544
        %1547 = vrot.lane.b32.xlu0 %v1445, 4
        %v1548 = vpop.permute.xlu0 %1547
        %1549 = vrot.lane.b32.xlu0 %v1446, 4
        %v1550 = vpop.permute.xlu0 %1549
        %v1551 = vsel %vm376, %v1548, %v1550
        %v1552 = vsel %vm376, %v1550, %v1548
        %v1553 = vsel %vm379, %v1552, 0.0
        %v1554 = vsel %vm380, %v1551, 0.0
        %1555 = vst [vmem:[#allocation2 + $0xa0] sm:$0xff] %v1553
        %1556 = vst [vmem:[#allocation2 + $0xa8] sm:$0xff] %v1554
        %1557 = vst [vmem:[#allocation2 + $0xb0] sm:$0xff] %v1445
        %1558 = vst [vmem:[#allocation2 + $0xb8] sm:$0xff] %v1446
        %s1559 = scalar_lea.vmem [#allocation8], 32
        %v1560 = vld [vmem:[%s1559] sm:$0xff]
        %v1561 = vld [vmem:[#allocation2] sm:$0xff]
        %v1562 = vld [vmem:[#allocation2 + $0x8] sm:$0xff]
        %v1563 = vld [vmem:[#allocation2 + $0x10] sm:$0xff]
        %v1564 = vld [vmem:[#allocation2 + $0x18] sm:$0xff]
        %v1565 = vld [vmem:[#allocation2 + $0x20] sm:$0xff]
        %v1566 = vld [vmem:[#allocation2 + $0x28] sm:$0xff]
        %v1567 = vld [vmem:[#allocation2 + $0x30] sm:$0xff]
        %v1568 = vld [vmem:[#allocation2 + $0x38] sm:$0xff]
        %v1569 = vld [vmem:[#allocation2 + $0x40] sm:$0xff]
        %v1570 = vld [vmem:[#allocation2 + $0x48] sm:$0xff]
        %v1571 = vld [vmem:[#allocation2 + $0x50] sm:$0xff]
        %v1572 = vld [vmem:[#allocation2 + $0x58] sm:$0xff]
        %v1573 = vld [vmem:[#allocation2 + $0x60] sm:$0xff]
        %v1574 = vld [vmem:[#allocation2 + $0x68] sm:$0xff]
        %v1575 = vld [vmem:[#allocation2 + $0x70] sm:$0xff]
        %v1576 = vld [vmem:[#allocation2 + $0x78] sm:$0xff]
        %v1577 = vld [vmem:[#allocation2 + $0x80] sm:$0xff]
        %v1578 = vld [vmem:[#allocation2 + $0x88] sm:$0xff]
        %v1579 = vld [vmem:[#allocation2 + $0x90] sm:$0xff]
        %v1580 = vld [vmem:[#allocation2 + $0x98] sm:$0xff]
        %v1581 = vld [vmem:[#allocation2 + $0xa0] sm:$0xff]
        %v1582 = vld [vmem:[#allocation2 + $0xa8] sm:$0xff]
        %v1583 = vld [vmem:[#allocation2 + $0xb0] sm:$0xff]
        %v1584 = vld [vmem:[#allocation2 + $0xb8] sm:$0xff]
        %v1585 = vld [vmem:[#allocation2 + $0xc0] sm:$0xff]
        %v1586 = vld [vmem:[#allocation2 + $0xc8] sm:$0xff]
        %v1588 = vsel %vm454, %v1560, 0
        %1590 = vmatprep.subr.mxu0 %v1562
        %1591 = vmatpush1.msra.mxu0 %v1561
        %1592 = vmatprep.subr.mxu0 %v1564
        %1593 = vmatpush1.msra.mxu0 %v1563
        %1594 = vmatprep.subr.mxu0 %v1566
        %1595 = vmatpush1.msra.mxu0 %v1565
        %1596 = vmatprep.subr.mxu0 %v1568
        %1597 = vmatpush1.msra.mxu0 %v1567
        %1598 = vmatprep.subr.mxu0 %v1570
        %1599 = vmatpush1.msra.mxu0 %v1569
        %1600 = vmatprep.subr.mxu0 %v1572
        %1601 = vmatpush1.msra.mxu0 %v1571
        %1602 = vmatprep.subr.mxu0 %v1574
        %1603 = vmatpush1.msra.mxu0 %v1573
        %1604 = vmatprep.subr.mxu0 %v1576
        %1605 = vmatpush1.msra.mxu0 %v1575
        %1606 = vmatprep.subr.mxu0 %v1578
        %1607 = vmatpush1.msra.mxu0 %v1577
        %1608 = vmatprep.subr.mxu0 %v1580
        %1609 = vmatpush1.msra.mxu0 %v1579
        %1610 = vmatprep.subr.mxu0 %v1582
        %1611 = vmatpush1.msra.mxu0 %v1581
        %1612 = vmatprep.subr.mxu0 %v1584
        %1613 = vmatpush1.msra.mxu0 %v1583
        %1614 = vmatprep.subr.mxu0 %v1586
        %1615 = vmatpush1.msra.mxu0 %v1585
        %1616 = vmatprep.subr.mxu0 0.0
        %1617 = vmatpush1.msra.mxu0 0.0
        %1618 = vmatprep.subr.mxu0 0.0
        %1619 = vmatpush1.msra.mxu0 0.0
        %1620 = vmatprep.subr.mxu0 0.0
        %1621 = vmatpush1.msra.mxu0 0.0
        %1622 = vmatprep.subr.mxu0 0.0
        %1623 = vmatpush1.msra.mxu0 0.0
        %1624 = vmatprep.subr.mxu0 0.0
        %1625 = vmatpush1.msra.mxu0 0.0
        %1626 = vmatprep.subr.mxu0 0.0
        %1627 = vmatpush1.msra.mxu0 0.0
        %1628 = vmatprep.subr.mxu0 0.0
        %1629 = vmatpush1.msra.mxu0 0.0
        %1630 = vmatprep.subr.mxu0 0.0
        %1631 = vmatpush1.msra.mxu0 0.0
        %1632 = vmatprep.subr.mxu0 0.0
        %1633 = vmatpush1.msra.mxu0 0.0
        %1634 = vmatprep.subr.mxu0 0.0
        %1635 = vmatpush1.msra.mxu0 0.0
        %1636 = vmatprep.subr.mxu0 0.0
        %1637 = vmatpush1.msra.mxu0 0.0
        %1638 = vmatprep.subr.mxu0 0.0
        %1639 = vmatpush1.msra.mxu0 0.0
        %1640 = vmatprep.subr.mxu0 0.0
        %1641 = vmatpush1.msra.mxu0 0.0
        %1642 = vmatprep.subr.mxu0 0.0
        %1643 = vmatpush1.msra.mxu0 0.0
        %1644 = vmatprep.subr.mxu0 0.0
        %1645 = vmatpush1.msra.mxu0 0.0
        %1646 = vmatprep.subr.mxu0 0.0
        %1647 = vmatpush1.msra.mxu0 0.0
        %1648 = vmatprep.subr.mxu0 0.0
        %1649 = vmatpush1.msra.mxu0 0.0
        %1650 = vmatprep.subr.mxu0 0.0
        %1651 = vmatpush1.msra.mxu0 0.0
        %1652 = vmatprep.subr.mxu0 0.0
        %1653 = vmatpush1.msra.mxu0 0.0
        %1654 = vmatprep.mubr.f32.mxu0 0.0
        %1655 = vmatmul.mubr.f32.gmra.mrb[0].mxu0 %v1588
        %v1656 = vpop.f32.mrb[0].mxu0
        %v1657 = vadd.f32 0.0, %v1656
        %v1658 = vpop.f32.mrb[0].mxu0
        %v1659 = vadd.f32 0.0, %v1658
        %1660 = vdwg.mxu0
        %v1661 = vtanh.pop %v1657
        %v1662 = vtanh.pop %v1659
        %v1663 = vadd.f32 %v1661, %v1211
        %v1664 = vadd.f32 %v1662, %v1212
        %v1665 = vtanh.pop %v1663
        %v1666 = vtanh.pop %v1664
        %v1667 = vld [vmem:[%s3] sm:$0xff]
        %vm1668 = vcmask 64512
        %v1670 = vsel %vm1668, %v1667, 0
        %1672 = vmatprep.subr.mxu0 %v1666
        %1673 = vmatpush1.msra.mxu0 %v1665
        %1674 = vmatprep.subr.mxu0 0.0
        %1675 = vmatpush1.msra.mxu0 0.0
        %1676 = vmatprep.subr.mxu0 0.0
        %1677 = vmatpush1.msra.mxu0 0.0
        %1678 = vmatprep.subr.mxu0 0.0
        %1679 = vmatpush1.msra.mxu0 0.0
        %1680 = vmatprep.subr.mxu0 0.0
        %1681 = vmatpush1.msra.mxu0 0.0
        %1682 = vmatprep.subr.mxu0 0.0
        %1683 = vmatpush1.msra.mxu0 0.0
        %1684 = vmatprep.subr.mxu0 0.0
        %1685 = vmatpush1.msra.mxu0 0.0
        %1686 = vmatprep.subr.mxu0 0.0
        %1687 = vmatpush1.msra.mxu0 0.0
        %1688 = vmatprep.subr.mxu0 0.0
        %1689 = vmatpush1.msra.mxu0 0.0
        %1690 = vmatprep.subr.mxu0 0.0
        %1691 = vmatpush1.msra.mxu0 0.0
        %1692 = vmatprep.subr.mxu0 0.0
        %1693 = vmatpush1.msra.mxu0 0.0
        %1694 = vmatprep.subr.mxu0 0.0
        %1695 = vmatpush1.msra.mxu0 0.0
        %1696 = vmatprep.subr.mxu0 0.0
        %1697 = vmatpush1.msra.mxu0 0.0
        %1698 = vmatprep.subr.mxu0 0.0
        %1699 = vmatpush1.msra.mxu0 0.0
        %1700 = vmatprep.subr.mxu0 0.0
        %1701 = vmatpush1.msra.mxu0 0.0
        %1702 = vmatprep.subr.mxu0 0.0
        %1703 = vmatpush1.msra.mxu0 0.0
        %1704 = vmatprep.subr.mxu0 0.0
        %1705 = vmatpush1.msra.mxu0 0.0
        %1706 = vmatprep.subr.mxu0 0.0
        %1707 = vmatpush1.msra.mxu0 0.0
        %1708 = vmatprep.subr.mxu0 0.0
        %1709 = vmatpush1.msra.mxu0 0.0
        %1710 = vmatprep.subr.mxu0 0.0
        %1711 = vmatpush1.msra.mxu0 0.0
        %1712 = vmatprep.subr.mxu0 0.0
        %1713 = vmatpush1.msra.mxu0 0.0
        %1714 = vmatprep.subr.mxu0 0.0
        %1715 = vmatpush1.msra.mxu0 0.0
        %1716 = vmatprep.subr.mxu0 0.0
        %1717 = vmatpush1.msra.mxu0 0.0
        %1718 = vmatprep.subr.mxu0 0.0
        %1719 = vmatpush1.msra.mxu0 0.0
        %1720 = vmatprep.subr.mxu0 0.0
        %1721 = vmatpush1.msra.mxu0 0.0
        %1722 = vmatprep.subr.mxu0 0.0
        %1723 = vmatpush1.msra.mxu0 0.0
        %1724 = vmatprep.subr.mxu0 0.0
        %1725 = vmatpush1.msra.mxu0 0.0
        %1726 = vmatprep.subr.mxu0 0.0
        %1727 = vmatpush1.msra.mxu0 0.0
        %1728 = vmatprep.subr.mxu0 0.0
        %1729 = vmatpush1.msra.mxu0 0.0
        %1730 = vmatprep.subr.mxu0 0.0
        %1731 = vmatpush1.msra.mxu0 0.0
        %1732 = vmatprep.subr.mxu0 0.0
        %1733 = vmatpush1.msra.mxu0 0.0
        %1734 = vmatprep.subr.mxu0 0.0
        %1735 = vmatpush1.msra.mxu0 0.0
        %1736 = vmatprep.mubr.f32.mxu0 0.0
        %1737 = vmatmul.mubr.f32.gmra.mrb[0].mxu0 %v1670
        %v1738 = vpop.f32.mrb[0].mxu0
        %v1739 = vadd.f32 0.0, %v1738
        %v1740 = vpop.f32.mrb[0].mxu0
        %v1741 = vadd.f32 0.0, %v1740
        %1742 = vdwg.mxu0
        %1743 = vset.pattern.permute.xlu0 8
        %1744 = vperm.xlu0 %1743, %v1667
        %v1745 = vpop.permute.xlu0 %1744
        %v1747 = vadd.f32 %v1739, %v1745
        %v1748 = vadd.f32 %v1741, %v1745
        %v1751 = vcombine.low %v1747, %v1748
        %v1753 = vunpack.c.l.s4 1966171168
        %v1754 = vunpack.c.0.s8 %v1753
        %v1755 = vlaneseq
        %v1756 = vshrl.u32 %v1755, 7
        %v1757 = vsub.s32 %v1754, %v1756
        %v1758 = vrot.slane %v1751, %v1757
        %v1760 = vunpack.c.l.s4 1966171168
        %v1761 = vunpack.c.0.s8 %v1760
        %v1762 = vlaneseq
        %v1763 = vshrl.u32 %v1762, 7
        %v1764 = vsub.s32 %v1761, %v1763
        %v1765 = vrot.slane %v1758, %v1764
        %v1767 = vlaneseq
        %vm1768 = vcmp.ge.s32.totalorder %v1767, 0
        %vm1769 = vcmp.lt.s32.totalorder %v1767, 256
        %vm1770 = vmand %vm1768, %vm1769
        %1771 = vst.msk [vmem:[%s242] sm:$0x3] %vm1770, %v1765
        %s1772 = sand.u32 %s119, 1
        %s1773 = scalar_lea.sflag [#allocation5], %s1772
        %s1774 = sand.u32 %s119, 1
        %s1775 = smul.addr %s1774, 2
        %s1776 = scalar_lea.vmem [#allocation9], %s1775
        // Predicated region
        $region49: #{tpu_custom_call.1} parent=35 // pred_check
          %p1777 = pneg %p129
        $region50: #{tpu_custom_call.1} parent=35 // pred_check_branch
          %1779 = sbr.rel (%p1777) target = $region52
        $region51: #{tpu_custom_call.1} parent=35 // pred_region
          %s1780 = smul.u32 2, %s22
          %s1782 = ssub.s32 32, 32
          %1783 = vsyncadd %s1773, %s1782
          %s1784 = smul.addr %s1780, 16
          %s1785 = scalar_lea.hbm %s4, %s1784
          %s1787 = sshll.u32 %s1776, 4
          %s1788 = int_to_ptr.vmem [resolvable:$true] %s1787
          %1790 = dma.vmem_to_hbm [thread:$0]  %s1788, 32, %s1785, %s1773
        $region52: #{tpu_custom_call.1} parent=35 // pred_fallthru
          _
      $region36: #{tpu_custom_call.1} parent=5 // pred_fallthru
        _
      %p1791 = scmp.le.s32.totalorder 2, %s17
      // Predicated region
      $region53: #{tpu_custom_call.1} parent=5 // pred_check
        %p1792 = pneg %p1791
      $region54: #{tpu_custom_call.1} parent=5 // pred_check_branch
        %1794 = sbr.rel (%p1792) target = $region56
      $region55: #{tpu_custom_call.1} parent=5 // pred_region
        %s1795 = ssub.s32 %s17, 2
        // Predicated region
        $region57: #{tpu_custom_call.1} parent=55 // pred_check
          %p1796 = pneg %p135
        $region58: #{tpu_custom_call.1} parent=55 // pred_check_branch
          %1798 = sbr.rel (%p1796) target = $region60
        $region59: #{tpu_custom_call.1} parent=55 // pred_region
          %s1799 = sand.u32 %s120, 1
          %s1800 = scalar_lea.sflag [#allocation5], %s1799
          %s1801 = sand.u32 %s120, 1
          %s1802 = smul.addr %s1801, 2
          %s1803 = scalar_lea.vmem [#allocation9], %s1802
          %1804 = dma.done %s1800, 32
        $region60: #{tpu_custom_call.1} parent=55 // pred_fallthru
          _
      $region56: #{tpu_custom_call.1} parent=5 // pred_fallthru
        _
    $region6: #{tpu_custom_call.1} parent=1 // loop_footer
      %s21 = sadd.s32 1, %s17
    $region7: #{tpu_custom_call.1} parent=1 // loop_footer_branch
      %16 = sbr.rel target = $region3
    $region8: #{tpu_custom_call.1} parent=1 // loop_exit
      _
    %1805 = vsyncpa [#allocation4], 1
    %s1806 = scalar_lea.sflag [#allocation4], 1
    %1807 = vsyncpa %s1806, 1
    %1808 = vsyncpa [#allocation7], 1
    %1809 = vsyncpa [#allocation5], 1
    %s1810 = scalar_lea.sflag [#allocation5], 1
    %1811 = vsyncpa %s1810, 1

</llo_original>
